<compile_context>
chip_gen: v7x
topology: tpu7x:2x2x1
jax: 0.10.0
libtpu: 0.0.40
codegen_flags: <defaults>
</compile_context>

<pallas_src>
import jax
import jax.numpy as jnp
from jax.experimental import pallas as pl
from jax.experimental.pallas import tpu as pltpu

_VMEM = pl.BlockSpec(memory_space=pltpu.MemorySpace.VMEM)


# ---------------------------- Pallas kernels ----------------------------

def _conv_relu_pool_kernel(p_ref, w_ref, b_ref, o_ref):
    """Fused Conv3x3 + ReLU + MaxPool2x2 tile.

    p_ref: (4, TM, K) bf16 im2col patches, one slab per 2x2 pool member.
    w_ref: (K, Cout) bf16 weight matrix.   b_ref: (1, Cout) f32 bias.
    o_ref: (TM, Cout) bf16 = relu(max_j(patches_j @ W) + b).
    (maxpool commutes with the per-channel bias add and with ReLU.)
    """
    w = w_ref[...]
    acc = jnp.dot(p_ref[0], w, preferred_element_type=jnp.float32)
    for j in range(1, 4):
        acc = jnp.maximum(
            acc, jnp.dot(p_ref[j], w, preferred_element_type=jnp.float32))
    o_ref[...] = jnp.maximum(acc + b_ref[...], 0.0).astype(o_ref.dtype)


def _mlp_kernel(x_ref, w1_ref, b1_ref, w2_ref, b2_ref, o_ref):
    """Fused classifier head: relu(x @ w1 + b1) @ w2 + b2.  f32 epilogue."""
    h = jnp.dot(x_ref[...], w1_ref[...], preferred_element_type=jnp.float32)
    h = jnp.maximum(h + b1_ref[...], 0.0)
    o_ref[...] = (jnp.dot(h.astype(jnp.bfloat16), w2_ref[...],
                          preferred_element_type=jnp.float32)
                  + b2_ref[...]).astype(o_ref.dtype)


# ---------------------------- JAX glue ----------------------------

def _im2col_pool2x2(x_nhwc, k=3, pad=1):
    """Patches for a stride-1 'same' kxk conv, grouped by 2x2 max-pool member.

    Returns (4, N*PH*PW, k*k*C).  Slab j = 2*dy+dx holds the patch of conv-output
    pixel (2*ph+dy, 2*pw+dx); feature order (u*k+v)*C + c matches prepare_params.
    PH = H//2 (floor) reproduces PyTorch MaxPool2d default (drops the odd edge row/col).
    """
    N, H, W, C = x_nhwc.shape
    xp = jnp.pad(x_nhwc, ((0, 0), (pad, pad), (pad, pad), (0, 0)))
    PH, PW = H // 2, W // 2
    slabs = []
    for dy in range(2):
        for dx in range(2):
            cols = []
            for u in range(k):
                for v in range(k):
                    sl = xp[:, dy + u: dy + u + 2 * PH: 2,
                            dx + v: dx + v + 2 * PW: 2, :]
                    cols.append(sl)
            slab = jnp.concatenate(cols, axis=-1)              # (N, PH, PW, k*k*C)
            slabs.append(slab.reshape(N * PH * PW, k * k * C))
    return jnp.stack(slabs, axis=0), PH, PW


def _pick_tile_m(m, target=512):
    """Row tile for the pooled-output axis: whole array when small, else the largest
    multiple-of-16 divisor <= target (falls back to partial trailing block)."""
    if m <= target:
        return m
    for t in range(target - target % 16, 15, -16):
        if m % t == 0:
            return t
    return target - target % 16


def conv_relu_pool(x_nhwc, wmat, bias, k=3, pad=1):
    N = x_nhwc.shape[0]
    Cout = wmat.shape[1]
    patches, PH, PW = _im2col_pool2x2(x_nhwc, k=k, pad=pad)    # (4, M, K) bf16
    M, K = patches.shape[1], patches.shape[2]
    TM = _pick_tile_m(M)
    out = pl.pallas_call(
        _conv_relu_pool_kernel,
        out_shape=jax.ShapeDtypeStruct((M, Cout), jnp.bfloat16),
        grid_spec=pltpu.PrefetchScalarGridSpec(
            num_scalar_prefetch=0,
            grid=(pl.cdiv(M, TM),),
            in_specs=[
                pl.BlockSpec((4, TM, K), lambda i: (0, i, 0)),
                pl.BlockSpec((K, Cout), lambda i: (0, 0)),   # resident across grid
                pl.BlockSpec((1, Cout), lambda i: (0, 0)),
            ],
            out_specs=pl.BlockSpec((TM, Cout), lambda i: (i, 0)),
        ),
        compiler_params=pltpu.CompilerParams(
            dimension_semantics=("parallel",)),
    )(patches, wmat, bias)
    return out.reshape(N, PH, PW, Cout)


def classifier_head(feat_bf16, w1, b1, w2, b2):
    N = feat_bf16.shape[0]
    num_classes = w2.shape[1]
    return pl.pallas_call(
        _mlp_kernel,
        out_shape=jax.ShapeDtypeStruct((N, num_classes), jnp.float32),
        in_specs=[_VMEM] * 5,
        out_specs=_VMEM,
    )(feat_bf16, w1, b1, w2, b2)


def alexnet_forward(x, prep):
    x = x.reshape(-1, 1, 28, 28)
    N = x.shape[0]
    x = jnp.transpose(x, (0, 2, 3, 1)).astype(jnp.bfloat16)        # NHWC bf16
    x = conv_relu_pool(x, prep['w1'], prep['b1'])                  # (N, 14, 14, 32)
    x = conv_relu_pool(x, prep['w2'], prep['b2'])                  # (N, 7, 7, 64)
    x = conv_relu_pool(x, prep['w3'], prep['b3'])                  # (N, 3, 3, 128)
    # PyTorch x.view(N, -1) flattens NCHW order:
    feat = jnp.transpose(x, (0, 3, 1, 2)).reshape(N, 128 * 3 * 3)
    # TODO(synk): nn.Dropout layers are identity here (inference-mode semantics);
    # training-mode stochastic masking is not implemented.
    return classifier_head(feat, prep['fc1_w'], prep['fc1_b'],
                           prep['fc2_w'], prep['fc2_b'])


# ---------------------------- Parameters ----------------------------

def init_params(key, num_classes=10):
    ks = jax.random.split(key, 10)
    r = lambda k, s: 0.05 * jax.random.normal(k, s, jnp.float32)
    return {
        'conv1_w': r(ks[0], (32, 1, 3, 3)),      'conv1_b': r(ks[1], (32,)),
        'conv2_w': r(ks[2], (64, 32, 3, 3)),     'conv2_b': r(ks[3], (64,)),
        'conv3_w': r(ks[4], (128, 64, 3, 3)),    'conv3_b': r(ks[5], (128,)),
        'fc1_w':   r(ks[6], (256, 128 * 3 * 3)), 'fc1_b':   r(ks[7], (256,)),
        'fc2_w':   r(ks[8], (num_classes, 256)), 'fc2_b':   r(ks[9], (num_classes,)),
    }


def prepare_params(p):
    """One-time repack (hoisted out of the forward): PyTorch layouts -> bf16 matmul
    matrices + f32 row-vector biases."""
    def conv_mat(w):   # (Cout, Cin, k, k) -> (k*k*Cin, Cout); row = (u*k+v)*Cin + ci
        k = w.shape[-1]
        return jnp.transpose(w, (2, 3, 1, 0)).reshape(
            k * k * w.shape[1], w.shape[0]).astype(jnp.bfloat16)
    def lin_mat(w):    # (out, in) -> (in, out)
        return jnp.transpose(w).astype(jnp.bfloat16)
    row = lambda b: b.reshape(1, -1).astype(jnp.float32)
    return {
        'w1': conv_mat(p['conv1_w']), 'b1': row(p['conv1_b']),
        'w2': conv_mat(p['conv2_w']), 'b2': row(p['conv2_b']),
        'w3': conv_mat(p['conv3_w']), 'b3': row(p['conv3_b']),
        'fc1_w': lin_mat(p['fc1_w']), 'fc1_b': row(p['fc1_b']),
        'fc2_w': lin_mat(p['fc2_w']), 'fc2_b': row(p['fc2_b']),
    }


if __name__ == "__main__":
    key = jax.random.PRNGKey(0)
    kp, kx = jax.random.split(key)
    num_classes, batch = 10, 4
    params = init_params(kp, num_classes=num_classes)
    prep = prepare_params(params)
    x = jax.random.normal(kx, (batch, 1, 28, 28), jnp.float32)

    fwd = jax.jit(lambda xx: alexnet_forward(xx, prep))
    out = jax.block_until_ready(fwd(x))
    assert out.shape == (batch, num_classes), out.shape
    assert bool(jnp.all(jnp.isfinite(out)))
    print("KERNEL_OK")
</pallas_src>

<mosaic_0001>
module attributes {stable_mosaic.version = 11 : i64} {
  func.func @_conv_relu_pool_kernel(%arg0: i32, %arg1: memref<4x112x9xbf16, #tpu.memory_space<vmem>>, %arg2: memref<9x32xbf16, #tpu.memory_space<vmem>>, %arg3: memref<1x32xf32, #tpu.memory_space<vmem>>, %arg4: memref<112x32xbf16, #tpu.memory_space<vmem>>) attributes {dimension_semantics = [#tpu.dimension_semantics<parallel>], iteration_bounds = array<i64: 7>, scalar_prefetch = 0 : i64, scratch_operands = 0 : i64, tpu.core_type = #tpu.core_type<tc>, window_params = [{transform_indices = @transform_0, window_bounds = array<i64: 4, 112, 9>}, {pipeline_mode = #tpu.pipeline_mode<synchronous>, transform_indices = @transform_1, window_bounds = array<i64: 9, 32>}, {pipeline_mode = #tpu.pipeline_mode<synchronous>, transform_indices = @transform_2, window_bounds = array<i64: 1, 32>}, {transform_indices = @transform_3, window_bounds = array<i64: 112, 32>}]} {
    %c0 = arith.constant 0 : index
    %c0_0 = arith.constant 0 : index
    %0 = vector.load %arg2[%c0, %c0_0] : memref<9x32xbf16, #tpu.memory_space<vmem>>, vector<9x32xbf16>
    %c0_1 = arith.constant 0 : index
    %c0_2 = arith.constant 0 : index
    %c0_3 = arith.constant 0 : index
    %1 = vector.load %arg1[%c0_1, %c0_2, %c0_3] : memref<4x112x9xbf16, #tpu.memory_space<vmem>>, vector<1x112x9xbf16>
    %2 = vector.shape_cast %1 : vector<1x112x9xbf16> to vector<112x9xbf16>
    %cst = arith.constant dense<0.000000e+00> : vector<112x32xf32>
    %3 = tpu.matmul %2, %0, %cst {dimension_numbers = #tpu.dot_dimension_numbers<[1], [0], [0], [1], [0, 0, 1, 1], [], []>} : vector<112x9xbf16>, vector<9x32xbf16>, vector<112x32xf32> -> vector<112x32xf32>
    %c1 = arith.constant 1 : index
    %c0_4 = arith.constant 0 : index
    %c0_5 = arith.constant 0 : index
    %4 = vector.load %arg1[%c1, %c0_4, %c0_5] : memref<4x112x9xbf16, #tpu.memory_space<vmem>>, vector<1x112x9xbf16>
    %5 = vector.shape_cast %4 : vector<1x112x9xbf16> to vector<112x9xbf16>
    %cst_6 = arith.constant dense<0.000000e+00> : vector<112x32xf32>
    %6 = tpu.matmul %5, %0, %cst_6 {dimension_numbers = #tpu.dot_dimension_numbers<[1], [0], [0], [1], [0, 0, 1, 1], [], []>} : vector<112x9xbf16>, vector<9x32xbf16>, vector<112x32xf32> -> vector<112x32xf32>
    %7 = arith.maximumf %3, %6 : vector<112x32xf32>
    %c2 = arith.constant 2 : index
    %c0_7 = arith.constant 0 : index
    %c0_8 = arith.constant 0 : index
    %8 = vector.load %arg1[%c2, %c0_7, %c0_8] : memref<4x112x9xbf16, #tpu.memory_space<vmem>>, vector<1x112x9xbf16>
    %9 = vector.shape_cast %8 : vector<1x112x9xbf16> to vector<112x9xbf16>
    %cst_9 = arith.constant dense<0.000000e+00> : vector<112x32xf32>
    %10 = tpu.matmul %9, %0, %cst_9 {dimension_numbers = #tpu.dot_dimension_numbers<[1], [0], [0], [1], [0, 0, 1, 1], [], []>} : vector<112x9xbf16>, vector<9x32xbf16>, vector<112x32xf32> -> vector<112x32xf32>
    %11 = arith.maximumf %7, %10 : vector<112x32xf32>
    %c3 = arith.constant 3 : index
    %c0_10 = arith.constant 0 : index
    %c0_11 = arith.constant 0 : index
    %12 = vector.load %arg1[%c3, %c0_10, %c0_11] : memref<4x112x9xbf16, #tpu.memory_space<vmem>>, vector<1x112x9xbf16>
    %13 = vector.shape_cast %12 : vector<1x112x9xbf16> to vector<112x9xbf16>
    %cst_12 = arith.constant dense<0.000000e+00> : vector<112x32xf32>
    %14 = tpu.matmul %13, %0, %cst_12 {dimension_numbers = #tpu.dot_dimension_numbers<[1], [0], [0], [1], [0, 0, 1, 1], [], []>} : vector<112x9xbf16>, vector<9x32xbf16>, vector<112x32xf32> -> vector<112x32xf32>
    %15 = arith.maximumf %11, %14 : vector<112x32xf32>
    %c0_13 = arith.constant 0 : index
    %c0_14 = arith.constant 0 : index
    %16 = vector.load %arg3[%c0_13, %c0_14] : memref<1x32xf32, #tpu.memory_space<vmem>>, vector<1x32xf32>
    %17 = vector.broadcast %16 : vector<1x32xf32> to vector<112x32xf32>
    %18 = arith.addf %15, %17 : vector<112x32xf32>
    %cst_15 = arith.constant 0.000000e+00 : f32
    %19 = vector.broadcast %cst_15 : f32 to vector<112x32xf32>
    %20 = arith.maximumf %18, %19 : vector<112x32xf32>
    %21 = arith.truncf %20 : vector<112x32xf32> to vector<112x32xbf16>
    %c0_16 = arith.constant 0 : index
    %c0_17 = arith.constant 0 : index
    %22 = vector.load %arg4[%c0_16, %c0_17] : memref<112x32xbf16, #tpu.memory_space<vmem>>, vector<112x32xbf16>
    tpu.vector_store %arg4[%c0_16, %c0_17], %21 {strides = array<i32>} : memref<112x32xbf16, #tpu.memory_space<vmem>>, vector<112x32xbf16>,
    return
  }
  func.func @transform_0(%arg0: i32) -> (i32, i32, i32) {
    %c0_i32 = arith.constant 0 : i32
    %c0_i32_0 = arith.constant 0 : i32
    %c0_i32_1 = arith.constant 0 : i32
    return %c0_i32, %arg0, %c0_i32_0 : i32, i32, i32
  }
  func.func @transform_1(%arg0: i32) -> (i32, i32) {
    %c0_i32 = arith.constant 0 : i32
    %c0_i32_0 = arith.constant 0 : i32
    %c0_i32_1 = arith.constant 0 : i32
    return %c0_i32, %c0_i32_0 : i32, i32
  }
  func.func @transform_2(%arg0: i32) -> (i32, i32) {
    %c0_i32 = arith.constant 0 : i32
    %c0_i32_0 = arith.constant 0 : i32
    %c0_i32_1 = arith.constant 0 : i32
    return %c0_i32, %c0_i32_0 : i32, i32
  }
  func.func @transform_3(%arg0: i32) -> (i32, i32) {
    %c0_i32 = arith.constant 0 : i32
    %c0_i32_0 = arith.constant 0 : i32
    return %arg0, %c0_i32 : i32, i32
  }
}

module attributes {stable_mosaic.version = 11 : i64} {
  func.func @_conv_relu_pool_kernel(%arg0: i32, %arg1: memref<4x196x288xbf16, #tpu.memory_space<vmem>>, %arg2: memref<288x64xbf16, #tpu.memory_space<vmem>>, %arg3: memref<1x64xf32, #tpu.memory_space<vmem>>, %arg4: memref<196x64xbf16, #tpu.memory_space<vmem>>) attributes {dimension_semantics = [#tpu.dimension_semantics<parallel>], iteration_bounds = array<i64: 1>, scalar_prefetch = 0 : i64, scratch_operands = 0 : i64, tpu.core_type = #tpu.core_type<tc>, window_params = [{transform_indices = @transform_0, window_bounds = array<i64: 4, 196, 288>}, {pipeline_mode = #tpu.pipeline_mode<synchronous>, transform_indices = @transform_1, window_bounds = array<i64: 288, 64>}, {pipeline_mode = #tpu.pipeline_mode<synchronous>, transform_indices = @transform_2, window_bounds = array<i64: 1, 64>}, {transform_indices = @transform_3, window_bounds = array<i64: 196, 64>}]} {
    %c0 = arith.constant 0 : index
    %c0_0 = arith.constant 0 : index
    %0 = vector.load %arg2[%c0, %c0_0] : memref<288x64xbf16, #tpu.memory_space<vmem>>, vector<288x64xbf16>
    %c0_1 = arith.constant 0 : index
    %c0_2 = arith.constant 0 : index
    %c0_3 = arith.constant 0 : index
    %1 = vector.load %arg1[%c0_1, %c0_2, %c0_3] : memref<4x196x288xbf16, #tpu.memory_space<vmem>>, vector<1x196x288xbf16>
    %2 = vector.shape_cast %1 : vector<1x196x288xbf16> to vector<196x288xbf16>
    %cst = arith.constant dense<0.000000e+00> : vector<196x64xf32>
    %3 = tpu.matmul %2, %0, %cst {dimension_numbers = #tpu.dot_dimension_numbers<[1], [0], [0], [1], [0, 0, 1, 1], [], []>} : vector<196x288xbf16>, vector<288x64xbf16>, vector<196x64xf32> -> vector<196x64xf32>
    %c1 = arith.constant 1 : index
    %c0_4 = arith.constant 0 : index
    %c0_5 = arith.constant 0 : index
    %4 = vector.load %arg1[%c1, %c0_4, %c0_5] : memref<4x196x288xbf16, #tpu.memory_space<vmem>>, vector<1x196x288xbf16>
    %5 = vector.shape_cast %4 : vector<1x196x288xbf16> to vector<196x288xbf16>
    %cst_6 = arith.constant dense<0.000000e+00> : vector<196x64xf32>
    %6 = tpu.matmul %5, %0, %cst_6 {dimension_numbers = #tpu.dot_dimension_numbers<[1], [0], [0], [1], [0, 0, 1, 1], [], []>} : vector<196x288xbf16>, vector<288x64xbf16>, vector<196x64xf32> -> vector<196x64xf32>
    %7 = arith.maximumf %3, %6 : vector<196x64xf32>
    %c2 = arith.constant 2 : index
    %c0_7 = arith.constant 0 : index
    %c0_8 = arith.constant 0 : index
    %8 = vector.load %arg1[%c2, %c0_7, %c0_8] : memref<4x196x288xbf16, #tpu.memory_space<vmem>>, vector<1x196x288xbf16>
    %9 = vector.shape_cast %8 : vector<1x196x288xbf16> to vector<196x288xbf16>
    %cst_9 = arith.constant dense<0.000000e+00> : vector<196x64xf32>
    %10 = tpu.matmul %9, %0, %cst_9 {dimension_numbers = #tpu.dot_dimension_numbers<[1], [0], [0], [1], [0, 0, 1, 1], [], []>} : vector<196x288xbf16>, vector<288x64xbf16>, vector<196x64xf32> -> vector<196x64xf32>
    %11 = arith.maximumf %7, %10 : vector<196x64xf32>
    %c3 = arith.constant 3 : index
    %c0_10 = arith.constant 0 : index
    %c0_11 = arith.constant 0 : index
    %12 = vector.load %arg1[%c3, %c0_10, %c0_11] : memref<4x196x288xbf16, #tpu.memory_space<vmem>>, vector<1x196x288xbf16>
    %13 = vector.shape_cast %12 : vector<1x196x288xbf16> to vector<196x288xbf16>
    %cst_12 = arith.constant dense<0.000000e+00> : vector<196x64xf32>
    %14 = tpu.matmul %13, %0, %cst_12 {dimension_numbers = #tpu.dot_dimension_numbers<[1], [0], [0], [1], [0, 0, 1, 1], [], []>} : vector<196x288xbf16>, vector<288x64xbf16>, vector<196x64xf32> -> vector<196x64xf32>
    %15 = arith.maximumf %11, %14 : vector<196x64xf32>
    %c0_13 = arith.constant 0 : index
    %c0_14 = arith.constant 0 : index
    %16 = vector.load %arg3[%c0_13, %c0_14] : memref<1x64xf32, #tpu.memory_space<vmem>>, vector<1x64xf32>
    %17 = vector.broadcast %16 : vector<1x64xf32> to vector<196x64xf32>
    %18 = arith.addf %15, %17 : vector<196x64xf32>
    %cst_15 = arith.constant 0.000000e+00 : f32
    %19 = vector.broadcast %cst_15 : f32 to vector<196x64xf32>
    %20 = arith.maximumf %18, %19 : vector<196x64xf32>
    %21 = arith.truncf %20 : vector<196x64xf32> to vector<196x64xbf16>
    %c0_16 = arith.constant 0 : index
    %c0_17 = arith.constant 0 : index
    %22 = vector.load %arg4[%c0_16, %c0_17] : memref<196x64xbf16, #tpu.memory_space<vmem>>, vector<196x64xbf16>
    tpu.vector_store %arg4[%c0_16, %c0_17], %21 {strides = array<i32>} : memref<196x64xbf16, #tpu.memory_space<vmem>>, vector<196x64xbf16>,
    return
  }
  func.func @transform_0(%arg0: i32) -> (i32, i32, i32) {
    %c0_i32 = arith.constant 0 : i32
    %c0_i32_0 = arith.constant 0 : i32
    %c0_i32_1 = arith.constant 0 : i32
    return %c0_i32, %arg0, %c0_i32_0 : i32, i32, i32
  }
  func.func @transform_1(%arg0: i32) -> (i32, i32) {
    %c0_i32 = arith.constant 0 : i32
    %c0_i32_0 = arith.constant 0 : i32
    %c0_i32_1 = arith.constant 0 : i32
    return %c0_i32, %c0_i32_0 : i32, i32
  }
  func.func @transform_2(%arg0: i32) -> (i32, i32) {
    %c0_i32 = arith.constant 0 : i32
    %c0_i32_0 = arith.constant 0 : i32
    %c0_i32_1 = arith.constant 0 : i32
    return %c0_i32, %c0_i32_0 : i32, i32
  }
  func.func @transform_3(%arg0: i32) -> (i32, i32) {
    %c0_i32 = arith.constant 0 : i32
    %c0_i32_0 = arith.constant 0 : i32
    return %arg0, %c0_i32 : i32, i32
  }
}

module attributes {stable_mosaic.version = 11 : i64} {
  func.func @_conv_relu_pool_kernel(%arg0: i32, %arg1: memref<4x36x576xbf16, #tpu.memory_space<vmem>>, %arg2: memref<576x128xbf16, #tpu.memory_space<vmem>>, %arg3: memref<1x128xf32, #tpu.memory_space<vmem>>, %arg4: memref<36x128xbf16, #tpu.memory_space<vmem>>) attributes {dimension_semantics = [#tpu.dimension_semantics<parallel>], iteration_bounds = array<i64: 1>, scalar_prefetch = 0 : i64, scratch_operands = 0 : i64, tpu.core_type = #tpu.core_type<tc>, window_params = [{transform_indices = @transform_0, window_bounds = array<i64: 4, 36, 576>}, {pipeline_mode = #tpu.pipeline_mode<synchronous>, transform_indices = @transform_1, window_bounds = array<i64: 576, 128>}, {pipeline_mode = #tpu.pipeline_mode<synchronous>, transform_indices = @transform_2, window_bounds = array<i64: 1, 128>}, {transform_indices = @transform_3, window_bounds = array<i64: 36, 128>}]} {
    %c0 = arith.constant 0 : index
    %c0_0 = arith.constant 0 : index
    %0 = vector.load %arg2[%c0, %c0_0] : memref<576x128xbf16, #tpu.memory_space<vmem>>, vector<576x128xbf16>
    %c0_1 = arith.constant 0 : index
    %c0_2 = arith.constant 0 : index
    %c0_3 = arith.constant 0 : index
    %1 = vector.load %arg1[%c0_1, %c0_2, %c0_3] : memref<4x36x576xbf16, #tpu.memory_space<vmem>>, vector<1x36x576xbf16>
    %2 = vector.shape_cast %1 : vector<1x36x576xbf16> to vector<36x576xbf16>
    %cst = arith.constant dense<0.000000e+00> : vector<36x128xf32>
    %3 = tpu.matmul %2, %0, %cst {dimension_numbers = #tpu.dot_dimension_numbers<[1], [0], [0], [1], [0, 0, 1, 1], [], []>} : vector<36x576xbf16>, vector<576x128xbf16>, vector<36x128xf32> -> vector<36x128xf32>
    %c1 = arith.constant 1 : index
    %c0_4 = arith.constant 0 : index
    %c0_5 = arith.constant 0 : index
    %4 = vector.load %arg1[%c1, %c0_4, %c0_5] : memref<4x36x576xbf16, #tpu.memory_space<vmem>>, vector<1x36x576xbf16>
    %5 = vector.shape_cast %4 : vector<1x36x576xbf16> to vector<36x576xbf16>
    %cst_6 = arith.constant dense<0.000000e+00> : vector<36x128xf32>
    %6 = tpu.matmul %5, %0, %cst_6 {dimension_numbers = #tpu.dot_dimension_numbers<[1], [0], [0], [1], [0, 0, 1, 1], [], []>} : vector<36x576xbf16>, vector<576x128xbf16>, vector<36x128xf32> -> vector<36x128xf32>
    %7 = arith.maximumf %3, %6 : vector<36x128xf32>
    %c2 = arith.constant 2 : index
    %c0_7 = arith.constant 0 : index
    %c0_8 = arith.constant 0 : index
    %8 = vector.load %arg1[%c2, %c0_7, %c0_8] : memref<4x36x576xbf16, #tpu.memory_space<vmem>>, vector<1x36x576xbf16>
    %9 = vector.shape_cast %8 : vector<1x36x576xbf16> to vector<36x576xbf16>
    %cst_9 = arith.constant dense<0.000000e+00> : vector<36x128xf32>
    %10 = tpu.matmul %9, %0, %cst_9 {dimension_numbers = #tpu.dot_dimension_numbers<[1], [0], [0], [1], [0, 0, 1, 1], [], []>} : vector<36x576xbf16>, vector<576x128xbf16>, vector<36x128xf32> -> vector<36x128xf32>
    %11 = arith.maximumf %7, %10 : vector<36x128xf32>
    %c3 = arith.constant 3 : index
    %c0_10 = arith.constant 0 : index
    %c0_11 = arith.constant 0 : index
    %12 = vector.load %arg1[%c3, %c0_10, %c0_11] : memref<4x36x576xbf16, #tpu.memory_space<vmem>>, vector<1x36x576xbf16>
    %13 = vector.shape_cast %12 : vector<1x36x576xbf16> to vector<36x576xbf16>
    %cst_12 = arith.constant dense<0.000000e+00> : vector<36x128xf32>
    %14 = tpu.matmul %13, %0, %cst_12 {dimension_numbers = #tpu.dot_dimension_numbers<[1], [0], [0], [1], [0, 0, 1, 1], [], []>} : vector<36x576xbf16>, vector<576x128xbf16>, vector<36x128xf32> -> vector<36x128xf32>
    %15 = arith.maximumf %11, %14 : vector<36x128xf32>
    %c0_13 = arith.constant 0 : index
    %c0_14 = arith.constant 0 : index
    %16 = vector.load %arg3[%c0_13, %c0_14] : memref<1x128xf32, #tpu.memory_space<vmem>>, vector<1x128xf32>
    %17 = vector.broadcast %16 : vector<1x128xf32> to vector<36x128xf32>
    %18 = arith.addf %15, %17 : vector<36x128xf32>
    %cst_15 = arith.constant 0.000000e+00 : f32
    %19 = vector.broadcast %cst_15 : f32 to vector<36x128xf32>
    %20 = arith.maximumf %18, %19 : vector<36x128xf32>
    %21 = arith.truncf %20 : vector<36x128xf32> to vector<36x128xbf16>
    %c0_16 = arith.constant 0 : index
    %c0_17 = arith.constant 0 : index
    %22 = vector.load %arg4[%c0_16, %c0_17] : memref<36x128xbf16, #tpu.memory_space<vmem>>, vector<36x128xbf16>
    tpu.vector_store %arg4[%c0_16, %c0_17], %21 {strides = array<i32>} : memref<36x128xbf16, #tpu.memory_space<vmem>>, vector<36x128xbf16>,
    return
  }
  func.func @transform_0(%arg0: i32) -> (i32, i32, i32) {
    %c0_i32 = arith.constant 0 : i32
    %c0_i32_0 = arith.constant 0 : i32
    %c0_i32_1 = arith.constant 0 : i32
    return %c0_i32, %arg0, %c0_i32_0 : i32, i32, i32
  }
  func.func @transform_1(%arg0: i32) -> (i32, i32) {
    %c0_i32 = arith.constant 0 : i32
    %c0_i32_0 = arith.constant 0 : i32
    %c0_i32_1 = arith.constant 0 : i32
    return %c0_i32, %c0_i32_0 : i32, i32
  }
  func.func @transform_2(%arg0: i32) -> (i32, i32) {
    %c0_i32 = arith.constant 0 : i32
    %c0_i32_0 = arith.constant 0 : i32
    %c0_i32_1 = arith.constant 0 : i32
    return %c0_i32, %c0_i32_0 : i32, i32
  }
  func.func @transform_3(%arg0: i32) -> (i32, i32) {
    %c0_i32 = arith.constant 0 : i32
    %c0_i32_0 = arith.constant 0 : i32
    return %arg0, %c0_i32 : i32, i32
  }
}

module attributes {stable_mosaic.version = 11 : i64} {
  func.func @_mlp_kernel(%arg0: memref<4x1152xbf16, #tpu.memory_space<vmem>>, %arg1: memref<1152x256xbf16, #tpu.memory_space<vmem>>, %arg2: memref<1x256xf32, #tpu.memory_space<vmem>>, %arg3: memref<256x10xbf16, #tpu.memory_space<vmem>>, %arg4: memref<1x10xf32, #tpu.memory_space<vmem>>, %arg5: memref<4x10xf32, #tpu.memory_space<vmem>>) attributes {dimension_semantics = [], scalar_prefetch = 0 : i64, scratch_operands = 0 : i64, tpu.core_type = #tpu.core_type<tc>} {
    %c0 = arith.constant 0 : index
    %c0_0 = arith.constant 0 : index
    %0 = vector.load %arg0[%c0, %c0_0] : memref<4x1152xbf16, #tpu.memory_space<vmem>>, vector<4x1152xbf16>
    %c0_1 = arith.constant 0 : index
    %c0_2 = arith.constant 0 : index
    %1 = vector.load %arg1[%c0_1, %c0_2] : memref<1152x256xbf16, #tpu.memory_space<vmem>>, vector<1152x256xbf16>
    %cst = arith.constant dense<0.000000e+00> : vector<4x256xf32>
    %2 = tpu.matmul %0, %1, %cst {dimension_numbers = #tpu.dot_dimension_numbers<[1], [0], [0], [1], [0, 0, 1, 1], [], []>} : vector<4x1152xbf16>, vector<1152x256xbf16>, vector<4x256xf32> -> vector<4x256xf32>
    %c0_3 = arith.constant 0 : index
    %c0_4 = arith.constant 0 : index
    %3 = vector.load %arg2[%c0_3, %c0_4] : memref<1x256xf32, #tpu.memory_space<vmem>>, vector<1x256xf32>
    %4 = vector.broadcast %3 : vector<1x256xf32> to vector<4x256xf32>
    %5 = arith.addf %2, %4 : vector<4x256xf32>
    %cst_5 = arith.constant 0.000000e+00 : f32
    %6 = vector.broadcast %cst_5 : f32 to vector<4x256xf32>
    %7 = arith.maximumf %5, %6 : vector<4x256xf32>
    %8 = arith.truncf %7 : vector<4x256xf32> to vector<4x256xbf16>
    %c0_6 = arith.constant 0 : index
    %c0_7 = arith.constant 0 : index
    %9 = vector.load %arg3[%c0_6, %c0_7] : memref<256x10xbf16, #tpu.memory_space<vmem>>, vector<256x10xbf16>
    %cst_8 = arith.constant dense<0.000000e+00> : vector<4x10xf32>
    %10 = tpu.matmul %8, %9, %cst_8 {dimension_numbers = #tpu.dot_dimension_numbers<[1], [0], [0], [1], [0, 0, 1, 1], [], []>} : vector<4x256xbf16>, vector<256x10xbf16>, vector<4x10xf32> -> vector<4x10xf32>
    %c0_9 = arith.constant 0 : index
    %c0_10 = arith.constant 0 : index
    %11 = vector.load %arg4[%c0_9, %c0_10] : memref<1x10xf32, #tpu.memory_space<vmem>>, vector<1x10xf32>
    %12 = vector.broadcast %11 : vector<1x10xf32> to vector<4x10xf32>
    %13 = arith.addf %10, %12 : vector<4x10xf32>
    %c0_11 = arith.constant 0 : index
    %c0_12 = arith.constant 0 : index
    %14 = vector.load %arg5[%c0_11, %c0_12] : memref<4x10xf32, #tpu.memory_space<vmem>>, vector<4x10xf32>
    tpu.vector_store %arg5[%c0_11, %c0_12], %13 {strides = array<i32>} : memref<4x10xf32, #tpu.memory_space<vmem>>, vector<4x10xf32>,
    return
  }
}

</mosaic_0001>

<llo_original>
// kernel: _lambda_.4
$region0: #{_lambda_.4}
  #allocation0 [shape = 'u32[]', space=smem, size = 0x4, offset = 0x4, fixed_abs, tag = 'smem constant byte address 0x4 - core index']
  #allocation1 [shape = 'u32[144,128]{1,0:T(1,128)}', space=vmem, size = 0x12000, scoped, tag = 'internal scratch']
  %s0 = inlined_call_operand.vmem [shape: bf16[4,784,9], index: 0, kind: input, shape index: {}]
  %s1 = inlined_call_operand.vmem [shape: bf16[9,32], index: 1, kind: input, shape index: {}]
  %s2 = inlined_call_operand.vmem [shape: f32[1,32], index: 2, kind: input, shape index: {}]
  %s3 = inlined_call_operand.vmem [shape: bf16[784,32], index: 3, kind: output, shape index: {}]
  %s4 = sld [smem:[#allocation0]]
  $region86: #{_lambda_.4} parent=0
    _
  %s6 = ssub.s32 1, %s4
  %s7 = scalar_select 0, %s6, %s4
  $region1: #{_lambda_.4} parent=0
    #allocation2 [shape = 'u8[229376]{0}', space=vmem, size = 0x38000, scoped, tag = 'input window, operand 0']
    loop: start=0, step=1, limit=9
    $region2: #{_lambda_.4} parent=1 // loop_pre_header
      _
    $region3: #{_lambda_.4} parent=1 // loop_header
      %s9 = sphi 0, %s13
      %p10 = scmp.ge.s32.totalorder %s9, 9
      %s19 = sphi 0, %s21
      %s22 = sphi 0, %s19
      %s23 = sphi 0, %s22
      %s39 = sphi 0, %s23
      %s43 = sphi 0, %s43
      %s45 = sphi 0, %s43
      %s46 = sphi 0, %s45
      %s60 = sphi 0, %s46
      %s64 = sphi 0, %s64
      %s66 = sphi 0, %s64
      %s67 = sphi 0, %s66
      %s81 = sphi 0, %s67
      %s87 = sphi 0, %s89
      %s90 = sphi 0, %s87
      %s91 = sphi 0, %s90
      %s107 = sphi 0, %s91
    $region4: #{_lambda_.4} parent=1 // loop_header_branch
      %12 = sbr.rel (%p10) target = $region8
    $region5: #{_lambda_.4} parent=1 // loop_body
      %s14 = ssub.s32 %s9, 1
      %s15 = ssub.s32 %s9, 2
      %s16 = sadd.s32 %s9, 1
      %s17 = ssub.s32 %s9, %s16
      %p18 = scmp.eq.s32.totalorder %s17, 0
      %s20 = sadd.s32 %s19, 1
      %s21 = scalar_select %p18, %s19, %s20
      %p24 = pneg %p18
      %p25 = scmp.eq.s32.totalorder %s9, 6
      %p26 = por %p24, %p25
      %p27 = scmp.ne.s32.totalorder %s19, %s22
      %p28 = scmp.eq.s32.totalorder %s9, 0
      %p29 = por %p27, %p28
      %p30 = scmp.ne.s32.totalorder %s19, %s22
      %p31 = scmp.eq.s32.totalorder %s14, 6
      %p32 = por %p30, %p31
      %p33 = scmp.ne.s32.totalorder %s22, %s23
      %p34 = scmp.eq.s32.totalorder %s14, 0
      %p35 = por %p33, %p34
      %p36 = scmp.ne.s32.totalorder %s22, %s23
      %p37 = scmp.eq.s32.totalorder %s15, 6
      %p38 = por %p36, %p37
      %p40 = scmp.ne.s32.totalorder %s23, %s39
      %p41 = scmp.eq.s32.totalorder %s15, 0
      %p42 = por %p40, %p41
      %s44 = sadd.s32 %s43, 1
      %p47 = scmp.eq.s32.totalorder %s9, 6
      %p48 = scmp.ne.s32.totalorder %s43, %s45
      %p49 = scmp.eq.s32.totalorder %s9, 0
      %p50 = por %p48, %p49
      %p51 = scmp.ne.s32.totalorder %s43, %s45
      %p52 = scmp.eq.s32.totalorder %s14, 6
      %p53 = por %p51, %p52
      %p54 = scmp.ne.s32.totalorder %s45, %s46
      %p55 = scmp.eq.s32.totalorder %s14, 0
      %p56 = por %p54, %p55
      %p57 = scmp.ne.s32.totalorder %s45, %s46
      %p58 = scmp.eq.s32.totalorder %s15, 6
      %p59 = por %p57, %p58
      %p61 = scmp.ne.s32.totalorder %s46, %s60
      %p62 = scmp.eq.s32.totalorder %s15, 0
      %p63 = por %p61, %p62
      %s65 = sadd.s32 %s64, 1
      %p68 = scmp.eq.s32.totalorder %s9, 6
      %p69 = scmp.ne.s32.totalorder %s64, %s66
      %p70 = scmp.eq.s32.totalorder %s9, 0
      %p71 = por %p69, %p70
      %p72 = scmp.ne.s32.totalorder %s64, %s66
      %p73 = scmp.eq.s32.totalorder %s14, 6
      %p74 = por %p72, %p73
      %p75 = scmp.ne.s32.totalorder %s66, %s67
      %p76 = scmp.eq.s32.totalorder %s14, 0
      %p77 = por %p75, %p76
      %p78 = scmp.ne.s32.totalorder %s66, %s67
      %p79 = scmp.eq.s32.totalorder %s15, 6
      %p80 = por %p78, %p79
      %p82 = scmp.ne.s32.totalorder %s67, %s81
      %p83 = scmp.eq.s32.totalorder %s15, 0
      %p84 = por %p82, %p83
      %s85 = ssub.s32 %s9, %s16
      %p86 = scmp.eq.s32.totalorder %s85, 0
      %s88 = sadd.s32 %s87, 1
      %s89 = scalar_select %p86, %s87, %s88
      %p92 = pneg %p86
      %p93 = scmp.eq.s32.totalorder %s9, 6
      %p94 = por %p92, %p93
      %p95 = scmp.ne.s32.totalorder %s87, %s90
      %p96 = scmp.eq.s32.totalorder %s9, 0
      %p97 = por %p95, %p96
      %p98 = scmp.ne.s32.totalorder %s87, %s90
      %p99 = scmp.eq.s32.totalorder %s14, 6
      %p100 = por %p98, %p99
      %p101 = scmp.ne.s32.totalorder %s90, %s91
      %p102 = scmp.eq.s32.totalorder %s14, 0
      %p103 = por %p101, %p102
      %p104 = scmp.ne.s32.totalorder %s90, %s91
      %p105 = scmp.eq.s32.totalorder %s15, 6
      %p106 = por %p104, %p105
      %p108 = scmp.ne.s32.totalorder %s91, %s107
      %p109 = scmp.eq.s32.totalorder %s15, 0
      %p110 = por %p108, %p109
      %p111 = scmp.le.s32.totalorder 1, %s9
      %p112 = scmp.lt.s32.totalorder %s9, 8
      %p113 = pnand %p111, %p112
      %p114 = pneg %p113
      // Predicated region
      $region9: #{_lambda_.4} parent=5 // pred_check
        _
      $region10: #{_lambda_.4} parent=5 // pred_check_branch
        %116 = sbr.rel (%p113) target = $region12
      $region11: #{_lambda_.4} parent=5 // pred_region
        %s117 = ssub.s32 %s9, 1
        // Predicated region
        $region13: #{_lambda_.4} parent=11 // pred_check
          %p118 = pneg %p56
        $region14: #{_lambda_.4} parent=11 // pred_check_branch
          %120 = sbr.rel (%p118) target = $region16
        $region15: #{_lambda_.4} parent=11 // pred_region
          _
        $region16: #{_lambda_.4} parent=11 // pred_fallthru
          _
        // Predicated region
        $region17: #{_lambda_.4} parent=11 // pred_check
          %p121 = pneg %p77
        $region18: #{_lambda_.4} parent=11 // pred_check_branch
          %123 = sbr.rel (%p121) target = $region20
        $region19: #{_lambda_.4} parent=11 // pred_region
          _
        $region20: #{_lambda_.4} parent=11 // pred_fallthru
          _
      $region12: #{_lambda_.4} parent=5 // pred_fallthru
        _
      %p124 = scmp.lt.s32.totalorder %s9, 7
      // Predicated region
      $region21: #{_lambda_.4} parent=5 // pred_check
        %p125 = pneg %p124
      $region22: #{_lambda_.4} parent=5 // pred_check_branch
        %127 = sbr.rel (%p125) target = $region24
      $region23: #{_lambda_.4} parent=5 // pred_region
        // Predicated region
        $region25: #{_lambda_.4} parent=23 // pred_check
          %p128 = pneg %p29
        $region26: #{_lambda_.4} parent=23 // pred_check_branch
          %130 = sbr.rel (%p128) target = $region28
        $region27: #{_lambda_.4} parent=23 // pred_region
          %s131 = sand.u32 %s19, 1
          %s132 = sand.u32 %s19, 1
          %s133 = smul.addr %s132, 224
          %s134 = scalar_lea.vmem [#allocation2], %s133
          %s135 = smul.u32 14, %s9
          %s136 = smul.addr %s135, 4
          %s137 = scalar_lea.vmem %s0, %s136
          // Predicated region
          $region29: #{_lambda_.4} parent=27 // pred_check
            _
          $region30: #{_lambda_.4} parent=27 // pred_check_branch
            %139 = sbr.rel (0) target = $region32
          $region31: #{_lambda_.4} parent=27 // pred_region
            // Predicated region
            $region33: #{_lambda_.4} parent=31 // pred_check
              _
            $region34: #{_lambda_.4} parent=31 // pred_check_branch
              %141 = sbr.rel target = $region36
            $region35: #{_lambda_.4} parent=31 // pred_region
              // Predicated region
              $region48: #{_lambda_.4} parent=35 // pred_check
                _
              $region49: #{_lambda_.4} parent=35 // pred_check_branch
                %266 = sbr.rel (0) target = $region51
              $region50: #{_lambda_.4} parent=35 // pred_region
                loop: start=0, step=1, limit=1
                $region52: #{_lambda_.4} parent=50 // loop_pre_header
                  _
                $region53: #{_lambda_.4} parent=50 // loop_header
                  %s268 = sphi 0, %s272
                  %p269 = scmp.ge.s32.totalorder %s268, 1
                  %s273 = sphi %s137, %s137
                  %s274 = sphi %s134, %s134
                $region54: #{_lambda_.4} parent=50 // loop_header_branch
                  %271 = sbr.rel (%p269) target = $region58
                $region55: #{_lambda_.4} parent=50 // loop_body
                  _
                $region56: #{_lambda_.4} parent=50 // loop_footer
                  %s272 = sadd.s32 1, %s268
                $region57: #{_lambda_.4} parent=50 // loop_footer_branch
                  %267 = sbr.rel target = $region53
                $region58: #{_lambda_.4} parent=50 // loop_exit
                  _
                loop: start=0, step=1, limit=1
                $region59: #{_lambda_.4} parent=50 // loop_pre_header
                  _
                $region60: #{_lambda_.4} parent=50 // loop_header
                  %s277 = sphi 0, %s281
                  %p278 = scmp.ge.s32.totalorder %s277, 1
                  %s282 = sphi %s137, %s137
                  %s283 = sphi %s134, %s134
                $region61: #{_lambda_.4} parent=50 // loop_header_branch
                  %280 = sbr.rel (%p278) target = $region65
                $region62: #{_lambda_.4} parent=50 // loop_body
                  %v284 = vld [vmem:[%s282] sm:$0xf]
                  %285 = vst [vmem:[%s283] sm:$0xf] %v284
                  %v286 = vld [vmem:[%s282 + $0x4] sm:$0xf]
                  %287 = vst [vmem:[%s283 + $0x4] sm:$0xf] %v286
                  %v288 = vld [vmem:[%s282 + $0x8] sm:$0xf]
                  %289 = vst [vmem:[%s283 + $0x8] sm:$0xf] %v288
                  %v290 = vld [vmem:[%s282 + $0xc] sm:$0xf]
                  %291 = vst [vmem:[%s283 + $0xc] sm:$0xf] %v290
                  %v292 = vld [vmem:[%s282 + $0x10] sm:$0xf]
                  %293 = vst [vmem:[%s283 + $0x10] sm:$0xf] %v292
                  %v294 = vld [vmem:[%s282 + $0x14] sm:$0xf]
                  %295 = vst [vmem:[%s283 + $0x14] sm:$0xf] %v294
                  %v296 = vld [vmem:[%s282 + $0x18] sm:$0xf]
                  %297 = vst [vmem:[%s283 + $0x18] sm:$0xf] %v296
                  %v298 = vld [vmem:[%s282 + $0x1c] sm:$0xf]
                  %299 = vst [vmem:[%s283 + $0x1c] sm:$0xf] %v298
                  %v300 = vld [vmem:[%s282 + $0x20] sm:$0xf]
                  %301 = vst [vmem:[%s283 + $0x20] sm:$0xf] %v300
                  %v302 = vld [vmem:[%s282 + $0x24] sm:$0xf]
                  %303 = vst [vmem:[%s283 + $0x24] sm:$0xf] %v302
                  %v304 = vld [vmem:[%s282 + $0x28] sm:$0xf]
                  %305 = vst [vmem:[%s283 + $0x28] sm:$0xf] %v304
                  %v306 = vld [vmem:[%s282 + $0x2c] sm:$0xf]
                  %307 = vst [vmem:[%s283 + $0x2c] sm:$0xf] %v306
                  %v308 = vld [vmem:[%s282 + $0x30] sm:$0xf]
                  %309 = vst [vmem:[%s283 + $0x30] sm:$0xf] %v308
                  %v310 = vld [vmem:[%s282 + $0x34] sm:$0xf]
                  %311 = vst [vmem:[%s283 + $0x34] sm:$0xf] %v310
                  %v312 = vld [vmem:[%s282 + $0x188] sm:$0xf]
                  %313 = vst [vmem:[%s283 + $0x38] sm:$0xf] %v312
                  %v314 = vld [vmem:[%s282 + $0x18c] sm:$0xf]
                  %315 = vst [vmem:[%s283 + $0x3c] sm:$0xf] %v314
                  %v316 = vld [vmem:[%s282 + $0x190] sm:$0xf]
                  %317 = vst [vmem:[%s283 + $0x40] sm:$0xf] %v316
                  %v318 = vld [vmem:[%s282 + $0x194] sm:$0xf]
                  %319 = vst [vmem:[%s283 + $0x44] sm:$0xf] %v318
                  %v320 = vld [vmem:[%s282 + $0x198] sm:$0xf]
                  %321 = vst [vmem:[%s283 + $0x48] sm:$0xf] %v320
                  %v322 = vld [vmem:[%s282 + $0x19c] sm:$0xf]
                  %323 = vst [vmem:[%s283 + $0x4c] sm:$0xf] %v322
                  %v324 = vld [vmem:[%s282 + $0x1a0] sm:$0xf]
                  %325 = vst [vmem:[%s283 + $0x50] sm:$0xf] %v324
                  %v326 = vld [vmem:[%s282 + $0x1a4] sm:$0xf]
                  %327 = vst [vmem:[%s283 + $0x54] sm:$0xf] %v326
                  %v328 = vld [vmem:[%s282 + $0x1a8] sm:$0xf]
                  %329 = vst [vmem:[%s283 + $0x58] sm:$0xf] %v328
                  %v330 = vld [vmem:[%s282 + $0x1ac] sm:$0xf]
                  %331 = vst [vmem:[%s283 + $0x5c] sm:$0xf] %v330
                  %v332 = vld [vmem:[%s282 + $0x1b0] sm:$0xf]
                  %333 = vst [vmem:[%s283 + $0x60] sm:$0xf] %v332
                  %v334 = vld [vmem:[%s282 + $0x1b4] sm:$0xf]
                  %335 = vst [vmem:[%s283 + $0x64] sm:$0xf] %v334
                  %v336 = vld [vmem:[%s282 + $0x1b8] sm:$0xf]
                  %337 = vst [vmem:[%s283 + $0x68] sm:$0xf] %v336
                  %v338 = vld [vmem:[%s282 + $0x1bc] sm:$0xf]
                  %339 = vst [vmem:[%s283 + $0x6c] sm:$0xf] %v338
                  %v340 = vld [vmem:[%s282 + $0x310] sm:$0xf]
                  %341 = vst [vmem:[%s283 + $0x70] sm:$0xf] %v340
                  %v342 = vld [vmem:[%s282 + $0x314] sm:$0xf]
                  %343 = vst [vmem:[%s283 + $0x74] sm:$0xf] %v342
                  %v344 = vld [vmem:[%s282 + $0x318] sm:$0xf]
                  %345 = vst [vmem:[%s283 + $0x78] sm:$0xf] %v344
                  %v346 = vld [vmem:[%s282 + $0x31c] sm:$0xf]
                  %347 = vst [vmem:[%s283 + $0x7c] sm:$0xf] %v346
                  %v348 = vld [vmem:[%s282 + $0x320] sm:$0xf]
                  %349 = vst [vmem:[%s283 + $0x80] sm:$0xf] %v348
                  %v350 = vld [vmem:[%s282 + $0x324] sm:$0xf]
                  %351 = vst [vmem:[%s283 + $0x84] sm:$0xf] %v350
                  %v352 = vld [vmem:[%s282 + $0x328] sm:$0xf]
                  %353 = vst [vmem:[%s283 + $0x88] sm:$0xf] %v352
                  %v354 = vld [vmem:[%s282 + $0x32c] sm:$0xf]
                  %355 = vst [vmem:[%s283 + $0x8c] sm:$0xf] %v354
                  %v356 = vld [vmem:[%s282 + $0x330] sm:$0xf]
                  %357 = vst [vmem:[%s283 + $0x90] sm:$0xf] %v356
                  %v358 = vld [vmem:[%s282 + $0x334] sm:$0xf]
                  %359 = vst [vmem:[%s283 + $0x94] sm:$0xf] %v358
                  %v360 = vld [vmem:[%s282 + $0x338] sm:$0xf]
                  %361 = vst [vmem:[%s283 + $0x98] sm:$0xf] %v360
                  %v362 = vld [vmem:[%s282 + $0x33c] sm:$0xf]
                  %363 = vst [vmem:[%s283 + $0x9c] sm:$0xf] %v362
                  %v364 = vld [vmem:[%s282 + $0x340] sm:$0xf]
                  %365 = vst [vmem:[%s283 + $0xa0] sm:$0xf] %v364
                  %v366 = vld [vmem:[%s282 + $0x344] sm:$0xf]
                  %367 = vst [vmem:[%s283 + $0xa4] sm:$0xf] %v366
                  %v368 = vld [vmem:[%s282 + $0x498] sm:$0xf]
                  %369 = vst [vmem:[%s283 + $0xa8] sm:$0xf] %v368
                  %v370 = vld [vmem:[%s282 + $0x49c] sm:$0xf]
                  %371 = vst [vmem:[%s283 + $0xac] sm:$0xf] %v370
                  %v372 = vld [vmem:[%s282 + $0x4a0] sm:$0xf]
                  %373 = vst [vmem:[%s283 + $0xb0] sm:$0xf] %v372
                  %v374 = vld [vmem:[%s282 + $0x4a4] sm:$0xf]
                  %375 = vst [vmem:[%s283 + $0xb4] sm:$0xf] %v374
                  %v376 = vld [vmem:[%s282 + $0x4a8] sm:$0xf]
                  %377 = vst [vmem:[%s283 + $0xb8] sm:$0xf] %v376
                  %v378 = vld [vmem:[%s282 + $0x4ac] sm:$0xf]
                  %379 = vst [vmem:[%s283 + $0xbc] sm:$0xf] %v378
                  %v380 = vld [vmem:[%s282 + $0x4b0] sm:$0xf]
                  %381 = vst [vmem:[%s283 + $0xc0] sm:$0xf] %v380
                  %v382 = vld [vmem:[%s282 + $0x4b4] sm:$0xf]
                  %383 = vst [vmem:[%s283 + $0xc4] sm:$0xf] %v382
                  %v384 = vld [vmem:[%s282 + $0x4b8] sm:$0xf]
                  %385 = vst [vmem:[%s283 + $0xc8] sm:$0xf] %v384
                  %v386 = vld [vmem:[%s282 + $0x4bc] sm:$0xf]
                  %387 = vst [vmem:[%s283 + $0xcc] sm:$0xf] %v386
                  %v388 = vld [vmem:[%s282 + $0x4c0] sm:$0xf]
                  %389 = vst [vmem:[%s283 + $0xd0] sm:$0xf] %v388
                  %v390 = vld [vmem:[%s282 + $0x4c4] sm:$0xf]
                  %391 = vst [vmem:[%s283 + $0xd4] sm:$0xf] %v390
                  %v392 = vld [vmem:[%s282 + $0x4c8] sm:$0xf]
                  %393 = vst [vmem:[%s283 + $0xd8] sm:$0xf] %v392
                  %v394 = vld [vmem:[%s282 + $0x4cc] sm:$0xf]
                  %395 = vst [vmem:[%s283 + $0xdc] sm:$0xf] %v394
                $region63: #{_lambda_.4} parent=50 // loop_footer
                  %s281 = sadd.s32 1, %s277
                $region64: #{_lambda_.4} parent=50 // loop_footer_branch
                  %276 = sbr.rel target = $region60
                $region65: #{_lambda_.4} parent=50 // loop_exit
                  _
              $region51: #{_lambda_.4} parent=35 // pred_fallthru
                _
            $region36: #{_lambda_.4} parent=31 // pred_fallthru
              _
            // Predicated region
            $region37: #{_lambda_.4} parent=31 // pred_check
              _
            $region38: #{_lambda_.4} parent=31 // pred_check_branch
              %143 = sbr.rel (0) target = $region40
            $region39: #{_lambda_.4} parent=31 // pred_region
              loop: start=0, step=1, limit=1
              $region41: #{_lambda_.4} parent=39 // loop_pre_header
                _
              $region42: #{_lambda_.4} parent=39 // loop_header
                %s146 = sphi 0, %s150
                %p147 = scmp.ge.s32.totalorder %s146, 1
                %s151 = sphi %s137, %s137
                %s152 = sphi %s134, %s134
              $region43: #{_lambda_.4} parent=39 // loop_header_branch
                %149 = sbr.rel (%p147) target = $region47
              $region44: #{_lambda_.4} parent=39 // loop_body
                %v153 = vld [vmem:[%s151] sm:$0xf]
                %154 = vst [vmem:[%s152] sm:$0xf] %v153
                %v155 = vld [vmem:[%s151 + $0x4] sm:$0xf]
                %156 = vst [vmem:[%s152 + $0x4] sm:$0xf] %v155
                %v157 = vld [vmem:[%s151 + $0x8] sm:$0xf]
                %158 = vst [vmem:[%s152 + $0x8] sm:$0xf] %v157
                %v159 = vld [vmem:[%s151 + $0xc] sm:$0xf]
                %160 = vst [vmem:[%s152 + $0xc] sm:$0xf] %v159
                %v161 = vld [vmem:[%s151 + $0x10] sm:$0xf]
                %162 = vst [vmem:[%s152 + $0x10] sm:$0xf] %v161
                %v163 = vld [vmem:[%s151 + $0x14] sm:$0xf]
                %164 = vst [vmem:[%s152 + $0x14] sm:$0xf] %v163
                %v165 = vld [vmem:[%s151 + $0x18] sm:$0xf]
                %166 = vst [vmem:[%s152 + $0x18] sm:$0xf] %v165
                %v167 = vld [vmem:[%s151 + $0x1c] sm:$0xf]
                %168 = vst [vmem:[%s152 + $0x1c] sm:$0xf] %v167
                %v169 = vld [vmem:[%s151 + $0x20] sm:$0xf]
                %170 = vst [vmem:[%s152 + $0x20] sm:$0xf] %v169
                %v171 = vld [vmem:[%s151 + $0x24] sm:$0xf]
                %172 = vst [vmem:[%s152 + $0x24] sm:$0xf] %v171
                %v173 = vld [vmem:[%s151 + $0x28] sm:$0xf]
                %174 = vst [vmem:[%s152 + $0x28] sm:$0xf] %v173
                %v175 = vld [vmem:[%s151 + $0x2c] sm:$0xf]
                %176 = vst [vmem:[%s152 + $0x2c] sm:$0xf] %v175
                %v177 = vld [vmem:[%s151 + $0x30] sm:$0xf]
                %178 = vst [vmem:[%s152 + $0x30] sm:$0xf] %v177
                %v179 = vld [vmem:[%s151 + $0x34] sm:$0xf]
                %180 = vst [vmem:[%s152 + $0x34] sm:$0xf] %v179
                %v181 = vld [vmem:[%s151 + $0x188] sm:$0xf]
                %182 = vst [vmem:[%s152 + $0x38] sm:$0xf] %v181
                %v183 = vld [vmem:[%s151 + $0x18c] sm:$0xf]
                %184 = vst [vmem:[%s152 + $0x3c] sm:$0xf] %v183
                %v185 = vld [vmem:[%s151 + $0x190] sm:$0xf]
                %186 = vst [vmem:[%s152 + $0x40] sm:$0xf] %v185
                %v187 = vld [vmem:[%s151 + $0x194] sm:$0xf]
                %188 = vst [vmem:[%s152 + $0x44] sm:$0xf] %v187
                %v189 = vld [vmem:[%s151 + $0x198] sm:$0xf]
                %190 = vst [vmem:[%s152 + $0x48] sm:$0xf] %v189
                %v191 = vld [vmem:[%s151 + $0x19c] sm:$0xf]
                %192 = vst [vmem:[%s152 + $0x4c] sm:$0xf] %v191
                %v193 = vld [vmem:[%s151 + $0x1a0] sm:$0xf]
                %194 = vst [vmem:[%s152 + $0x50] sm:$0xf] %v193
                %v195 = vld [vmem:[%s151 + $0x1a4] sm:$0xf]
                %196 = vst [vmem:[%s152 + $0x54] sm:$0xf] %v195
                %v197 = vld [vmem:[%s151 + $0x1a8] sm:$0xf]
                %198 = vst [vmem:[%s152 + $0x58] sm:$0xf] %v197
                %v199 = vld [vmem:[%s151 + $0x1ac] sm:$0xf]
                %200 = vst [vmem:[%s152 + $0x5c] sm:$0xf] %v199
                %v201 = vld [vmem:[%s151 + $0x1b0] sm:$0xf]
                %202 = vst [vmem:[%s152 + $0x60] sm:$0xf] %v201
                %v203 = vld [vmem:[%s151 + $0x1b4] sm:$0xf]
                %204 = vst [vmem:[%s152 + $0x64] sm:$0xf] %v203
                %v205 = vld [vmem:[%s151 + $0x1b8] sm:$0xf]
                %206 = vst [vmem:[%s152 + $0x68] sm:$0xf] %v205
                %v207 = vld [vmem:[%s151 + $0x1bc] sm:$0xf]
                %208 = vst [vmem:[%s152 + $0x6c] sm:$0xf] %v207
                %v209 = vld [vmem:[%s151 + $0x310] sm:$0xf]
                %210 = vst [vmem:[%s152 + $0x70] sm:$0xf] %v209
                %v211 = vld [vmem:[%s151 + $0x314] sm:$0xf]
                %212 = vst [vmem:[%s152 + $0x74] sm:$0xf] %v211
                %v213 = vld [vmem:[%s151 + $0x318] sm:$0xf]
                %214 = vst [vmem:[%s152 + $0x78] sm:$0xf] %v213
                %v215 = vld [vmem:[%s151 + $0x31c] sm:$0xf]
                %216 = vst [vmem:[%s152 + $0x7c] sm:$0xf] %v215
                %v217 = vld [vmem:[%s151 + $0x320] sm:$0xf]
                %218 = vst [vmem:[%s152 + $0x80] sm:$0xf] %v217
                %v219 = vld [vmem:[%s151 + $0x324] sm:$0xf]
                %220 = vst [vmem:[%s152 + $0x84] sm:$0xf] %v219
                %v221 = vld [vmem:[%s151 + $0x328] sm:$0xf]
                %222 = vst [vmem:[%s152 + $0x88] sm:$0xf] %v221
                %v223 = vld [vmem:[%s151 + $0x32c] sm:$0xf]
                %224 = vst [vmem:[%s152 + $0x8c] sm:$0xf] %v223
                %v225 = vld [vmem:[%s151 + $0x330] sm:$0xf]
                %226 = vst [vmem:[%s152 + $0x90] sm:$0xf] %v225
                %v227 = vld [vmem:[%s151 + $0x334] sm:$0xf]
                %228 = vst [vmem:[%s152 + $0x94] sm:$0xf] %v227
                %v229 = vld [vmem:[%s151 + $0x338] sm:$0xf]
                %230 = vst [vmem:[%s152 + $0x98] sm:$0xf] %v229
                %v231 = vld [vmem:[%s151 + $0x33c] sm:$0xf]
                %232 = vst [vmem:[%s152 + $0x9c] sm:$0xf] %v231
                %v233 = vld [vmem:[%s151 + $0x340] sm:$0xf]
                %234 = vst [vmem:[%s152 + $0xa0] sm:$0xf] %v233
                %v235 = vld [vmem:[%s151 + $0x344] sm:$0xf]
                %236 = vst [vmem:[%s152 + $0xa4] sm:$0xf] %v235
                %v237 = vld [vmem:[%s151 + $0x498] sm:$0xf]
                %238 = vst [vmem:[%s152 + $0xa8] sm:$0xf] %v237
                %v239 = vld [vmem:[%s151 + $0x49c] sm:$0xf]
                %240 = vst [vmem:[%s152 + $0xac] sm:$0xf] %v239
                %v241 = vld [vmem:[%s151 + $0x4a0] sm:$0xf]
                %242 = vst [vmem:[%s152 + $0xb0] sm:$0xf] %v241
                %v243 = vld [vmem:[%s151 + $0x4a4] sm:$0xf]
                %244 = vst [vmem:[%s152 + $0xb4] sm:$0xf] %v243
                %v245 = vld [vmem:[%s151 + $0x4a8] sm:$0xf]
                %246 = vst [vmem:[%s152 + $0xb8] sm:$0xf] %v245
                %v247 = vld [vmem:[%s151 + $0x4ac] sm:$0xf]
                %248 = vst [vmem:[%s152 + $0xbc] sm:$0xf] %v247
                %v249 = vld [vmem:[%s151 + $0x4b0] sm:$0xf]
                %250 = vst [vmem:[%s152 + $0xc0] sm:$0xf] %v249
                %v251 = vld [vmem:[%s151 + $0x4b4] sm:$0xf]
                %252 = vst [vmem:[%s152 + $0xc4] sm:$0xf] %v251
                %v253 = vld [vmem:[%s151 + $0x4b8] sm:$0xf]
                %254 = vst [vmem:[%s152 + $0xc8] sm:$0xf] %v253
                %v255 = vld [vmem:[%s151 + $0x4bc] sm:$0xf]
                %256 = vst [vmem:[%s152 + $0xcc] sm:$0xf] %v255
                %v257 = vld [vmem:[%s151 + $0x4c0] sm:$0xf]
                %258 = vst [vmem:[%s152 + $0xd0] sm:$0xf] %v257
                %v259 = vld [vmem:[%s151 + $0x4c4] sm:$0xf]
                %260 = vst [vmem:[%s152 + $0xd4] sm:$0xf] %v259
                %v261 = vld [vmem:[%s151 + $0x4c8] sm:$0xf]
                %262 = vst [vmem:[%s152 + $0xd8] sm:$0xf] %v261
                %v263 = vld [vmem:[%s151 + $0x4cc] sm:$0xf]
                %264 = vst [vmem:[%s152 + $0xdc] sm:$0xf] %v263
              $region45: #{_lambda_.4} parent=39 // loop_footer
                %s150 = sadd.s32 1, %s146
              $region46: #{_lambda_.4} parent=39 // loop_footer_branch
                %145 = sbr.rel target = $region42
              $region47: #{_lambda_.4} parent=39 // loop_exit
                _
            $region40: #{_lambda_.4} parent=31 // pred_fallthru
              _
          $region32: #{_lambda_.4} parent=27 // pred_fallthru
            _
          %396 = vnop
        $region28: #{_lambda_.4} parent=23 // pred_fallthru
          _
      $region24: #{_lambda_.4} parent=5 // pred_fallthru
        _
      %p397 = scmp.le.s32.totalorder 1, %s9
      %p398 = scmp.lt.s32.totalorder %s9, 8
      %p399 = pnand %p397, %p398
      %p400 = pneg %p399
      // Predicated region
      $region66: #{_lambda_.4} parent=5 // pred_check
        _
      $region67: #{_lambda_.4} parent=5 // pred_check_branch
        %402 = sbr.rel (%p399) target = $region69
      $region68: #{_lambda_.4} parent=5 // pred_region
        %s403 = ssub.s32 %s9, 1
        %s404 = sand.u32 %s22, 1
        %s405 = sand.u32 %s22, 1
        %s406 = smul.addr %s405, 224
        %s407 = scalar_lea.vmem [#allocation2], %s406
        // Predicated region
        $region70: #{_lambda_.4} parent=68 // pred_check
          %p408 = pneg %p35
        $region71: #{_lambda_.4} parent=68 // pred_check_branch
          %410 = sbr.rel (%p408) target = $region73
        $region72: #{_lambda_.4} parent=68 // pred_region
          _
        $region73: #{_lambda_.4} parent=68 // pred_fallthru
          _
        %s411 = sand.u32 %s22, 1
        %s412 = sand.u32 %s22, 1
        %s413 = smul.addr %s412, 224
        %s414 = scalar_lea.vmem [#allocation2], %s413
        %p415 = pneg %p35
        %p416 = pneg %p32
        %p417 = pneg %p56
        %p418 = pneg %p53
        %p419 = pneg %p77
        %p420 = pneg %p74
        %p421 = pneg %p103
        %p422 = pneg %p100
        %s423 = smul.u32 14, %s14
        %p424 = scmp.lt.s32.totalorder %s423, 97
        %s425 = scalar_select %p424, %s423, 97
        %s426 = smul.addr %s425, 4
        %s427 = scalar_lea.vmem %s3, %s426
        %s428 = smul.u32 14, %s14
        %s429 = smul.u32 14, %s14
        %p430 = scmp.lt.s32.totalorder %s429, 97
        %s431 = scalar_select %p430, %s429, 97
        %s432 = smul.addr %s431, 4
        %s433 = scalar_lea.vmem %s3, %s432
        %s434 = smul.u32 14, %s14
        %v436 = vld [vmem:[%s1] sm:$0xf]
        %v437 = vld [vmem:[%s1 + $0x4] sm:$0x1]
        %v438 = vld [vmem:[%s407] sm:$0xf]
        %v439 = vld [vmem:[%s407 + $0x4] sm:$0xf]
        %v440 = vld [vmem:[%s407 + $0x8] sm:$0xf]
        %v441 = vld [vmem:[%s407 + $0xc] sm:$0xf]
        %v442 = vld [vmem:[%s407 + $0x10] sm:$0xf]
        %v443 = vld [vmem:[%s407 + $0x14] sm:$0xf]
        %v444 = vld [vmem:[%s407 + $0x18] sm:$0xf]
        %v445 = vld [vmem:[%s407 + $0x1c] sm:$0xf]
        %v446 = vld [vmem:[%s407 + $0x20] sm:$0xf]
        %v447 = vld [vmem:[%s407 + $0x24] sm:$0xf]
        %v448 = vld [vmem:[%s407 + $0x28] sm:$0xf]
        %v449 = vld [vmem:[%s407 + $0x2c] sm:$0xf]
        %v450 = vld [vmem:[%s407 + $0x30] sm:$0xf]
        %v451 = vld [vmem:[%s407 + $0x34] sm:$0xf]
        %v466 = vunpack.c.l.b16 %v438
        %v467 = vunpack.c.l.b16 %v439
        %v468 = vunpack.c.l.b16 %v440
        %v469 = vunpack.c.l.b16 %v441
        %v470 = vunpack.c.l.b16 %v442
        %v471 = vunpack.c.l.b16 %v443
        %v472 = vunpack.c.l.b16 %v444
        %v473 = vunpack.c.l.b16 %v445
        %v474 = vunpack.c.l.b16 %v446
        %v475 = vunpack.c.l.b16 %v447
        %v476 = vunpack.c.l.b16 %v448
        %v477 = vunpack.c.l.b16 %v449
        %v478 = vunpack.c.l.b16 %v450
        %v479 = vunpack.c.l.b16 %v451
        %v480 = vpack.c.b16 %v467, %v466
        %v481 = vpack.c.b16 %v469, %v468
        %v482 = vpack.c.b16 %v471, %v470
        %v483 = vpack.c.b16 %v473, %v472
        %v484 = vpack.c.b16 %v475, %v474
        %v485 = vpack.c.b16 %v477, %v476
        %v486 = vpack.c.b16 %v479, %v478
        %v489 = vunpack.c.l.b16 %v436
        %v490 = vunpack.c.l.b16 %v437
        %v491 = vpack.c.b16 %v490, %v489
        %vm492 = vcmask 72704
        %v494 = vsel %vm492, %v480, 0
        %v497 = vsel %vm492, %v481, 0
        %v500 = vsel %vm492, %v482, 0
        %v503 = vsel %vm492, %v483, 0
        %v506 = vsel %vm492, %v484, 0
        %v509 = vsel %vm492, %v485, 0
        %v512 = vsel %vm492, %v486, 0
        %vm514 = vcmask 1043456
        %vm515 = vcmask 1044480
        %v516 = vsel %vm514, 4294967295, 65535
        %v517 = vsel %vm515, %v516, 0
        %v519 = vand.u32 %v491, %v517
        %521 = vmatprep.subr.bf16.mxu0 0
        %522 = vmatpush1.bf16.msra.mxu0 %v519
        %523 = vmatprep.subr.bf16.mxu0 0
        %524 = vmatpush1.bf16.msra.mxu0 0
        %525 = vmatprep.subr.bf16.mxu0 0
        %526 = vmatpush1.bf16.msra.mxu0 0
        %527 = vmatprep.subr.bf16.mxu0 0
        %528 = vmatpush1.bf16.msra.mxu0 0
        %529 = vmatprep.subr.bf16.mxu0 0
        %530 = vmatpush1.bf16.msra.mxu0 0
        %531 = vmatprep.subr.bf16.mxu0 0
        %532 = vmatpush1.bf16.msra.mxu0 0
        %533 = vmatprep.subr.bf16.mxu0 0
        %534 = vmatpush1.bf16.msra.mxu0 0
        %535 = vmatprep.subr.bf16.mxu0 0
        %536 = vmatpush1.bf16.msra.mxu0 0
        %537 = vmatprep.subr.bf16.mxu0 0
        %538 = vmatpush1.bf16.msra.mxu0 0
        %539 = vmatprep.subr.bf16.mxu0 0
        %540 = vmatpush1.bf16.msra.mxu0 0
        %541 = vmatprep.subr.bf16.mxu0 0
        %542 = vmatpush1.bf16.msra.mxu0 0
        %543 = vmatprep.subr.bf16.mxu0 0
        %544 = vmatpush1.bf16.msra.mxu0 0
        %545 = vmatprep.subr.bf16.mxu0 0
        %546 = vmatpush1.bf16.msra.mxu0 0
        %547 = vmatprep.subr.bf16.mxu0 0
        %548 = vmatpush1.bf16.msra.mxu0 0
        %549 = vmatprep.subr.bf16.mxu0 0
        %550 = vmatpush1.bf16.msra.mxu0 0
        %551 = vmatprep.subr.bf16.mxu0 0
        %552 = vmatpush1.bf16.msra.mxu0 0
        %553 = vmatprep.mubr.bf16.mxu0 0
        %554 = vmatmul.mubr.bf16.gmra.mrb[0].mxu0 %v494
        %v555 = vpop.f32.mrb[0].mxu0
        %v556 = vadd.f32 0.0, %v555
        %v557 = vpop.f32.mrb[0].mxu0
        %v558 = vpop.f32.mrb[0].mxu0
        %v559 = vadd.f32 0.0, %v558
        %v560 = vpop.f32.mrb[0].mxu0
        %561 = vmatprep.mubr.bf16.mxu0 0
        %562 = vmatmul.mubr.bf16.gmra.mrb[0].mxu0 %v497
        %v563 = vpop.f32.mrb[0].mxu0
        %v564 = vadd.f32 0.0, %v563
        %v565 = vpop.f32.mrb[0].mxu0
        %v566 = vpop.f32.mrb[0].mxu0
        %v567 = vadd.f32 0.0, %v566
        %v568 = vpop.f32.mrb[0].mxu0
        %569 = vmatprep.mubr.bf16.mxu0 0
        %570 = vmatmul.mubr.bf16.gmra.mrb[0].mxu0 %v500
        %v571 = vpop.f32.mrb[0].mxu0
        %v572 = vadd.f32 0.0, %v571
        %v573 = vpop.f32.mrb[0].mxu0
        %v574 = vpop.f32.mrb[0].mxu0
        %v575 = vadd.f32 0.0, %v574
        %v576 = vpop.f32.mrb[0].mxu0
        %577 = vmatprep.mubr.bf16.mxu0 0
        %578 = vmatmul.mubr.bf16.gmra.mrb[0].mxu0 %v503
        %v579 = vpop.f32.mrb[0].mxu0
        %v580 = vadd.f32 0.0, %v579
        %v581 = vpop.f32.mrb[0].mxu0
        %v582 = vpop.f32.mrb[0].mxu0
        %v583 = vadd.f32 0.0, %v582
        %v584 = vpop.f32.mrb[0].mxu0
        %585 = vmatprep.mubr.bf16.mxu0 0
        %586 = vmatmul.mubr.bf16.gmra.mrb[0].mxu0 %v506
        %v587 = vpop.f32.mrb[0].mxu0
        %v588 = vadd.f32 0.0, %v587
        %v589 = vpop.f32.mrb[0].mxu0
        %v590 = vpop.f32.mrb[0].mxu0
        %v591 = vadd.f32 0.0, %v590
        %v592 = vpop.f32.mrb[0].mxu0
        %593 = vmatprep.mubr.bf16.mxu0 0
        %594 = vmatmul.mubr.bf16.gmra.mrb[0].mxu0 %v509
        %v595 = vpop.f32.mrb[0].mxu0
        %v596 = vadd.f32 0.0, %v595
        %v597 = vpop.f32.mrb[0].mxu0
        %v598 = vpop.f32.mrb[0].mxu0
        %v599 = vadd.f32 0.0, %v598
        %v600 = vpop.f32.mrb[0].mxu0
        %601 = vmatprep.mubr.bf16.mxu0 0
        %602 = vmatmul.mubr.bf16.gmra.mrb[0].mxu0 %v512
        %v603 = vpop.f32.mrb[0].mxu0
        %v604 = vadd.f32 0.0, %v603
        %v605 = vpop.f32.mrb[0].mxu0
        %v606 = vpop.f32.mrb[0].mxu0
        %v607 = vadd.f32 0.0, %v606
        %v608 = vpop.f32.mrb[0].mxu0
        %609 = vdwg.mxu0
        %s610 = scalar_lea.vmem %s407, 56 [#allocation2]
        %v611 = vld [vmem:[%s610] sm:$0xf]
        %v612 = vld [vmem:[%s610 + $0x4] sm:$0xf]
        %v613 = vld [vmem:[%s610 + $0x8] sm:$0xf]
        %v614 = vld [vmem:[%s610 + $0xc] sm:$0xf]
        %v615 = vld [vmem:[%s610 + $0x10] sm:$0xf]
        %v616 = vld [vmem:[%s610 + $0x14] sm:$0xf]
        %v617 = vld [vmem:[%s610 + $0x18] sm:$0xf]
        %v618 = vld [vmem:[%s610 + $0x1c] sm:$0xf]
        %v619 = vld [vmem:[%s610 + $0x20] sm:$0xf]
        %v620 = vld [vmem:[%s610 + $0x24] sm:$0xf]
        %v621 = vld [vmem:[%s610 + $0x28] sm:$0xf]
        %v622 = vld [vmem:[%s610 + $0x2c] sm:$0xf]
        %v623 = vld [vmem:[%s610 + $0x30] sm:$0xf]
        %v624 = vld [vmem:[%s610 + $0x34] sm:$0xf]
        %v639 = vunpack.c.l.b16 %v611
        %v640 = vunpack.c.l.b16 %v612
        %v641 = vunpack.c.l.b16 %v613
        %v642 = vunpack.c.l.b16 %v614
        %v643 = vunpack.c.l.b16 %v615
        %v644 = vunpack.c.l.b16 %v616
        %v645 = vunpack.c.l.b16 %v617
        %v646 = vunpack.c.l.b16 %v618
        %v647 = vunpack.c.l.b16 %v619
        %v648 = vunpack.c.l.b16 %v620
        %v649 = vunpack.c.l.b16 %v621
        %v650 = vunpack.c.l.b16 %v622
        %v651 = vunpack.c.l.b16 %v623
        %v652 = vunpack.c.l.b16 %v624
        %v653 = vpack.c.b16 %v640, %v639
        %v654 = vpack.c.b16 %v642, %v641
        %v655 = vpack.c.b16 %v644, %v643
        %v656 = vpack.c.b16 %v646, %v645
        %v657 = vpack.c.b16 %v648, %v647
        %v658 = vpack.c.b16 %v650, %v649
        %v659 = vpack.c.b16 %v652, %v651
        %v661 = vsel %vm492, %v653, 0
        %v664 = vsel %vm492, %v654, 0
        %v667 = vsel %vm492, %v655, 0
        %v670 = vsel %vm492, %v656, 0
        %v673 = vsel %vm492, %v657, 0
        %v676 = vsel %vm492, %v658, 0
        %v679 = vsel %vm492, %v659, 0
        %681 = vmatprep.subr.bf16.mxu0 0
        %682 = vmatpush1.bf16.msra.mxu0 %v519
        %683 = vmatprep.subr.bf16.mxu0 0
        %684 = vmatpush1.bf16.msra.mxu0 0
        %685 = vmatprep.subr.bf16.mxu0 0
        %686 = vmatpush1.bf16.msra.mxu0 0
        %687 = vmatprep.subr.bf16.mxu0 0
        %688 = vmatpush1.bf16.msra.mxu0 0
        %689 = vmatprep.subr.bf16.mxu0 0
        %690 = vmatpush1.bf16.msra.mxu0 0
        %691 = vmatprep.subr.bf16.mxu0 0
        %692 = vmatpush1.bf16.msra.mxu0 0
        %693 = vmatprep.subr.bf16.mxu0 0
        %694 = vmatpush1.bf16.msra.mxu0 0
        %695 = vmatprep.subr.bf16.mxu0 0
        %696 = vmatpush1.bf16.msra.mxu0 0
        %697 = vmatprep.subr.bf16.mxu0 0
        %698 = vmatpush1.bf16.msra.mxu0 0
        %699 = vmatprep.subr.bf16.mxu0 0
        %700 = vmatpush1.bf16.msra.mxu0 0
        %701 = vmatprep.subr.bf16.mxu0 0
        %702 = vmatpush1.bf16.msra.mxu0 0
        %703 = vmatprep.subr.bf16.mxu0 0
        %704 = vmatpush1.bf16.msra.mxu0 0
        %705 = vmatprep.subr.bf16.mxu0 0
        %706 = vmatpush1.bf16.msra.mxu0 0
        %707 = vmatprep.subr.bf16.mxu0 0
        %708 = vmatpush1.bf16.msra.mxu0 0
        %709 = vmatprep.subr.bf16.mxu0 0
        %710 = vmatpush1.bf16.msra.mxu0 0
        %711 = vmatprep.subr.bf16.mxu0 0
        %712 = vmatpush1.bf16.msra.mxu0 0
        %713 = vmatprep.mubr.bf16.mxu0 0
        %714 = vmatmul.mubr.bf16.gmra.mrb[0].mxu0 %v661
        %v715 = vpop.f32.mrb[0].mxu0
        %v716 = vadd.f32 0.0, %v715
        %v717 = vpop.f32.mrb[0].mxu0
        %v718 = vpop.f32.mrb[0].mxu0
        %v719 = vadd.f32 0.0, %v718
        %v720 = vpop.f32.mrb[0].mxu0
        %721 = vmatprep.mubr.bf16.mxu0 0
        %722 = vmatmul.mubr.bf16.gmra.mrb[0].mxu0 %v664
        %v723 = vpop.f32.mrb[0].mxu0
        %v724 = vadd.f32 0.0, %v723
        %v725 = vpop.f32.mrb[0].mxu0
        %v726 = vpop.f32.mrb[0].mxu0
        %v727 = vadd.f32 0.0, %v726
        %v728 = vpop.f32.mrb[0].mxu0
        %729 = vmatprep.mubr.bf16.mxu0 0
        %730 = vmatmul.mubr.bf16.gmra.mrb[0].mxu0 %v667
        %v731 = vpop.f32.mrb[0].mxu0
        %v732 = vadd.f32 0.0, %v731
        %v733 = vpop.f32.mrb[0].mxu0
        %v734 = vpop.f32.mrb[0].mxu0
        %v735 = vadd.f32 0.0, %v734
        %v736 = vpop.f32.mrb[0].mxu0
        %737 = vmatprep.mubr.bf16.mxu0 0
        %738 = vmatmul.mubr.bf16.gmra.mrb[0].mxu0 %v670
        %v739 = vpop.f32.mrb[0].mxu0
        %v740 = vadd.f32 0.0, %v739
        %v741 = vpop.f32.mrb[0].mxu0
        %v742 = vpop.f32.mrb[0].mxu0
        %v743 = vadd.f32 0.0, %v742
        %v744 = vpop.f32.mrb[0].mxu0
        %745 = vmatprep.mubr.bf16.mxu0 0
        %746 = vmatmul.mubr.bf16.gmra.mrb[0].mxu0 %v673
        %v747 = vpop.f32.mrb[0].mxu0
        %v748 = vadd.f32 0.0, %v747
        %v749 = vpop.f32.mrb[0].mxu0
        %v750 = vpop.f32.mrb[0].mxu0
        %v751 = vadd.f32 0.0, %v750
        %v752 = vpop.f32.mrb[0].mxu0
        %753 = vmatprep.mubr.bf16.mxu0 0
        %754 = vmatmul.mubr.bf16.gmra.mrb[0].mxu0 %v676
        %v755 = vpop.f32.mrb[0].mxu0
        %v756 = vadd.f32 0.0, %v755
        %v757 = vpop.f32.mrb[0].mxu0
        %v758 = vpop.f32.mrb[0].mxu0
        %v759 = vadd.f32 0.0, %v758
        %v760 = vpop.f32.mrb[0].mxu0
        %761 = vmatprep.mubr.bf16.mxu0 0
        %762 = vmatmul.mubr.bf16.gmra.mrb[0].mxu0 %v679
        %v763 = vpop.f32.mrb[0].mxu0
        %v764 = vadd.f32 0.0, %v763
        %v765 = vpop.f32.mrb[0].mxu0
        %v766 = vpop.f32.mrb[0].mxu0
        %v767 = vadd.f32 0.0, %v766
        %v768 = vpop.f32.mrb[0].mxu0
        %769 = vdwg.mxu0
        %v770 = vmax.f32 %v556, %v716
        %v771 = vmax.f32 %v559, %v719
        %v772 = vmax.f32 %v564, %v724
        %v773 = vmax.f32 %v567, %v727
        %v774 = vmax.f32 %v572, %v732
        %v775 = vmax.f32 %v575, %v735
        %v776 = vmax.f32 %v580, %v740
        %v777 = vmax.f32 %v583, %v743
        %v778 = vmax.f32 %v588, %v748
        %v779 = vmax.f32 %v591, %v751
        %v780 = vmax.f32 %v596, %v756
        %v781 = vmax.f32 %v599, %v759
        %v782 = vmax.f32 %v604, %v764
        %v783 = vmax.f32 %v607, %v767
        %s784 = scalar_lea.vmem %s407, 112 [#allocation2]
        %v785 = vld [vmem:[%s784] sm:$0xf]
        %v786 = vld [vmem:[%s784 + $0x4] sm:$0xf]
        %v787 = vld [vmem:[%s784 + $0x8] sm:$0xf]
        %v788 = vld [vmem:[%s784 + $0xc] sm:$0xf]
        %v789 = vld [vmem:[%s784 + $0x10] sm:$0xf]
        %v790 = vld [vmem:[%s784 + $0x14] sm:$0xf]
        %v791 = vld [vmem:[%s784 + $0x18] sm:$0xf]
        %v792 = vld [vmem:[%s784 + $0x1c] sm:$0xf]
        %v793 = vld [vmem:[%s784 + $0x20] sm:$0xf]
        %v794 = vld [vmem:[%s784 + $0x24] sm:$0xf]
        %v795 = vld [vmem:[%s784 + $0x28] sm:$0xf]
        %v796 = vld [vmem:[%s784 + $0x2c] sm:$0xf]
        %v797 = vld [vmem:[%s784 + $0x30] sm:$0xf]
        %v798 = vld [vmem:[%s784 + $0x34] sm:$0xf]
        %v813 = vunpack.c.l.b16 %v785
        %v814 = vunpack.c.l.b16 %v786
        %v815 = vunpack.c.l.b16 %v787
        %v816 = vunpack.c.l.b16 %v788
        %v817 = vunpack.c.l.b16 %v789
        %v818 = vunpack.c.l.b16 %v790
        %v819 = vunpack.c.l.b16 %v791
        %v820 = vunpack.c.l.b16 %v792
        %v821 = vunpack.c.l.b16 %v793
        %v822 = vunpack.c.l.b16 %v794
        %v823 = vunpack.c.l.b16 %v795
        %v824 = vunpack.c.l.b16 %v796
        %v825 = vunpack.c.l.b16 %v797
        %v826 = vunpack.c.l.b16 %v798
        %v827 = vpack.c.b16 %v814, %v813
        %v828 = vpack.c.b16 %v816, %v815
        %v829 = vpack.c.b16 %v818, %v817
        %v830 = vpack.c.b16 %v820, %v819
        %v831 = vpack.c.b16 %v822, %v821
        %v832 = vpack.c.b16 %v824, %v823
        %v833 = vpack.c.b16 %v826, %v825
        %v835 = vsel %vm492, %v827, 0
        %v838 = vsel %vm492, %v828, 0
        %v841 = vsel %vm492, %v829, 0
        %v844 = vsel %vm492, %v830, 0
        %v847 = vsel %vm492, %v831, 0
        %v850 = vsel %vm492, %v832, 0
        %v853 = vsel %vm492, %v833, 0
        %855 = vmatprep.subr.bf16.mxu0 0
        %856 = vmatpush1.bf16.msra.mxu0 %v519
        %857 = vmatprep.subr.bf16.mxu0 0
        %858 = vmatpush1.bf16.msra.mxu0 0
        %859 = vmatprep.subr.bf16.mxu0 0
        %860 = vmatpush1.bf16.msra.mxu0 0
        %861 = vmatprep.subr.bf16.mxu0 0
        %862 = vmatpush1.bf16.msra.mxu0 0
        %863 = vmatprep.subr.bf16.mxu0 0
        %864 = vmatpush1.bf16.msra.mxu0 0
        %865 = vmatprep.subr.bf16.mxu0 0
        %866 = vmatpush1.bf16.msra.mxu0 0
        %867 = vmatprep.subr.bf16.mxu0 0
        %868 = vmatpush1.bf16.msra.mxu0 0
        %869 = vmatprep.subr.bf16.mxu0 0
        %870 = vmatpush1.bf16.msra.mxu0 0
        %871 = vmatprep.subr.bf16.mxu0 0
        %872 = vmatpush1.bf16.msra.mxu0 0
        %873 = vmatprep.subr.bf16.mxu0 0
        %874 = vmatpush1.bf16.msra.mxu0 0
        %875 = vmatprep.subr.bf16.mxu0 0
        %876 = vmatpush1.bf16.msra.mxu0 0
        %877 = vmatprep.subr.bf16.mxu0 0
        %878 = vmatpush1.bf16.msra.mxu0 0
        %879 = vmatprep.subr.bf16.mxu0 0
        %880 = vmatpush1.bf16.msra.mxu0 0
        %881 = vmatprep.subr.bf16.mxu0 0
        %882 = vmatpush1.bf16.msra.mxu0 0
        %883 = vmatprep.subr.bf16.mxu0 0
        %884 = vmatpush1.bf16.msra.mxu0 0
        %885 = vmatprep.subr.bf16.mxu0 0
        %886 = vmatpush1.bf16.msra.mxu0 0
        %887 = vmatprep.mubr.bf16.mxu0 0
        %888 = vmatmul.mubr.bf16.gmra.mrb[0].mxu0 %v835
        %v889 = vpop.f32.mrb[0].mxu0
        %v890 = vadd.f32 0.0, %v889
        %v891 = vpop.f32.mrb[0].mxu0
        %v892 = vpop.f32.mrb[0].mxu0
        %v893 = vadd.f32 0.0, %v892
        %v894 = vpop.f32.mrb[0].mxu0
        %895 = vmatprep.mubr.bf16.mxu0 0
        %896 = vmatmul.mubr.bf16.gmra.mrb[0].mxu0 %v838
        %v897 = vpop.f32.mrb[0].mxu0
        %v898 = vadd.f32 0.0, %v897
        %v899 = vpop.f32.mrb[0].mxu0
        %v900 = vpop.f32.mrb[0].mxu0
        %v901 = vadd.f32 0.0, %v900
        %v902 = vpop.f32.mrb[0].mxu0
        %903 = vmatprep.mubr.bf16.mxu0 0
        %904 = vmatmul.mubr.bf16.gmra.mrb[0].mxu0 %v841
        %v905 = vpop.f32.mrb[0].mxu0
        %v906 = vadd.f32 0.0, %v905
        %v907 = vpop.f32.mrb[0].mxu0
        %v908 = vpop.f32.mrb[0].mxu0
        %v909 = vadd.f32 0.0, %v908
        %v910 = vpop.f32.mrb[0].mxu0
        %911 = vmatprep.mubr.bf16.mxu0 0
        %912 = vmatmul.mubr.bf16.gmra.mrb[0].mxu0 %v844
        %v913 = vpop.f32.mrb[0].mxu0
        %v914 = vadd.f32 0.0, %v913
        %v915 = vpop.f32.mrb[0].mxu0
        %v916 = vpop.f32.mrb[0].mxu0
        %v917 = vadd.f32 0.0, %v916
        %v918 = vpop.f32.mrb[0].mxu0
        %919 = vmatprep.mubr.bf16.mxu0 0
        %920 = vmatmul.mubr.bf16.gmra.mrb[0].mxu0 %v847
        %v921 = vpop.f32.mrb[0].mxu0
        %v922 = vadd.f32 0.0, %v921
        %v923 = vpop.f32.mrb[0].mxu0
        %v924 = vpop.f32.mrb[0].mxu0
        %v925 = vadd.f32 0.0, %v924
        %v926 = vpop.f32.mrb[0].mxu0
        %927 = vmatprep.mubr.bf16.mxu0 0
        %928 = vmatmul.mubr.bf16.gmra.mrb[0].mxu0 %v850
        %v929 = vpop.f32.mrb[0].mxu0
        %v930 = vadd.f32 0.0, %v929
        %v931 = vpop.f32.mrb[0].mxu0
        %v932 = vpop.f32.mrb[0].mxu0
        %v933 = vadd.f32 0.0, %v932
        %v934 = vpop.f32.mrb[0].mxu0
        %935 = vmatprep.mubr.bf16.mxu0 0
        %936 = vmatmul.mubr.bf16.gmra.mrb[0].mxu0 %v853
        %v937 = vpop.f32.mrb[0].mxu0
        %v938 = vadd.f32 0.0, %v937
        %v939 = vpop.f32.mrb[0].mxu0
        %v940 = vpop.f32.mrb[0].mxu0
        %v941 = vadd.f32 0.0, %v940
        %v942 = vpop.f32.mrb[0].mxu0
        %943 = vdwg.mxu0
        %v944 = vmax.f32 %v770, %v890
        %v945 = vmax.f32 %v771, %v893
        %v946 = vmax.f32 %v772, %v898
        %v947 = vmax.f32 %v773, %v901
        %v948 = vmax.f32 %v774, %v906
        %v949 = vmax.f32 %v775, %v909
        %v950 = vmax.f32 %v776, %v914
        %v951 = vmax.f32 %v777, %v917
        %v952 = vmax.f32 %v778, %v922
        %v953 = vmax.f32 %v779, %v925
        %v954 = vmax.f32 %v780, %v930
        %v955 = vmax.f32 %v781, %v933
        %v956 = vmax.f32 %v782, %v938
        %v957 = vmax.f32 %v783, %v941
        %s958 = scalar_lea.vmem %s407, 168 [#allocation2]
        %v959 = vld [vmem:[%s958] sm:$0xf]
        %v960 = vld [vmem:[%s958 + $0x4] sm:$0xf]
        %v961 = vld [vmem:[%s958 + $0x8] sm:$0xf]
        %v962 = vld [vmem:[%s958 + $0xc] sm:$0xf]
        %v963 = vld [vmem:[%s958 + $0x10] sm:$0xf]
        %v964 = vld [vmem:[%s958 + $0x14] sm:$0xf]
        %v965 = vld [vmem:[%s958 + $0x18] sm:$0xf]
        %v966 = vld [vmem:[%s958 + $0x1c] sm:$0xf]
        %v967 = vld [vmem:[%s958 + $0x20] sm:$0xf]
        %v968 = vld [vmem:[%s958 + $0x24] sm:$0xf]
        %v969 = vld [vmem:[%s958 + $0x28] sm:$0xf]
        %v970 = vld [vmem:[%s958 + $0x2c] sm:$0xf]
        %v971 = vld [vmem:[%s958 + $0x30] sm:$0xf]
        %v972 = vld [vmem:[%s958 + $0x34] sm:$0xf]
        %v987 = vunpack.c.l.b16 %v959
        %v988 = vunpack.c.l.b16 %v960
        %v989 = vunpack.c.l.b16 %v961
        %v990 = vunpack.c.l.b16 %v962
        %v991 = vunpack.c.l.b16 %v963
        %v992 = vunpack.c.l.b16 %v964
        %v993 = vunpack.c.l.b16 %v965
        %v994 = vunpack.c.l.b16 %v966
        %v995 = vunpack.c.l.b16 %v967
        %v996 = vunpack.c.l.b16 %v968
        %v997 = vunpack.c.l.b16 %v969
        %v998 = vunpack.c.l.b16 %v970
        %v999 = vunpack.c.l.b16 %v971
        %v1000 = vunpack.c.l.b16 %v972
        %v1001 = vpack.c.b16 %v988, %v987
        %v1002 = vpack.c.b16 %v990, %v989
        %v1003 = vpack.c.b16 %v992, %v991
        %v1004 = vpack.c.b16 %v994, %v993
        %v1005 = vpack.c.b16 %v996, %v995
        %v1006 = vpack.c.b16 %v998, %v997
        %v1007 = vpack.c.b16 %v1000, %v999
        %v1009 = vsel %vm492, %v1001, 0
        %v1012 = vsel %vm492, %v1002, 0
        %v1015 = vsel %vm492, %v1003, 0
        %v1018 = vsel %vm492, %v1004, 0
        %v1021 = vsel %vm492, %v1005, 0
        %v1024 = vsel %vm492, %v1006, 0
        %v1027 = vsel %vm492, %v1007, 0
        %1029 = vmatprep.subr.bf16.mxu0 0
        %1030 = vmatpush1.bf16.msra.mxu0 %v519
        %1031 = vmatprep.subr.bf16.mxu0 0
        %1032 = vmatpush1.bf16.msra.mxu0 0
        %1033 = vmatprep.subr.bf16.mxu0 0
        %1034 = vmatpush1.bf16.msra.mxu0 0
        %1035 = vmatprep.subr.bf16.mxu0 0
        %1036 = vmatpush1.bf16.msra.mxu0 0
        %1037 = vmatprep.subr.bf16.mxu0 0
        %1038 = vmatpush1.bf16.msra.mxu0 0
        %1039 = vmatprep.subr.bf16.mxu0 0
        %1040 = vmatpush1.bf16.msra.mxu0 0
        %1041 = vmatprep.subr.bf16.mxu0 0
        %1042 = vmatpush1.bf16.msra.mxu0 0
        %1043 = vmatprep.subr.bf16.mxu0 0
        %1044 = vmatpush1.bf16.msra.mxu0 0
        %1045 = vmatprep.subr.bf16.mxu0 0
        %1046 = vmatpush1.bf16.msra.mxu0 0
        %1047 = vmatprep.subr.bf16.mxu0 0
        %1048 = vmatpush1.bf16.msra.mxu0 0
        %1049 = vmatprep.subr.bf16.mxu0 0
        %1050 = vmatpush1.bf16.msra.mxu0 0
        %1051 = vmatprep.subr.bf16.mxu0 0
        %1052 = vmatpush1.bf16.msra.mxu0 0
        %1053 = vmatprep.subr.bf16.mxu0 0
        %1054 = vmatpush1.bf16.msra.mxu0 0
        %1055 = vmatprep.subr.bf16.mxu0 0
        %1056 = vmatpush1.bf16.msra.mxu0 0
        %1057 = vmatprep.subr.bf16.mxu0 0
        %1058 = vmatpush1.bf16.msra.mxu0 0
        %1059 = vmatprep.subr.bf16.mxu0 0
        %1060 = vmatpush1.bf16.msra.mxu0 0
        %1061 = vmatprep.mubr.bf16.mxu0 0
        %1062 = vmatmul.mubr.bf16.gmra.mrb[0].mxu0 %v1009
        %v1063 = vpop.f32.mrb[0].mxu0
        %v1064 = vadd.f32 0.0, %v1063
        %v1065 = vpop.f32.mrb[0].mxu0
        %v1066 = vpop.f32.mrb[0].mxu0
        %v1067 = vadd.f32 0.0, %v1066
        %v1068 = vpop.f32.mrb[0].mxu0
        %1069 = vmatprep.mubr.bf16.mxu0 0
        %1070 = vmatmul.mubr.bf16.gmra.mrb[0].mxu0 %v1012
        %v1071 = vpop.f32.mrb[0].mxu0
        %v1072 = vadd.f32 0.0, %v1071
        %v1073 = vpop.f32.mrb[0].mxu0
        %v1074 = vpop.f32.mrb[0].mxu0
        %v1075 = vadd.f32 0.0, %v1074
        %v1076 = vpop.f32.mrb[0].mxu0
        %1077 = vmatprep.mubr.bf16.mxu0 0
        %1078 = vmatmul.mubr.bf16.gmra.mrb[0].mxu0 %v1015
        %v1079 = vpop.f32.mrb[0].mxu0
        %v1080 = vadd.f32 0.0, %v1079
        %v1081 = vpop.f32.mrb[0].mxu0
        %v1082 = vpop.f32.mrb[0].mxu0
        %v1083 = vadd.f32 0.0, %v1082
        %v1084 = vpop.f32.mrb[0].mxu0
        %1085 = vmatprep.mubr.bf16.mxu0 0
        %1086 = vmatmul.mubr.bf16.gmra.mrb[0].mxu0 %v1018
        %v1087 = vpop.f32.mrb[0].mxu0
        %v1088 = vadd.f32 0.0, %v1087
        %v1089 = vpop.f32.mrb[0].mxu0
        %v1090 = vpop.f32.mrb[0].mxu0
        %v1091 = vadd.f32 0.0, %v1090
        %v1092 = vpop.f32.mrb[0].mxu0
        %1093 = vmatprep.mubr.bf16.mxu0 0
        %1094 = vmatmul.mubr.bf16.gmra.mrb[0].mxu0 %v1021
        %v1095 = vpop.f32.mrb[0].mxu0
        %v1096 = vadd.f32 0.0, %v1095
        %v1097 = vpop.f32.mrb[0].mxu0
        %v1098 = vpop.f32.mrb[0].mxu0
        %v1099 = vadd.f32 0.0, %v1098
        %v1100 = vpop.f32.mrb[0].mxu0
        %1101 = vmatprep.mubr.bf16.mxu0 0
        %1102 = vmatmul.mubr.bf16.gmra.mrb[0].mxu0 %v1024
        %v1103 = vpop.f32.mrb[0].mxu0
        %v1104 = vadd.f32 0.0, %v1103
        %v1105 = vpop.f32.mrb[0].mxu0
        %v1106 = vpop.f32.mrb[0].mxu0
        %v1107 = vadd.f32 0.0, %v1106
        %v1108 = vpop.f32.mrb[0].mxu0
        %1109 = vmatprep.mubr.bf16.mxu0 0
        %1110 = vmatmul.mubr.bf16.gmra.mrb[0].mxu0 %v1027
        %v1111 = vpop.f32.mrb[0].mxu0
        %v1112 = vadd.f32 0.0, %v1111
        %v1113 = vpop.f32.mrb[0].mxu0
        %v1114 = vpop.f32.mrb[0].mxu0
        %v1115 = vadd.f32 0.0, %v1114
        %v1116 = vpop.f32.mrb[0].mxu0
        %1117 = vdwg.mxu0
        %v1118 = vmax.f32 %v944, %v1064
        %v1119 = vmax.f32 %v945, %v1067
        %v1120 = vmax.f32 %v946, %v1072
        %v1121 = vmax.f32 %v947, %v1075
        %v1122 = vmax.f32 %v948, %v1080
        %v1123 = vmax.f32 %v949, %v1083
        %v1124 = vmax.f32 %v950, %v1088
        %v1125 = vmax.f32 %v951, %v1091
        %v1126 = vmax.f32 %v952, %v1096
        %v1127 = vmax.f32 %v953, %v1099
        %v1128 = vmax.f32 %v954, %v1104
        %v1129 = vmax.f32 %v955, %v1107
        %v1130 = vmax.f32 %v956, %v1112
        %v1131 = vmax.f32 %v957, %v1115
        %v1132 = vld [vmem:[%s2] sm:$0x1]
        %v1134 = vlaneseq
        %v1135 = vshrl.u32 %v1134, 7
        %v1136 = vsub.s32 0, %v1135
        %v1137 = vrot.slane %v1132, %v1136
        %v1139 = vadd.f32 %v1118, %v1137
        %v1140 = vadd.f32 %v1119, %v1137
        %v1141 = vadd.f32 %v1120, %v1137
        %v1142 = vadd.f32 %v1121, %v1137
        %v1143 = vadd.f32 %v1122, %v1137
        %v1144 = vadd.f32 %v1123, %v1137
        %v1145 = vadd.f32 %v1124, %v1137
        %v1146 = vadd.f32 %v1125, %v1137
        %v1147 = vadd.f32 %v1126, %v1137
        %v1148 = vadd.f32 %v1127, %v1137
        %v1149 = vadd.f32 %v1128, %v1137
        %v1150 = vadd.f32 %v1129, %v1137
        %v1151 = vadd.f32 %v1130, %v1137
        %v1152 = vadd.f32 %v1131, %v1137
        %v1153 = vmax.f32 %v1139, 0.0
        %v1154 = vmax.f32 %v1140, 0.0
        %v1155 = vmax.f32 %v1141, 0.0
        %v1156 = vmax.f32 %v1142, 0.0
        %v1157 = vmax.f32 %v1143, 0.0
        %v1158 = vmax.f32 %v1144, 0.0
        %v1159 = vmax.f32 %v1145, 0.0
        %v1160 = vmax.f32 %v1146, 0.0
        %v1161 = vmax.f32 %v1147, 0.0
        %v1162 = vmax.f32 %v1148, 0.0
        %v1163 = vmax.f32 %v1149, 0.0
        %v1164 = vmax.f32 %v1150, 0.0
        %v1165 = vmax.f32 %v1151, 0.0
        %v1166 = vmax.f32 %v1152, 0.0
        %v1167 = vpack.c.bf16 %v1154, %v1153
        %v1168 = vpack.c.bf16 %v1156, %v1155
        %v1169 = vpack.c.bf16 %v1158, %v1157
        %v1170 = vpack.c.bf16 %v1160, %v1159
        %v1171 = vpack.c.bf16 %v1162, %v1161
        %v1172 = vpack.c.bf16 %v1164, %v1163
        %v1173 = vpack.c.bf16 %v1166, %v1165
        %v1181 = vunpack.c.l.b16 %v1167
        %v1182 = vunpack.c.h.b16 %v1167
        %v1183 = vunpack.c.l.b16 %v1168
        %v1184 = vunpack.c.h.b16 %v1168
        %v1185 = vunpack.c.l.b16 %v1169
        %v1186 = vunpack.c.h.b16 %v1169
        %v1187 = vunpack.c.l.b16 %v1170
        %v1188 = vunpack.c.h.b16 %v1170
        %v1189 = vunpack.c.l.b16 %v1171
        %v1190 = vunpack.c.h.b16 %v1171
        %v1191 = vunpack.c.l.b16 %v1172
        %v1192 = vunpack.c.h.b16 %v1172
        %v1193 = vunpack.c.l.b16 %v1173
        %v1194 = vunpack.c.h.b16 %v1173
        %v1195 = vpack.c.b16 %v1181, %v1181
        %v1196 = vpack.c.b16 %v1182, %v1182
        %v1197 = vpack.c.b16 %v1183, %v1183
        %v1198 = vpack.c.b16 %v1184, %v1184
        %v1199 = vpack.c.b16 %v1185, %v1185
        %v1200 = vpack.c.b16 %v1186, %v1186
        %v1201 = vpack.c.b16 %v1187, %v1187
        %v1202 = vpack.c.b16 %v1188, %v1188
        %v1203 = vpack.c.b16 %v1189, %v1189
        %v1204 = vpack.c.b16 %v1190, %v1190
        %v1205 = vpack.c.b16 %v1191, %v1191
        %v1206 = vpack.c.b16 %v1192, %v1192
        %v1207 = vpack.c.b16 %v1193, %v1193
        %v1208 = vpack.c.b16 %v1194, %v1194
        %vm1223 = vcmask 257024
        %1224 = vst.msk [vmem:[%s433] sm:$0xf] %vm1223, %v1195
        %1225 = vst.msk [vmem:[%s433 + $0x4] sm:$0xf] %vm1223, %v1196
        %1226 = vst.msk [vmem:[%s433 + $0x8] sm:$0xf] %vm1223, %v1197
        %1227 = vst.msk [vmem:[%s433 + $0xc] sm:$0xf] %vm1223, %v1198
        %1228 = vst.msk [vmem:[%s433 + $0x10] sm:$0xf] %vm1223, %v1199
        %1229 = vst.msk [vmem:[%s433 + $0x14] sm:$0xf] %vm1223, %v1200
        %1230 = vst.msk [vmem:[%s433 + $0x18] sm:$0xf] %vm1223, %v1201
        %1231 = vst.msk [vmem:[%s433 + $0x1c] sm:$0xf] %vm1223, %v1202
        %1232 = vst.msk [vmem:[%s433 + $0x20] sm:$0xf] %vm1223, %v1203
        %1233 = vst.msk [vmem:[%s433 + $0x24] sm:$0xf] %vm1223, %v1204
        %1234 = vst.msk [vmem:[%s433 + $0x28] sm:$0xf] %vm1223, %v1205
        %1235 = vst.msk [vmem:[%s433 + $0x2c] sm:$0xf] %vm1223, %v1206
        %1236 = vst.msk [vmem:[%s433 + $0x30] sm:$0xf] %vm1223, %v1207
        %1237 = vst.msk [vmem:[%s433 + $0x34] sm:$0xf] %vm1223, %v1208
        %s1238 = smul.u32 14, %s14
        %p1239 = scmp.lt.s32.totalorder %s1238, 97
        %s1240 = scalar_select %p1239, %s1238, 97
        %s1241 = smul.addr %s1240, 4
        %s1242 = scalar_lea.vmem %s3, %s1241
        // Predicated region
        $region74: #{_lambda_.4} parent=68 // pred_check
          %p1243 = pneg %p100
        $region75: #{_lambda_.4} parent=68 // pred_check_branch
          %1245 = sbr.rel (%p1243) target = $region77
        $region76: #{_lambda_.4} parent=68 // pred_region
          %s1246 = smul.u32 14, %s14
        $region77: #{_lambda_.4} parent=68 // pred_fallthru
          _
      $region69: #{_lambda_.4} parent=5 // pred_fallthru
        _
      %p1247 = scmp.le.s32.totalorder 2, %s9
      // Predicated region
      $region78: #{_lambda_.4} parent=5 // pred_check
        %p1248 = pneg %p1247
      $region79: #{_lambda_.4} parent=5 // pred_check_branch
        %1250 = sbr.rel (%p1248) target = $region81
      $region80: #{_lambda_.4} parent=5 // pred_region
        %s1251 = ssub.s32 %s9, 2
        // Predicated region
        $region82: #{_lambda_.4} parent=80 // pred_check
          %p1252 = pneg %p106
        $region83: #{_lambda_.4} parent=80 // pred_check_branch
          %1254 = sbr.rel (%p1252) target = $region85
        $region84: #{_lambda_.4} parent=80 // pred_region
          %s1255 = smul.u32 14, %s15
          %p1256 = scmp.lt.s32.totalorder %s1255, 97
          %s1257 = scalar_select %p1256, %s1255, 97
          %s1258 = smul.addr %s1257, 4
          %s1259 = scalar_lea.vmem %s3, %s1258
        $region85: #{_lambda_.4} parent=80 // pred_fallthru
          _
      $region81: #{_lambda_.4} parent=5 // pred_fallthru
        _
    $region6: #{_lambda_.4} parent=1 // loop_footer
      %s13 = sadd.s32 1, %s9
    $region7: #{_lambda_.4} parent=1 // loop_footer_branch
      %8 = sbr.rel target = $region3
    $region8: #{_lambda_.4} parent=1 // loop_exit
      _

// kernel: _lambda_.5
$region0: #{_lambda_.5}
  #allocation0 [shape = 'u32[]', space=smem, size = 0x4, offset = 0x4, fixed_abs, tag = 'smem constant byte address 0x4 - core index']
  #allocation1 [shape = 'u32[144,128]{1,0:T(1,128)}', space=vmem, size = 0x12000, scoped, tag = 'internal scratch']
  %s0 = inlined_call_operand.vmem [shape: bf16[4,196,288], index: 0, kind: input, shape index: {}]
  %s1 = inlined_call_operand.vmem [shape: bf16[288,64], index: 1, kind: input, shape index: {}]
  %s2 = inlined_call_operand.vmem [shape: f32[1,64], index: 2, kind: input, shape index: {}]
  %s3 = inlined_call_operand.vmem [shape: bf16[196,64], index: 3, kind: output, shape index: {}]
  %s4 = sld [smem:[#allocation0]]
  $region22: #{_lambda_.5} parent=0
    _
  %s6 = ssub.s32 1, %s4
  %s7 = scalar_select 0, %s6, %s4
  // Predicated region
  $region2: #{_lambda_.5} parent=0 // pred_check
    _
  $region3: #{_lambda_.5} parent=0 // pred_check_branch
    %9 = sbr.rel (0) target = $region5
  $region4: #{_lambda_.5} parent=0 // pred_region
    _
  $region5: #{_lambda_.5} parent=0 // pred_fallthru
    _
  // Predicated region
  $region6: #{_lambda_.5} parent=0 // pred_check
    _
  $region7: #{_lambda_.5} parent=0 // pred_check_branch
    %11 = sbr.rel (0) target = $region9
  $region8: #{_lambda_.5} parent=0 // pred_region
    _
  $region9: #{_lambda_.5} parent=0 // pred_fallthru
    _
  // Predicated region
  $region10: #{_lambda_.5} parent=0 // pred_check
    _
  $region11: #{_lambda_.5} parent=0 // pred_check_branch
    %13 = sbr.rel (0) target = $region13
  $region12: #{_lambda_.5} parent=0 // pred_region
    _
  $region13: #{_lambda_.5} parent=0 // pred_fallthru
    _
  %v15 = vld [vmem:[%s1] sm:$0xf]
  %v16 = vld [vmem:[%s1 + $0x4] sm:$0xf]
  %v17 = vld [vmem:[%s1 + $0x8] sm:$0xf]
  %v18 = vld [vmem:[%s1 + $0xc] sm:$0xf]
  %v19 = vld [vmem:[%s1 + $0x10] sm:$0xf]
  %v20 = vld [vmem:[%s1 + $0x14] sm:$0xf]
  %v21 = vld [vmem:[%s1 + $0x18] sm:$0xf]
  %v22 = vld [vmem:[%s1 + $0x1c] sm:$0xf]
  %v23 = vld [vmem:[%s1 + $0x20] sm:$0xf]
  %v24 = vld [vmem:[%s1 + $0x24] sm:$0xf]
  %v25 = vld [vmem:[%s1 + $0x28] sm:$0xf]
  %v26 = vld [vmem:[%s1 + $0x2c] sm:$0xf]
  %v27 = vld [vmem:[%s1 + $0x30] sm:$0xf]
  %v28 = vld [vmem:[%s1 + $0x34] sm:$0xf]
  %v29 = vld [vmem:[%s1 + $0x38] sm:$0xf]
  %v30 = vld [vmem:[%s1 + $0x3c] sm:$0xf]
  %v31 = vld [vmem:[%s1 + $0x40] sm:$0xf]
  %v32 = vld [vmem:[%s1 + $0x44] sm:$0xf]
  %v33 = vld [vmem:[%s1 + $0x48] sm:$0xf]
  %v34 = vld [vmem:[%s1 + $0x4c] sm:$0xf]
  %v35 = vld [vmem:[%s1 + $0x50] sm:$0xf]
  %v36 = vld [vmem:[%s1 + $0x54] sm:$0xf]
  %v37 = vld [vmem:[%s1 + $0x58] sm:$0xf]
  %v38 = vld [vmem:[%s1 + $0x5c] sm:$0xf]
  %v39 = vld [vmem:[%s1 + $0x60] sm:$0xf]
  %v40 = vld [vmem:[%s1 + $0x64] sm:$0xf]
  %v41 = vld [vmem:[%s1 + $0x68] sm:$0xf]
  %v42 = vld [vmem:[%s1 + $0x6c] sm:$0xf]
  %v43 = vld [vmem:[%s1 + $0x70] sm:$0xf]
  %v44 = vld [vmem:[%s1 + $0x74] sm:$0xf]
  %v45 = vld [vmem:[%s1 + $0x78] sm:$0xf]
  %v46 = vld [vmem:[%s1 + $0x7c] sm:$0xf]
  %v47 = vld [vmem:[%s1 + $0x80] sm:$0xf]
  %v48 = vld [vmem:[%s1 + $0x84] sm:$0xf]
  %v49 = vld [vmem:[%s1 + $0x88] sm:$0xf]
  %v50 = vld [vmem:[%s1 + $0x8c] sm:$0xf]
  %v51 = vld [vmem:[%s0] sm:$0xff]
  %v52 = vld [vmem:[%s0 + $0x8] sm:$0xf]
  %v53 = vld [vmem:[%s0 + $0xc] sm:$0xff]
  %v54 = vld [vmem:[%s0 + $0x14] sm:$0xf]
  %v55 = vld [vmem:[%s0 + $0x18] sm:$0xff]
  %v56 = vld [vmem:[%s0 + $0x20] sm:$0xf]
  %v57 = vld [vmem:[%s0 + $0x24] sm:$0xff]
  %v58 = vld [vmem:[%s0 + $0x2c] sm:$0xf]
  %v59 = vld [vmem:[%s0 + $0x30] sm:$0xff]
  %v60 = vld [vmem:[%s0 + $0x38] sm:$0xf]
  %v61 = vld [vmem:[%s0 + $0x3c] sm:$0xff]
  %v62 = vld [vmem:[%s0 + $0x44] sm:$0xf]
  %v63 = vld [vmem:[%s0 + $0x48] sm:$0xff]
  %v64 = vld [vmem:[%s0 + $0x50] sm:$0xf]
  %v65 = vld [vmem:[%s0 + $0x54] sm:$0xff]
  %v66 = vld [vmem:[%s0 + $0x5c] sm:$0xf]
  %v67 = vld [vmem:[%s0 + $0x60] sm:$0xff]
  %v68 = vld [vmem:[%s0 + $0x68] sm:$0xf]
  %v69 = vld [vmem:[%s0 + $0x6c] sm:$0xff]
  %v70 = vld [vmem:[%s0 + $0x74] sm:$0xf]
  %v71 = vld [vmem:[%s0 + $0x78] sm:$0xff]
  %v72 = vld [vmem:[%s0 + $0x80] sm:$0xf]
  %v73 = vld [vmem:[%s0 + $0x84] sm:$0xff]
  %v74 = vld [vmem:[%s0 + $0x8c] sm:$0xf]
  %v75 = vld [vmem:[%s0 + $0x90] sm:$0xff]
  %v76 = vld [vmem:[%s0 + $0x98] sm:$0xf]
  %v77 = vld [vmem:[%s0 + $0x9c] sm:$0xff]
  %v78 = vld [vmem:[%s0 + $0xa4] sm:$0xf]
  %v79 = vld [vmem:[%s0 + $0xa8] sm:$0xff]
  %v80 = vld [vmem:[%s0 + $0xb0] sm:$0xf]
  %v81 = vld [vmem:[%s0 + $0xb4] sm:$0xff]
  %v82 = vld [vmem:[%s0 + $0xbc] sm:$0xf]
  %v83 = vld [vmem:[%s0 + $0xc0] sm:$0xff]
  %v84 = vld [vmem:[%s0 + $0xc8] sm:$0xf]
  %v85 = vld [vmem:[%s0 + $0xcc] sm:$0xff]
  %v86 = vld [vmem:[%s0 + $0xd4] sm:$0xf]
  %v87 = vld [vmem:[%s0 + $0xd8] sm:$0xff]
  %v88 = vld [vmem:[%s0 + $0xe0] sm:$0xf]
  %v89 = vld [vmem:[%s0 + $0xe4] sm:$0xff]
  %v90 = vld [vmem:[%s0 + $0xec] sm:$0xf]
  %v91 = vld [vmem:[%s0 + $0xf0] sm:$0xff]
  %v92 = vld [vmem:[%s0 + $0xf8] sm:$0xf]
  %v93 = vld [vmem:[%s0 + $0xfc] sm:$0xff]
  %v94 = vld [vmem:[%s0 + $0x104] sm:$0xf]
  %v95 = vld [vmem:[%s0 + $0x108] sm:$0xff]
  %v96 = vld [vmem:[%s0 + $0x110] sm:$0xf]
  %v97 = vld [vmem:[%s0 + $0x114] sm:$0xff]
  %v98 = vld [vmem:[%s0 + $0x11c] sm:$0xf]
  %v99 = vld [vmem:[%s0 + $0x120] sm:$0x33]
  %v100 = vld [vmem:[%s0 + $0x128] sm:$0x3]
  %v151 = vunpack.c.l.b16 %v51
  %v152 = vunpack.c.h.b16 %v51
  %v153 = vunpack.c.l.b16 %v52
  %v154 = vunpack.c.l.b16 %v53
  %v155 = vunpack.c.h.b16 %v53
  %v156 = vunpack.c.l.b16 %v54
  %v157 = vunpack.c.l.b16 %v55
  %v158 = vunpack.c.h.b16 %v55
  %v159 = vunpack.c.l.b16 %v56
  %v160 = vunpack.c.l.b16 %v57
  %v161 = vunpack.c.h.b16 %v57
  %v162 = vunpack.c.l.b16 %v58
  %v163 = vunpack.c.l.b16 %v59
  %v164 = vunpack.c.h.b16 %v59
  %v165 = vunpack.c.l.b16 %v60
  %v166 = vunpack.c.l.b16 %v61
  %v167 = vunpack.c.h.b16 %v61
  %v168 = vunpack.c.l.b16 %v62
  %v169 = vunpack.c.l.b16 %v63
  %v170 = vunpack.c.h.b16 %v63
  %v171 = vunpack.c.l.b16 %v64
  %v172 = vunpack.c.l.b16 %v65
  %v173 = vunpack.c.h.b16 %v65
  %v174 = vunpack.c.l.b16 %v66
  %v175 = vunpack.c.l.b16 %v67
  %v176 = vunpack.c.h.b16 %v67
  %v177 = vunpack.c.l.b16 %v68
  %v178 = vunpack.c.l.b16 %v69
  %v179 = vunpack.c.h.b16 %v69
  %v180 = vunpack.c.l.b16 %v70
  %v181 = vunpack.c.l.b16 %v71
  %v182 = vunpack.c.h.b16 %v71
  %v183 = vunpack.c.l.b16 %v72
  %v184 = vunpack.c.l.b16 %v73
  %v185 = vunpack.c.h.b16 %v73
  %v186 = vunpack.c.l.b16 %v74
  %v187 = vunpack.c.l.b16 %v75
  %v188 = vunpack.c.h.b16 %v75
  %v189 = vunpack.c.l.b16 %v76
  %v190 = vunpack.c.l.b16 %v77
  %v191 = vunpack.c.h.b16 %v77
  %v192 = vunpack.c.l.b16 %v78
  %v193 = vunpack.c.l.b16 %v79
  %v194 = vunpack.c.h.b16 %v79
  %v195 = vunpack.c.l.b16 %v80
  %v196 = vunpack.c.l.b16 %v81
  %v197 = vunpack.c.h.b16 %v81
  %v198 = vunpack.c.l.b16 %v82
  %v199 = vunpack.c.l.b16 %v83
  %v200 = vunpack.c.h.b16 %v83
  %v201 = vunpack.c.l.b16 %v84
  %v202 = vunpack.c.l.b16 %v85
  %v203 = vunpack.c.h.b16 %v85
  %v204 = vunpack.c.l.b16 %v86
  %v205 = vunpack.c.l.b16 %v87
  %v206 = vunpack.c.h.b16 %v87
  %v207 = vunpack.c.l.b16 %v88
  %v208 = vunpack.c.l.b16 %v89
  %v209 = vunpack.c.h.b16 %v89
  %v210 = vunpack.c.l.b16 %v90
  %v211 = vunpack.c.l.b16 %v91
  %v212 = vunpack.c.h.b16 %v91
  %v213 = vunpack.c.l.b16 %v92
  %v214 = vunpack.c.l.b16 %v93
  %v215 = vunpack.c.h.b16 %v93
  %v216 = vunpack.c.l.b16 %v94
  %v217 = vunpack.c.l.b16 %v95
  %v218 = vunpack.c.h.b16 %v95
  %v219 = vunpack.c.l.b16 %v96
  %v220 = vunpack.c.l.b16 %v97
  %v221 = vunpack.c.h.b16 %v97
  %v222 = vunpack.c.l.b16 %v98
  %v223 = vunpack.c.l.b16 %v99
  %v224 = vunpack.c.h.b16 %v99
  %v225 = vunpack.c.l.b16 %v100
  %v226 = vpack.c.b16 %v154, %v151
  %v227 = vpack.c.b16 %v155, %v152
  %v228 = vpack.c.b16 %v156, %v153
  %v229 = vpack.c.b16 %v160, %v157
  %v230 = vpack.c.b16 %v161, %v158
  %v231 = vpack.c.b16 %v162, %v159
  %v232 = vpack.c.b16 %v166, %v163
  %v233 = vpack.c.b16 %v167, %v164
  %v234 = vpack.c.b16 %v168, %v165
  %v235 = vpack.c.b16 %v172, %v169
  %v236 = vpack.c.b16 %v173, %v170
  %v237 = vpack.c.b16 %v174, %v171
  %v238 = vpack.c.b16 %v178, %v175
  %v239 = vpack.c.b16 %v179, %v176
  %v240 = vpack.c.b16 %v180, %v177
  %v241 = vpack.c.b16 %v184, %v181
  %v242 = vpack.c.b16 %v185, %v182
  %v243 = vpack.c.b16 %v186, %v183
  %v244 = vpack.c.b16 %v190, %v187
  %v245 = vpack.c.b16 %v191, %v188
  %v246 = vpack.c.b16 %v192, %v189
  %v247 = vpack.c.b16 %v196, %v193
  %v248 = vpack.c.b16 %v197, %v194
  %v249 = vpack.c.b16 %v198, %v195
  %v250 = vpack.c.b16 %v202, %v199
  %v251 = vpack.c.b16 %v203, %v200
  %v252 = vpack.c.b16 %v204, %v201
  %v253 = vpack.c.b16 %v208, %v205
  %v254 = vpack.c.b16 %v209, %v206
  %v255 = vpack.c.b16 %v210, %v207
  %v256 = vpack.c.b16 %v214, %v211
  %v257 = vpack.c.b16 %v215, %v212
  %v258 = vpack.c.b16 %v216, %v213
  %v259 = vpack.c.b16 %v220, %v217
  %v260 = vpack.c.b16 %v221, %v218
  %v261 = vpack.c.b16 %v222, %v219
  %v262 = vpack.c.b16 %v223, %v223
  %v263 = vpack.c.b16 %v224, %v224
  %v264 = vpack.c.b16 %v225, %v225
  %v327 = vunpack.c.l.b16 %v15
  %v328 = vunpack.c.l.b16 %v16
  %v329 = vunpack.c.l.b16 %v17
  %v330 = vunpack.c.l.b16 %v18
  %v331 = vunpack.c.l.b16 %v19
  %v332 = vunpack.c.l.b16 %v20
  %v333 = vunpack.c.l.b16 %v21
  %v334 = vunpack.c.l.b16 %v22
  %v335 = vunpack.c.l.b16 %v23
  %v336 = vunpack.c.l.b16 %v24
  %v337 = vunpack.c.l.b16 %v25
  %v338 = vunpack.c.l.b16 %v26
  %v339 = vunpack.c.l.b16 %v27
  %v340 = vunpack.c.l.b16 %v28
  %v341 = vunpack.c.l.b16 %v29
  %v342 = vunpack.c.l.b16 %v30
  %v343 = vunpack.c.l.b16 %v31
  %v344 = vunpack.c.l.b16 %v32
  %v345 = vunpack.c.l.b16 %v33
  %v346 = vunpack.c.l.b16 %v34
  %v347 = vunpack.c.l.b16 %v35
  %v348 = vunpack.c.l.b16 %v36
  %v349 = vunpack.c.l.b16 %v37
  %v350 = vunpack.c.l.b16 %v38
  %v351 = vunpack.c.l.b16 %v39
  %v352 = vunpack.c.l.b16 %v40
  %v353 = vunpack.c.l.b16 %v41
  %v354 = vunpack.c.l.b16 %v42
  %v355 = vunpack.c.l.b16 %v43
  %v356 = vunpack.c.l.b16 %v44
  %v357 = vunpack.c.l.b16 %v45
  %v358 = vunpack.c.l.b16 %v46
  %v359 = vunpack.c.l.b16 %v47
  %v360 = vunpack.c.l.b16 %v48
  %v361 = vunpack.c.l.b16 %v49
  %v362 = vunpack.c.l.b16 %v50
  %v363 = vpack.c.b16 %v328, %v327
  %v364 = vpack.c.b16 %v330, %v329
  %v365 = vpack.c.b16 %v332, %v331
  %v366 = vpack.c.b16 %v334, %v333
  %v367 = vpack.c.b16 %v336, %v335
  %v368 = vpack.c.b16 %v338, %v337
  %v369 = vpack.c.b16 %v340, %v339
  %v370 = vpack.c.b16 %v342, %v341
  %v371 = vpack.c.b16 %v344, %v343
  %v372 = vpack.c.b16 %v346, %v345
  %v373 = vpack.c.b16 %v348, %v347
  %v374 = vpack.c.b16 %v350, %v349
  %v375 = vpack.c.b16 %v352, %v351
  %v376 = vpack.c.b16 %v354, %v353
  %v377 = vpack.c.b16 %v356, %v355
  %v378 = vpack.c.b16 %v358, %v357
  %v379 = vpack.c.b16 %v360, %v359
  %v380 = vpack.c.b16 %v362, %v361
  %vm399 = vcmask 261120
  %v401 = vsel %vm399, %v228, 0
  %v404 = vsel %vm399, %v231, 0
  %v407 = vsel %vm399, %v234, 0
  %v410 = vsel %vm399, %v237, 0
  %v413 = vsel %vm399, %v240, 0
  %v416 = vsel %vm399, %v243, 0
  %v419 = vsel %vm399, %v246, 0
  %v422 = vsel %vm399, %v249, 0
  %v425 = vsel %vm399, %v252, 0
  %v428 = vsel %vm399, %v255, 0
  %v431 = vsel %vm399, %v258, 0
  %v434 = vsel %vm399, %v261, 0
  %v437 = vsel %vm399, %v264, 0
  %439 = vmatprep.subr.bf16.mxu0 0
  %440 = vmatpush1.bf16.msra.mxu0 %v363
  %441 = vmatprep.subr.bf16.mxu0 0
  %442 = vmatpush1.bf16.msra.mxu0 %v364
  %443 = vmatprep.subr.bf16.mxu0 0
  %444 = vmatpush1.bf16.msra.mxu0 %v365
  %445 = vmatprep.subr.bf16.mxu0 0
  %446 = vmatpush1.bf16.msra.mxu0 %v366
  %447 = vmatprep.subr.bf16.mxu0 0
  %448 = vmatpush1.bf16.msra.mxu0 %v367
  %449 = vmatprep.subr.bf16.mxu0 0
  %450 = vmatpush1.bf16.msra.mxu0 %v368
  %451 = vmatprep.subr.bf16.mxu0 0
  %452 = vmatpush1.bf16.msra.mxu0 %v369
  %453 = vmatprep.subr.bf16.mxu0 0
  %454 = vmatpush1.bf16.msra.mxu0 %v370
  %455 = vmatprep.subr.bf16.mxu0 0
  %456 = vmatpush1.bf16.msra.mxu0 %v371
  %457 = vmatprep.subr.bf16.mxu0 0
  %458 = vmatpush1.bf16.msra.mxu0 %v372
  %459 = vmatprep.subr.bf16.mxu0 0
  %460 = vmatpush1.bf16.msra.mxu0 %v373
  %461 = vmatprep.subr.bf16.mxu0 0
  %462 = vmatpush1.bf16.msra.mxu0 %v374
  %463 = vmatprep.subr.bf16.mxu0 0
  %464 = vmatpush1.bf16.msra.mxu0 %v375
  %465 = vmatprep.subr.bf16.mxu0 0
  %466 = vmatpush1.bf16.msra.mxu0 %v376
  %467 = vmatprep.subr.bf16.mxu0 0
  %468 = vmatpush1.bf16.msra.mxu0 %v377
  %469 = vmatprep.subr.bf16.mxu0 0
  %470 = vmatpush1.bf16.msra.mxu0 %v378
  %471 = vmatprep.mubr.bf16.mxu0 %v227
  %472 = vmatmul.mubr.bf16.gmra.mrb[0].mxu0 %v226
  %v473 = vpop.f32.mrb[0].mxu0
  %v474 = vadd.f32 0.0, %v473
  %v475 = vpop.f32.mrb[0].mxu0
  %v476 = vpop.f32.mrb[0].mxu0
  %v477 = vadd.f32 0.0, %v476
  %v478 = vpop.f32.mrb[0].mxu0
  %479 = vmatprep.mubr.bf16.mxu0 %v230
  %480 = vmatmul.mubr.bf16.gmra.mrb[0].mxu0 %v229
  %v481 = vpop.f32.mrb[0].mxu0
  %v482 = vadd.f32 0.0, %v481
  %v483 = vpop.f32.mrb[0].mxu0
  %v484 = vpop.f32.mrb[0].mxu0
  %v485 = vadd.f32 0.0, %v484
  %v486 = vpop.f32.mrb[0].mxu0
  %487 = vmatprep.mubr.bf16.mxu0 %v233
  %488 = vmatmul.mubr.bf16.gmra.mrb[0].mxu0 %v232
  %v489 = vpop.f32.mrb[0].mxu0
  %v490 = vadd.f32 0.0, %v489
  %v491 = vpop.f32.mrb[0].mxu0
  %v492 = vpop.f32.mrb[0].mxu0
  %v493 = vadd.f32 0.0, %v492
  %v494 = vpop.f32.mrb[0].mxu0
  %495 = vmatprep.mubr.bf16.mxu0 %v236
  %496 = vmatmul.mubr.bf16.gmra.mrb[0].mxu0 %v235
  %v497 = vpop.f32.mrb[0].mxu0
  %v498 = vadd.f32 0.0, %v497
  %v499 = vpop.f32.mrb[0].mxu0
  %v500 = vpop.f32.mrb[0].mxu0
  %v501 = vadd.f32 0.0, %v500
  %v502 = vpop.f32.mrb[0].mxu0
  %503 = vmatprep.mubr.bf16.mxu0 %v239
  %504 = vmatmul.mubr.bf16.gmra.mrb[0].mxu0 %v238
  %v505 = vpop.f32.mrb[0].mxu0
  %v506 = vadd.f32 0.0, %v505
  %v507 = vpop.f32.mrb[0].mxu0
  %v508 = vpop.f32.mrb[0].mxu0
  %v509 = vadd.f32 0.0, %v508
  %v510 = vpop.f32.mrb[0].mxu0
  %511 = vmatprep.mubr.bf16.mxu0 %v242
  %512 = vmatmul.mubr.bf16.gmra.mrb[0].mxu0 %v241
  %v513 = vpop.f32.mrb[0].mxu0
  %v514 = vadd.f32 0.0, %v513
  %v515 = vpop.f32.mrb[0].mxu0
  %v516 = vpop.f32.mrb[0].mxu0
  %v517 = vadd.f32 0.0, %v516
  %v518 = vpop.f32.mrb[0].mxu0
  %519 = vmatprep.mubr.bf16.mxu0 %v245
  %520 = vmatmul.mubr.bf16.gmra.mrb[0].mxu0 %v244
  %v521 = vpop.f32.mrb[0].mxu0
  %v522 = vadd.f32 0.0, %v521
  %v523 = vpop.f32.mrb[0].mxu0
  %v524 = vpop.f32.mrb[0].mxu0
  %v525 = vadd.f32 0.0, %v524
  %v526 = vpop.f32.mrb[0].mxu0
  %527 = vmatprep.mubr.bf16.mxu0 %v248
  %528 = vmatmul.mubr.bf16.gmra.mrb[0].mxu0 %v247
  %v529 = vpop.f32.mrb[0].mxu0
  %v530 = vadd.f32 0.0, %v529
  %v531 = vpop.f32.mrb[0].mxu0
  %v532 = vpop.f32.mrb[0].mxu0
  %v533 = vadd.f32 0.0, %v532
  %v534 = vpop.f32.mrb[0].mxu0
  %535 = vmatprep.mubr.bf16.mxu0 %v251
  %536 = vmatmul.mubr.bf16.gmra.mrb[0].mxu0 %v250
  %v537 = vpop.f32.mrb[0].mxu0
  %v538 = vadd.f32 0.0, %v537
  %v539 = vpop.f32.mrb[0].mxu0
  %v540 = vpop.f32.mrb[0].mxu0
  %v541 = vadd.f32 0.0, %v540
  %v542 = vpop.f32.mrb[0].mxu0
  %543 = vmatprep.mubr.bf16.mxu0 %v254
  %544 = vmatmul.mubr.bf16.gmra.mrb[0].mxu0 %v253
  %v545 = vpop.f32.mrb[0].mxu0
  %v546 = vadd.f32 0.0, %v545
  %v547 = vpop.f32.mrb[0].mxu0
  %v548 = vpop.f32.mrb[0].mxu0
  %v549 = vadd.f32 0.0, %v548
  %v550 = vpop.f32.mrb[0].mxu0
  %551 = vmatprep.mubr.bf16.mxu0 %v257
  %552 = vmatmul.mubr.bf16.gmra.mrb[0].mxu0 %v256
  %v553 = vpop.f32.mrb[0].mxu0
  %v554 = vadd.f32 0.0, %v553
  %v555 = vpop.f32.mrb[0].mxu0
  %v556 = vpop.f32.mrb[0].mxu0
  %v557 = vadd.f32 0.0, %v556
  %v558 = vpop.f32.mrb[0].mxu0
  %559 = vmatprep.mubr.bf16.mxu0 %v260
  %560 = vmatmul.mubr.bf16.gmra.mrb[0].mxu0 %v259
  %v561 = vpop.f32.mrb[0].mxu0
  %v562 = vadd.f32 0.0, %v561
  %v563 = vpop.f32.mrb[0].mxu0
  %v564 = vpop.f32.mrb[0].mxu0
  %v565 = vadd.f32 0.0, %v564
  %v566 = vpop.f32.mrb[0].mxu0
  %567 = vmatprep.mubr.bf16.mxu0 %v263
  %568 = vmatmul.mubr.bf16.gmra.mrb[0].mxu0 %v262
  %v569 = vpop.f32.mrb[0].mxu0
  %v570 = vadd.f32 0.0, %v569
  %v571 = vpop.f32.mrb[0].mxu0
  %v572 = vpop.f32.mrb[0].mxu0
  %v573 = vpop.f32.mrb[0].mxu0
  %574 = vdwg.mxu0
  %575 = vmatprep.subr.bf16.mxu0 0
  %576 = vmatpush1.bf16.msra.mxu0 %v379
  %577 = vmatprep.subr.bf16.mxu0 0
  %578 = vmatpush1.bf16.msra.mxu0 %v380
  %579 = vmatprep.subr.bf16.mxu0 0
  %580 = vmatpush1.bf16.msra.mxu0 0
  %581 = vmatprep.subr.bf16.mxu0 0
  %582 = vmatpush1.bf16.msra.mxu0 0
  %583 = vmatprep.subr.bf16.mxu0 0
  %584 = vmatpush1.bf16.msra.mxu0 0
  %585 = vmatprep.subr.bf16.mxu0 0
  %586 = vmatpush1.bf16.msra.mxu0 0
  %587 = vmatprep.subr.bf16.mxu0 0
  %588 = vmatpush1.bf16.msra.mxu0 0
  %589 = vmatprep.subr.bf16.mxu0 0
  %590 = vmatpush1.bf16.msra.mxu0 0
  %591 = vmatprep.subr.bf16.mxu0 0
  %592 = vmatpush1.bf16.msra.mxu0 0
  %593 = vmatprep.subr.bf16.mxu0 0
  %594 = vmatpush1.bf16.msra.mxu0 0
  %595 = vmatprep.subr.bf16.mxu0 0
  %596 = vmatpush1.bf16.msra.mxu0 0
  %597 = vmatprep.subr.bf16.mxu0 0
  %598 = vmatpush1.bf16.msra.mxu0 0
  %599 = vmatprep.subr.bf16.mxu0 0
  %600 = vmatpush1.bf16.msra.mxu0 0
  %601 = vmatprep.subr.bf16.mxu0 0
  %602 = vmatpush1.bf16.msra.mxu0 0
  %603 = vmatprep.subr.bf16.mxu0 0
  %604 = vmatpush1.bf16.msra.mxu0 0
  %605 = vmatprep.subr.bf16.mxu0 0
  %606 = vmatpush1.bf16.msra.mxu0 0
  %607 = vmatprep.mubr.bf16.mxu0 0
  %608 = vmatmul.mubr.bf16.gmra.mrb[0].mxu0 %v401
  %v609 = vpop.f32.mrb[0].mxu0
  %v610 = vadd.f32 %v474, %v609
  %v611 = vpop.f32.mrb[0].mxu0
  %v612 = vpop.f32.mrb[0].mxu0
  %v613 = vadd.f32 %v477, %v612
  %v614 = vpop.f32.mrb[0].mxu0
  %615 = vmatprep.mubr.bf16.mxu0 0
  %616 = vmatmul.mubr.bf16.gmra.mrb[0].mxu0 %v404
  %v617 = vpop.f32.mrb[0].mxu0
  %v618 = vadd.f32 %v482, %v617
  %v619 = vpop.f32.mrb[0].mxu0
  %v620 = vpop.f32.mrb[0].mxu0
  %v621 = vadd.f32 %v485, %v620
  %v622 = vpop.f32.mrb[0].mxu0
  %623 = vmatprep.mubr.bf16.mxu0 0
  %624 = vmatmul.mubr.bf16.gmra.mrb[0].mxu0 %v407
  %v625 = vpop.f32.mrb[0].mxu0
  %v626 = vadd.f32 %v490, %v625
  %v627 = vpop.f32.mrb[0].mxu0
  %v628 = vpop.f32.mrb[0].mxu0
  %v629 = vadd.f32 %v493, %v628
  %v630 = vpop.f32.mrb[0].mxu0
  %631 = vmatprep.mubr.bf16.mxu0 0
  %632 = vmatmul.mubr.bf16.gmra.mrb[0].mxu0 %v410
  %v633 = vpop.f32.mrb[0].mxu0
  %v634 = vadd.f32 %v498, %v633
  %v635 = vpop.f32.mrb[0].mxu0
  %v636 = vpop.f32.mrb[0].mxu0
  %v637 = vadd.f32 %v501, %v636
  %v638 = vpop.f32.mrb[0].mxu0
  %639 = vmatprep.mubr.bf16.mxu0 0
  %640 = vmatmul.mubr.bf16.gmra.mrb[0].mxu0 %v413
  %v641 = vpop.f32.mrb[0].mxu0
  %v642 = vadd.f32 %v506, %v641
  %v643 = vpop.f32.mrb[0].mxu0
  %v644 = vpop.f32.mrb[0].mxu0
  %v645 = vadd.f32 %v509, %v644
  %v646 = vpop.f32.mrb[0].mxu0
  %647 = vmatprep.mubr.bf16.mxu0 0
  %648 = vmatmul.mubr.bf16.gmra.mrb[0].mxu0 %v416
  %v649 = vpop.f32.mrb[0].mxu0
  %v650 = vadd.f32 %v514, %v649
  %v651 = vpop.f32.mrb[0].mxu0
  %v652 = vpop.f32.mrb[0].mxu0
  %v653 = vadd.f32 %v517, %v652
  %v654 = vpop.f32.mrb[0].mxu0
  %655 = vmatprep.mubr.bf16.mxu0 0
  %656 = vmatmul.mubr.bf16.gmra.mrb[0].mxu0 %v419
  %v657 = vpop.f32.mrb[0].mxu0
  %v658 = vadd.f32 %v522, %v657
  %v659 = vpop.f32.mrb[0].mxu0
  %v660 = vpop.f32.mrb[0].mxu0
  %v661 = vadd.f32 %v525, %v660
  %v662 = vpop.f32.mrb[0].mxu0
  %663 = vmatprep.mubr.bf16.mxu0 0
  %664 = vmatmul.mubr.bf16.gmra.mrb[0].mxu0 %v422
  %v665 = vpop.f32.mrb[0].mxu0
  %v666 = vadd.f32 %v530, %v665
  %v667 = vpop.f32.mrb[0].mxu0
  %v668 = vpop.f32.mrb[0].mxu0
  %v669 = vadd.f32 %v533, %v668
  %v670 = vpop.f32.mrb[0].mxu0
  %671 = vmatprep.mubr.bf16.mxu0 0
  %672 = vmatmul.mubr.bf16.gmra.mrb[0].mxu0 %v425
  %v673 = vpop.f32.mrb[0].mxu0
  %v674 = vadd.f32 %v538, %v673
  %v675 = vpop.f32.mrb[0].mxu0
  %v676 = vpop.f32.mrb[0].mxu0
  %v677 = vadd.f32 %v541, %v676
  %v678 = vpop.f32.mrb[0].mxu0
  %679 = vmatprep.mubr.bf16.mxu0 0
  %680 = vmatmul.mubr.bf16.gmra.mrb[0].mxu0 %v428
  %v681 = vpop.f32.mrb[0].mxu0
  %v682 = vadd.f32 %v546, %v681
  %v683 = vpop.f32.mrb[0].mxu0
  %v684 = vpop.f32.mrb[0].mxu0
  %v685 = vadd.f32 %v549, %v684
  %v686 = vpop.f32.mrb[0].mxu0
  %687 = vmatprep.mubr.bf16.mxu0 0
  %688 = vmatmul.mubr.bf16.gmra.mrb[0].mxu0 %v431
  %v689 = vpop.f32.mrb[0].mxu0
  %v690 = vadd.f32 %v554, %v689
  %v691 = vpop.f32.mrb[0].mxu0
  %v692 = vpop.f32.mrb[0].mxu0
  %v693 = vadd.f32 %v557, %v692
  %v694 = vpop.f32.mrb[0].mxu0
  %695 = vmatprep.mubr.bf16.mxu0 0
  %696 = vmatmul.mubr.bf16.gmra.mrb[0].mxu0 %v434
  %v697 = vpop.f32.mrb[0].mxu0
  %v698 = vadd.f32 %v562, %v697
  %v699 = vpop.f32.mrb[0].mxu0
  %v700 = vpop.f32.mrb[0].mxu0
  %v701 = vadd.f32 %v565, %v700
  %v702 = vpop.f32.mrb[0].mxu0
  %703 = vmatprep.mubr.bf16.mxu0 0
  %704 = vmatmul.mubr.bf16.gmra.mrb[0].mxu0 %v437
  %v705 = vpop.f32.mrb[0].mxu0
  %v706 = vadd.f32 %v570, %v705
  %v707 = vpop.f32.mrb[0].mxu0
  %v708 = vpop.f32.mrb[0].mxu0
  %v709 = vpop.f32.mrb[0].mxu0
  %710 = vdwg.mxu0
  %s711 = scalar_lea.vmem %s0, 300
  %v712 = vld [vmem:[%s711] sm:$0xff]
  %v713 = vld [vmem:[%s711 + $0x8] sm:$0xf]
  %v714 = vld [vmem:[%s711 + $0xc] sm:$0xff]
  %v715 = vld [vmem:[%s711 + $0x14] sm:$0xf]
  %v716 = vld [vmem:[%s711 + $0x18] sm:$0xff]
  %v717 = vld [vmem:[%s711 + $0x20] sm:$0xf]
  %v718 = vld [vmem:[%s711 + $0x24] sm:$0xff]
  %v719 = vld [vmem:[%s711 + $0x2c] sm:$0xf]
  %v720 = vld [vmem:[%s711 + $0x30] sm:$0xff]
  %v721 = vld [vmem:[%s711 + $0x38] sm:$0xf]
  %v722 = vld [vmem:[%s711 + $0x3c] sm:$0xff]
  %v723 = vld [vmem:[%s711 + $0x44] sm:$0xf]
  %v724 = vld [vmem:[%s711 + $0x48] sm:$0xff]
  %v725 = vld [vmem:[%s711 + $0x50] sm:$0xf]
  %v726 = vld [vmem:[%s711 + $0x54] sm:$0xff]
  %v727 = vld [vmem:[%s711 + $0x5c] sm:$0xf]
  %v728 = vld [vmem:[%s711 + $0x60] sm:$0xff]
  %v729 = vld [vmem:[%s711 + $0x68] sm:$0xf]
  %v730 = vld [vmem:[%s711 + $0x6c] sm:$0xff]
  %v731 = vld [vmem:[%s711 + $0x74] sm:$0xf]
  %v732 = vld [vmem:[%s711 + $0x78] sm:$0xff]
  %v733 = vld [vmem:[%s711 + $0x80] sm:$0xf]
  %v734 = vld [vmem:[%s711 + $0x84] sm:$0xff]
  %v735 = vld [vmem:[%s711 + $0x8c] sm:$0xf]
  %v736 = vld [vmem:[%s711 + $0x90] sm:$0xff]
  %v737 = vld [vmem:[%s711 + $0x98] sm:$0xf]
  %v738 = vld [vmem:[%s711 + $0x9c] sm:$0xff]
  %v739 = vld [vmem:[%s711 + $0xa4] sm:$0xf]
  %v740 = vld [vmem:[%s711 + $0xa8] sm:$0xff]
  %v741 = vld [vmem:[%s711 + $0xb0] sm:$0xf]
  %v742 = vld [vmem:[%s711 + $0xb4] sm:$0xff]
  %v743 = vld [vmem:[%s711 + $0xbc] sm:$0xf]
  %v744 = vld [vmem:[%s711 + $0xc0] sm:$0xff]
  %v745 = vld [vmem:[%s711 + $0xc8] sm:$0xf]
  %v746 = vld [vmem:[%s711 + $0xcc] sm:$0xff]
  %v747 = vld [vmem:[%s711 + $0xd4] sm:$0xf]
  %v748 = vld [vmem:[%s711 + $0xd8] sm:$0xff]
  %v749 = vld [vmem:[%s711 + $0xe0] sm:$0xf]
  %v750 = vld [vmem:[%s711 + $0xe4] sm:$0xff]
  %v751 = vld [vmem:[%s711 + $0xec] sm:$0xf]
  %v752 = vld [vmem:[%s711 + $0xf0] sm:$0xff]
  %v753 = vld [vmem:[%s711 + $0xf8] sm:$0xf]
  %v754 = vld [vmem:[%s711 + $0xfc] sm:$0xff]
  %v755 = vld [vmem:[%s711 + $0x104] sm:$0xf]
  %v756 = vld [vmem:[%s711 + $0x108] sm:$0xff]
  %v757 = vld [vmem:[%s711 + $0x110] sm:$0xf]
  %v758 = vld [vmem:[%s711 + $0x114] sm:$0xff]
  %v759 = vld [vmem:[%s711 + $0x11c] sm:$0xf]
  %v760 = vld [vmem:[%s711 + $0x120] sm:$0x33]
  %v761 = vld [vmem:[%s711 + $0x128] sm:$0x3]
  %v812 = vunpack.c.l.b16 %v712
  %v813 = vunpack.c.h.b16 %v712
  %v814 = vunpack.c.l.b16 %v713
  %v815 = vunpack.c.l.b16 %v714
  %v816 = vunpack.c.h.b16 %v714
  %v817 = vunpack.c.l.b16 %v715
  %v818 = vunpack.c.l.b16 %v716
  %v819 = vunpack.c.h.b16 %v716
  %v820 = vunpack.c.l.b16 %v717
  %v821 = vunpack.c.l.b16 %v718
  %v822 = vunpack.c.h.b16 %v718
  %v823 = vunpack.c.l.b16 %v719
  %v824 = vunpack.c.l.b16 %v720
  %v825 = vunpack.c.h.b16 %v720
  %v826 = vunpack.c.l.b16 %v721
  %v827 = vunpack.c.l.b16 %v722
  %v828 = vunpack.c.h.b16 %v722
  %v829 = vunpack.c.l.b16 %v723
  %v830 = vunpack.c.l.b16 %v724
  %v831 = vunpack.c.h.b16 %v724
  %v832 = vunpack.c.l.b16 %v725
  %v833 = vunpack.c.l.b16 %v726
  %v834 = vunpack.c.h.b16 %v726
  %v835 = vunpack.c.l.b16 %v727
  %v836 = vunpack.c.l.b16 %v728
  %v837 = vunpack.c.h.b16 %v728
  %v838 = vunpack.c.l.b16 %v729
  %v839 = vunpack.c.l.b16 %v730
  %v840 = vunpack.c.h.b16 %v730
  %v841 = vunpack.c.l.b16 %v731
  %v842 = vunpack.c.l.b16 %v732
  %v843 = vunpack.c.h.b16 %v732
  %v844 = vunpack.c.l.b16 %v733
  %v845 = vunpack.c.l.b16 %v734
  %v846 = vunpack.c.h.b16 %v734
  %v847 = vunpack.c.l.b16 %v735
  %v848 = vunpack.c.l.b16 %v736
  %v849 = vunpack.c.h.b16 %v736
  %v850 = vunpack.c.l.b16 %v737
  %v851 = vunpack.c.l.b16 %v738
  %v852 = vunpack.c.h.b16 %v738
  %v853 = vunpack.c.l.b16 %v739
  %v854 = vunpack.c.l.b16 %v740
  %v855 = vunpack.c.h.b16 %v740
  %v856 = vunpack.c.l.b16 %v741
  %v857 = vunpack.c.l.b16 %v742
  %v858 = vunpack.c.h.b16 %v742
  %v859 = vunpack.c.l.b16 %v743
  %v860 = vunpack.c.l.b16 %v744
  %v861 = vunpack.c.h.b16 %v744
  %v862 = vunpack.c.l.b16 %v745
  %v863 = vunpack.c.l.b16 %v746
  %v864 = vunpack.c.h.b16 %v746
  %v865 = vunpack.c.l.b16 %v747
  %v866 = vunpack.c.l.b16 %v748
  %v867 = vunpack.c.h.b16 %v748
  %v868 = vunpack.c.l.b16 %v749
  %v869 = vunpack.c.l.b16 %v750
  %v870 = vunpack.c.h.b16 %v750
  %v871 = vunpack.c.l.b16 %v751
  %v872 = vunpack.c.l.b16 %v752
  %v873 = vunpack.c.h.b16 %v752
  %v874 = vunpack.c.l.b16 %v753
  %v875 = vunpack.c.l.b16 %v754
  %v876 = vunpack.c.h.b16 %v754
  %v877 = vunpack.c.l.b16 %v755
  %v878 = vunpack.c.l.b16 %v756
  %v879 = vunpack.c.h.b16 %v756
  %v880 = vunpack.c.l.b16 %v757
  %v881 = vunpack.c.l.b16 %v758
  %v882 = vunpack.c.h.b16 %v758
  %v883 = vunpack.c.l.b16 %v759
  %v884 = vunpack.c.l.b16 %v760
  %v885 = vunpack.c.h.b16 %v760
  %v886 = vunpack.c.l.b16 %v761
  %v887 = vpack.c.b16 %v815, %v812
  %v888 = vpack.c.b16 %v816, %v813
  %v889 = vpack.c.b16 %v817, %v814
  %v890 = vpack.c.b16 %v821, %v818
  %v891 = vpack.c.b16 %v822, %v819
  %v892 = vpack.c.b16 %v823, %v820
  %v893 = vpack.c.b16 %v827, %v824
  %v894 = vpack.c.b16 %v828, %v825
  %v895 = vpack.c.b16 %v829, %v826
  %v896 = vpack.c.b16 %v833, %v830
  %v897 = vpack.c.b16 %v834, %v831
  %v898 = vpack.c.b16 %v835, %v832
  %v899 = vpack.c.b16 %v839, %v836
  %v900 = vpack.c.b16 %v840, %v837
  %v901 = vpack.c.b16 %v841, %v838
  %v902 = vpack.c.b16 %v845, %v842
  %v903 = vpack.c.b16 %v846, %v843
  %v904 = vpack.c.b16 %v847, %v844
  %v905 = vpack.c.b16 %v851, %v848
  %v906 = vpack.c.b16 %v852, %v849
  %v907 = vpack.c.b16 %v853, %v850
  %v908 = vpack.c.b16 %v857, %v854
  %v909 = vpack.c.b16 %v858, %v855
  %v910 = vpack.c.b16 %v859, %v856
  %v911 = vpack.c.b16 %v863, %v860
  %v912 = vpack.c.b16 %v864, %v861
  %v913 = vpack.c.b16 %v865, %v862
  %v914 = vpack.c.b16 %v869, %v866
  %v915 = vpack.c.b16 %v870, %v867
  %v916 = vpack.c.b16 %v871, %v868
  %v917 = vpack.c.b16 %v875, %v872
  %v918 = vpack.c.b16 %v876, %v873
  %v919 = vpack.c.b16 %v877, %v874
  %v920 = vpack.c.b16 %v881, %v878
  %v921 = vpack.c.b16 %v882, %v879
  %v922 = vpack.c.b16 %v883, %v880
  %v923 = vpack.c.b16 %v884, %v884
  %v924 = vpack.c.b16 %v885, %v885
  %v925 = vpack.c.b16 %v886, %v886
  %v953 = vsel %vm399, %v889, 0
  %v956 = vsel %vm399, %v892, 0
  %v959 = vsel %vm399, %v895, 0
  %v962 = vsel %vm399, %v898, 0
  %v965 = vsel %vm399, %v901, 0
  %v968 = vsel %vm399, %v904, 0
  %v971 = vsel %vm399, %v907, 0
  %v974 = vsel %vm399, %v910, 0
  %v977 = vsel %vm399, %v913, 0
  %v980 = vsel %vm399, %v916, 0
  %v983 = vsel %vm399, %v919, 0
  %v986 = vsel %vm399, %v922, 0
  %v989 = vsel %vm399, %v925, 0
  %991 = vmatprep.subr.bf16.mxu0 0
  %992 = vmatpush1.bf16.msra.mxu0 %v363
  %993 = vmatprep.subr.bf16.mxu0 0
  %994 = vmatpush1.bf16.msra.mxu0 %v364
  %995 = vmatprep.subr.bf16.mxu0 0
  %996 = vmatpush1.bf16.msra.mxu0 %v365
  %997 = vmatprep.subr.bf16.mxu0 0
  %998 = vmatpush1.bf16.msra.mxu0 %v366
  %999 = vmatprep.subr.bf16.mxu0 0
  %1000 = vmatpush1.bf16.msra.mxu0 %v367
  %1001 = vmatprep.subr.bf16.mxu0 0
  %1002 = vmatpush1.bf16.msra.mxu0 %v368
  %1003 = vmatprep.subr.bf16.mxu0 0
  %1004 = vmatpush1.bf16.msra.mxu0 %v369
  %1005 = vmatprep.subr.bf16.mxu0 0
  %1006 = vmatpush1.bf16.msra.mxu0 %v370
  %1007 = vmatprep.subr.bf16.mxu0 0
  %1008 = vmatpush1.bf16.msra.mxu0 %v371
  %1009 = vmatprep.subr.bf16.mxu0 0
  %1010 = vmatpush1.bf16.msra.mxu0 %v372
  %1011 = vmatprep.subr.bf16.mxu0 0
  %1012 = vmatpush1.bf16.msra.mxu0 %v373
  %1013 = vmatprep.subr.bf16.mxu0 0
  %1014 = vmatpush1.bf16.msra.mxu0 %v374
  %1015 = vmatprep.subr.bf16.mxu0 0
  %1016 = vmatpush1.bf16.msra.mxu0 %v375
  %1017 = vmatprep.subr.bf16.mxu0 0
  %1018 = vmatpush1.bf16.msra.mxu0 %v376
  %1019 = vmatprep.subr.bf16.mxu0 0
  %1020 = vmatpush1.bf16.msra.mxu0 %v377
  %1021 = vmatprep.subr.bf16.mxu0 0
  %1022 = vmatpush1.bf16.msra.mxu0 %v378
  %1023 = vmatprep.mubr.bf16.mxu0 %v888
  %1024 = vmatmul.mubr.bf16.gmra.mrb[0].mxu0 %v887
  %v1025 = vpop.f32.mrb[0].mxu0
  %v1026 = vadd.f32 0.0, %v1025
  %v1027 = vpop.f32.mrb[0].mxu0
  %v1028 = vpop.f32.mrb[0].mxu0
  %v1029 = vadd.f32 0.0, %v1028
  %v1030 = vpop.f32.mrb[0].mxu0
  %1031 = vmatprep.mubr.bf16.mxu0 %v891
  %1032 = vmatmul.mubr.bf16.gmra.mrb[0].mxu0 %v890
  %v1033 = vpop.f32.mrb[0].mxu0
  %v1034 = vadd.f32 0.0, %v1033
  %v1035 = vpop.f32.mrb[0].mxu0
  %v1036 = vpop.f32.mrb[0].mxu0
  %v1037 = vadd.f32 0.0, %v1036
  %v1038 = vpop.f32.mrb[0].mxu0
  %1039 = vmatprep.mubr.bf16.mxu0 %v894
  %1040 = vmatmul.mubr.bf16.gmra.mrb[0].mxu0 %v893
  %v1041 = vpop.f32.mrb[0].mxu0
  %v1042 = vadd.f32 0.0, %v1041
  %v1043 = vpop.f32.mrb[0].mxu0
  %v1044 = vpop.f32.mrb[0].mxu0
  %v1045 = vadd.f32 0.0, %v1044
  %v1046 = vpop.f32.mrb[0].mxu0
  %1047 = vmatprep.mubr.bf16.mxu0 %v897
  %1048 = vmatmul.mubr.bf16.gmra.mrb[0].mxu0 %v896
  %v1049 = vpop.f32.mrb[0].mxu0
  %v1050 = vadd.f32 0.0, %v1049
  %v1051 = vpop.f32.mrb[0].mxu0
  %v1052 = vpop.f32.mrb[0].mxu0
  %v1053 = vadd.f32 0.0, %v1052
  %v1054 = vpop.f32.mrb[0].mxu0
  %1055 = vmatprep.mubr.bf16.mxu0 %v900
  %1056 = vmatmul.mubr.bf16.gmra.mrb[0].mxu0 %v899
  %v1057 = vpop.f32.mrb[0].mxu0
  %v1058 = vadd.f32 0.0, %v1057
  %v1059 = vpop.f32.mrb[0].mxu0
  %v1060 = vpop.f32.mrb[0].mxu0
  %v1061 = vadd.f32 0.0, %v1060
  %v1062 = vpop.f32.mrb[0].mxu0
  %1063 = vmatprep.mubr.bf16.mxu0 %v903
  %1064 = vmatmul.mubr.bf16.gmra.mrb[0].mxu0 %v902
  %v1065 = vpop.f32.mrb[0].mxu0
  %v1066 = vadd.f32 0.0, %v1065
  %v1067 = vpop.f32.mrb[0].mxu0
  %v1068 = vpop.f32.mrb[0].mxu0
  %v1069 = vadd.f32 0.0, %v1068
  %v1070 = vpop.f32.mrb[0].mxu0
  %1071 = vmatprep.mubr.bf16.mxu0 %v906
  %1072 = vmatmul.mubr.bf16.gmra.mrb[0].mxu0 %v905
  %v1073 = vpop.f32.mrb[0].mxu0
  %v1074 = vadd.f32 0.0, %v1073
  %v1075 = vpop.f32.mrb[0].mxu0
  %v1076 = vpop.f32.mrb[0].mxu0
  %v1077 = vadd.f32 0.0, %v1076
  %v1078 = vpop.f32.mrb[0].mxu0
  %1079 = vmatprep.mubr.bf16.mxu0 %v909
  %1080 = vmatmul.mubr.bf16.gmra.mrb[0].mxu0 %v908
  %v1081 = vpop.f32.mrb[0].mxu0
  %v1082 = vadd.f32 0.0, %v1081
  %v1083 = vpop.f32.mrb[0].mxu0
  %v1084 = vpop.f32.mrb[0].mxu0
  %v1085 = vadd.f32 0.0, %v1084
  %v1086 = vpop.f32.mrb[0].mxu0
  %1087 = vmatprep.mubr.bf16.mxu0 %v912
  %1088 = vmatmul.mubr.bf16.gmra.mrb[0].mxu0 %v911
  %v1089 = vpop.f32.mrb[0].mxu0
  %v1090 = vadd.f32 0.0, %v1089
  %v1091 = vpop.f32.mrb[0].mxu0
  %v1092 = vpop.f32.mrb[0].mxu0
  %v1093 = vadd.f32 0.0, %v1092
  %v1094 = vpop.f32.mrb[0].mxu0
  %1095 = vmatprep.mubr.bf16.mxu0 %v915
  %1096 = vmatmul.mubr.bf16.gmra.mrb[0].mxu0 %v914
  %v1097 = vpop.f32.mrb[0].mxu0
  %v1098 = vadd.f32 0.0, %v1097
  %v1099 = vpop.f32.mrb[0].mxu0
  %v1100 = vpop.f32.mrb[0].mxu0
  %v1101 = vadd.f32 0.0, %v1100
  %v1102 = vpop.f32.mrb[0].mxu0
  %1103 = vmatprep.mubr.bf16.mxu0 %v918
  %1104 = vmatmul.mubr.bf16.gmra.mrb[0].mxu0 %v917
  %v1105 = vpop.f32.mrb[0].mxu0
  %v1106 = vadd.f32 0.0, %v1105
  %v1107 = vpop.f32.mrb[0].mxu0
  %v1108 = vpop.f32.mrb[0].mxu0
  %v1109 = vadd.f32 0.0, %v1108
  %v1110 = vpop.f32.mrb[0].mxu0
  %1111 = vmatprep.mubr.bf16.mxu0 %v921
  %1112 = vmatmul.mubr.bf16.gmra.mrb[0].mxu0 %v920
  %v1113 = vpop.f32.mrb[0].mxu0
  %v1114 = vadd.f32 0.0, %v1113
  %v1115 = vpop.f32.mrb[0].mxu0
  %v1116 = vpop.f32.mrb[0].mxu0
  %v1117 = vadd.f32 0.0, %v1116
  %v1118 = vpop.f32.mrb[0].mxu0
  %1119 = vmatprep.mubr.bf16.mxu0 %v924
  %1120 = vmatmul.mubr.bf16.gmra.mrb[0].mxu0 %v923
  %v1121 = vpop.f32.mrb[0].mxu0
  %v1122 = vadd.f32 0.0, %v1121
  %v1123 = vpop.f32.mrb[0].mxu0
  %v1124 = vpop.f32.mrb[0].mxu0
  %v1125 = vpop.f32.mrb[0].mxu0
  %1126 = vdwg.mxu0
  %1127 = vmatprep.subr.bf16.mxu0 0
  %1128 = vmatpush1.bf16.msra.mxu0 %v379
  %1129 = vmatprep.subr.bf16.mxu0 0
  %1130 = vmatpush1.bf16.msra.mxu0 %v380
  %1131 = vmatprep.subr.bf16.mxu0 0
  %1132 = vmatpush1.bf16.msra.mxu0 0
  %1133 = vmatprep.subr.bf16.mxu0 0
  %1134 = vmatpush1.bf16.msra.mxu0 0
  %1135 = vmatprep.subr.bf16.mxu0 0
  %1136 = vmatpush1.bf16.msra.mxu0 0
  %1137 = vmatprep.subr.bf16.mxu0 0
  %1138 = vmatpush1.bf16.msra.mxu0 0
  %1139 = vmatprep.subr.bf16.mxu0 0
  %1140 = vmatpush1.bf16.msra.mxu0 0
  %1141 = vmatprep.subr.bf16.mxu0 0
  %1142 = vmatpush1.bf16.msra.mxu0 0
  %1143 = vmatprep.subr.bf16.mxu0 0
  %1144 = vmatpush1.bf16.msra.mxu0 0
  %1145 = vmatprep.subr.bf16.mxu0 0
  %1146 = vmatpush1.bf16.msra.mxu0 0
  %1147 = vmatprep.subr.bf16.mxu0 0
  %1148 = vmatpush1.bf16.msra.mxu0 0
  %1149 = vmatprep.subr.bf16.mxu0 0
  %1150 = vmatpush1.bf16.msra.mxu0 0
  %1151 = vmatprep.subr.bf16.mxu0 0
  %1152 = vmatpush1.bf16.msra.mxu0 0
  %1153 = vmatprep.subr.bf16.mxu0 0
  %1154 = vmatpush1.bf16.msra.mxu0 0
  %1155 = vmatprep.subr.bf16.mxu0 0
  %1156 = vmatpush1.bf16.msra.mxu0 0
  %1157 = vmatprep.subr.bf16.mxu0 0
  %1158 = vmatpush1.bf16.msra.mxu0 0
  %1159 = vmatprep.mubr.bf16.mxu0 0
  %1160 = vmatmul.mubr.bf16.gmra.mrb[0].mxu0 %v953
  %v1161 = vpop.f32.mrb[0].mxu0
  %v1162 = vadd.f32 %v1026, %v1161
  %v1163 = vpop.f32.mrb[0].mxu0
  %v1164 = vpop.f32.mrb[0].mxu0
  %v1165 = vadd.f32 %v1029, %v1164
  %v1166 = vpop.f32.mrb[0].mxu0
  %1167 = vmatprep.mubr.bf16.mxu0 0
  %1168 = vmatmul.mubr.bf16.gmra.mrb[0].mxu0 %v956
  %v1169 = vpop.f32.mrb[0].mxu0
  %v1170 = vadd.f32 %v1034, %v1169
  %v1171 = vpop.f32.mrb[0].mxu0
  %v1172 = vpop.f32.mrb[0].mxu0
  %v1173 = vadd.f32 %v1037, %v1172
  %v1174 = vpop.f32.mrb[0].mxu0
  %1175 = vmatprep.mubr.bf16.mxu0 0
  %1176 = vmatmul.mubr.bf16.gmra.mrb[0].mxu0 %v959
  %v1177 = vpop.f32.mrb[0].mxu0
  %v1178 = vadd.f32 %v1042, %v1177
  %v1179 = vpop.f32.mrb[0].mxu0
  %v1180 = vpop.f32.mrb[0].mxu0
  %v1181 = vadd.f32 %v1045, %v1180
  %v1182 = vpop.f32.mrb[0].mxu0
  %1183 = vmatprep.mubr.bf16.mxu0 0
  %1184 = vmatmul.mubr.bf16.gmra.mrb[0].mxu0 %v962
  %v1185 = vpop.f32.mrb[0].mxu0
  %v1186 = vadd.f32 %v1050, %v1185
  %v1187 = vpop.f32.mrb[0].mxu0
  %v1188 = vpop.f32.mrb[0].mxu0
  %v1189 = vadd.f32 %v1053, %v1188
  %v1190 = vpop.f32.mrb[0].mxu0
  %1191 = vmatprep.mubr.bf16.mxu0 0
  %1192 = vmatmul.mubr.bf16.gmra.mrb[0].mxu0 %v965
  %v1193 = vpop.f32.mrb[0].mxu0
  %v1194 = vadd.f32 %v1058, %v1193
  %v1195 = vpop.f32.mrb[0].mxu0
  %v1196 = vpop.f32.mrb[0].mxu0
  %v1197 = vadd.f32 %v1061, %v1196
  %v1198 = vpop.f32.mrb[0].mxu0
  %1199 = vmatprep.mubr.bf16.mxu0 0
  %1200 = vmatmul.mubr.bf16.gmra.mrb[0].mxu0 %v968
  %v1201 = vpop.f32.mrb[0].mxu0
  %v1202 = vadd.f32 %v1066, %v1201
  %v1203 = vpop.f32.mrb[0].mxu0
  %v1204 = vpop.f32.mrb[0].mxu0
  %v1205 = vadd.f32 %v1069, %v1204
  %v1206 = vpop.f32.mrb[0].mxu0
  %1207 = vmatprep.mubr.bf16.mxu0 0
  %1208 = vmatmul.mubr.bf16.gmra.mrb[0].mxu0 %v971
  %v1209 = vpop.f32.mrb[0].mxu0
  %v1210 = vadd.f32 %v1074, %v1209
  %v1211 = vpop.f32.mrb[0].mxu0
  %v1212 = vpop.f32.mrb[0].mxu0
  %v1213 = vadd.f32 %v1077, %v1212
  %v1214 = vpop.f32.mrb[0].mxu0
  %1215 = vmatprep.mubr.bf16.mxu0 0
  %1216 = vmatmul.mubr.bf16.gmra.mrb[0].mxu0 %v974
  %v1217 = vpop.f32.mrb[0].mxu0
  %v1218 = vadd.f32 %v1082, %v1217
  %v1219 = vpop.f32.mrb[0].mxu0
  %v1220 = vpop.f32.mrb[0].mxu0
  %v1221 = vadd.f32 %v1085, %v1220
  %v1222 = vpop.f32.mrb[0].mxu0
  %1223 = vmatprep.mubr.bf16.mxu0 0
  %1224 = vmatmul.mubr.bf16.gmra.mrb[0].mxu0 %v977
  %v1225 = vpop.f32.mrb[0].mxu0
  %v1226 = vadd.f32 %v1090, %v1225
  %v1227 = vpop.f32.mrb[0].mxu0
  %v1228 = vpop.f32.mrb[0].mxu0
  %v1229 = vadd.f32 %v1093, %v1228
  %v1230 = vpop.f32.mrb[0].mxu0
  %1231 = vmatprep.mubr.bf16.mxu0 0
  %1232 = vmatmul.mubr.bf16.gmra.mrb[0].mxu0 %v980
  %v1233 = vpop.f32.mrb[0].mxu0
  %v1234 = vadd.f32 %v1098, %v1233
  %v1235 = vpop.f32.mrb[0].mxu0
  %v1236 = vpop.f32.mrb[0].mxu0
  %v1237 = vadd.f32 %v1101, %v1236
  %v1238 = vpop.f32.mrb[0].mxu0
  %1239 = vmatprep.mubr.bf16.mxu0 0
  %1240 = vmatmul.mubr.bf16.gmra.mrb[0].mxu0 %v983
  %v1241 = vpop.f32.mrb[0].mxu0
  %v1242 = vadd.f32 %v1106, %v1241
  %v1243 = vpop.f32.mrb[0].mxu0
  %v1244 = vpop.f32.mrb[0].mxu0
  %v1245 = vadd.f32 %v1109, %v1244
  %v1246 = vpop.f32.mrb[0].mxu0
  %1247 = vmatprep.mubr.bf16.mxu0 0
  %1248 = vmatmul.mubr.bf16.gmra.mrb[0].mxu0 %v986
  %v1249 = vpop.f32.mrb[0].mxu0
  %v1250 = vadd.f32 %v1114, %v1249
  %v1251 = vpop.f32.mrb[0].mxu0
  %v1252 = vpop.f32.mrb[0].mxu0
  %v1253 = vadd.f32 %v1117, %v1252
  %v1254 = vpop.f32.mrb[0].mxu0
  %1255 = vmatprep.mubr.bf16.mxu0 0
  %1256 = vmatmul.mubr.bf16.gmra.mrb[0].mxu0 %v989
  %v1257 = vpop.f32.mrb[0].mxu0
  %v1258 = vadd.f32 %v1122, %v1257
  %v1259 = vpop.f32.mrb[0].mxu0
  %v1260 = vpop.f32.mrb[0].mxu0
  %v1261 = vpop.f32.mrb[0].mxu0
  %1262 = vdwg.mxu0
  %v1263 = vmax.f32 %v610, %v1162
  %v1264 = vmax.f32 %v613, %v1165
  %v1265 = vmax.f32 %v618, %v1170
  %v1266 = vmax.f32 %v621, %v1173
  %v1267 = vmax.f32 %v626, %v1178
  %v1268 = vmax.f32 %v629, %v1181
  %v1269 = vmax.f32 %v634, %v1186
  %v1270 = vmax.f32 %v637, %v1189
  %v1271 = vmax.f32 %v642, %v1194
  %v1272 = vmax.f32 %v645, %v1197
  %v1273 = vmax.f32 %v650, %v1202
  %v1274 = vmax.f32 %v653, %v1205
  %v1275 = vmax.f32 %v658, %v1210
  %v1276 = vmax.f32 %v661, %v1213
  %v1277 = vmax.f32 %v666, %v1218
  %v1278 = vmax.f32 %v669, %v1221
  %v1279 = vmax.f32 %v674, %v1226
  %v1280 = vmax.f32 %v677, %v1229
  %v1281 = vmax.f32 %v682, %v1234
  %v1282 = vmax.f32 %v685, %v1237
  %v1283 = vmax.f32 %v690, %v1242
  %v1284 = vmax.f32 %v693, %v1245
  %v1285 = vmax.f32 %v698, %v1250
  %v1286 = vmax.f32 %v701, %v1253
  %v1287 = vmax.f32 %v706, %v1258
  %s1288 = scalar_lea.vmem %s0, 600
  %v1289 = vld [vmem:[%s1288] sm:$0xff]
  %v1290 = vld [vmem:[%s1288 + $0x8] sm:$0xf]
  %v1291 = vld [vmem:[%s1288 + $0xc] sm:$0xff]
  %v1292 = vld [vmem:[%s1288 + $0x14] sm:$0xf]
  %v1293 = vld [vmem:[%s1288 + $0x18] sm:$0xff]
  %v1294 = vld [vmem:[%s1288 + $0x20] sm:$0xf]
  %v1295 = vld [vmem:[%s1288 + $0x24] sm:$0xff]
  %v1296 = vld [vmem:[%s1288 + $0x2c] sm:$0xf]
  %v1297 = vld [vmem:[%s1288 + $0x30] sm:$0xff]
  %v1298 = vld [vmem:[%s1288 + $0x38] sm:$0xf]
  %v1299 = vld [vmem:[%s1288 + $0x3c] sm:$0xff]
  %v1300 = vld [vmem:[%s1288 + $0x44] sm:$0xf]
  %v1301 = vld [vmem:[%s1288 + $0x48] sm:$0xff]
  %v1302 = vld [vmem:[%s1288 + $0x50] sm:$0xf]
  %v1303 = vld [vmem:[%s1288 + $0x54] sm:$0xff]
  %v1304 = vld [vmem:[%s1288 + $0x5c] sm:$0xf]
  %v1305 = vld [vmem:[%s1288 + $0x60] sm:$0xff]
  %v1306 = vld [vmem:[%s1288 + $0x68] sm:$0xf]
  %v1307 = vld [vmem:[%s1288 + $0x6c] sm:$0xff]
  %v1308 = vld [vmem:[%s1288 + $0x74] sm:$0xf]
  %v1309 = vld [vmem:[%s1288 + $0x78] sm:$0xff]
  %v1310 = vld [vmem:[%s1288 + $0x80] sm:$0xf]
  %v1311 = vld [vmem:[%s1288 + $0x84] sm:$0xff]
  %v1312 = vld [vmem:[%s1288 + $0x8c] sm:$0xf]
  %v1313 = vld [vmem:[%s1288 + $0x90] sm:$0xff]
  %v1314 = vld [vmem:[%s1288 + $0x98] sm:$0xf]
  %v1315 = vld [vmem:[%s1288 + $0x9c] sm:$0xff]
  %v1316 = vld [vmem:[%s1288 + $0xa4] sm:$0xf]
  %v1317 = vld [vmem:[%s1288 + $0xa8] sm:$0xff]
  %v1318 = vld [vmem:[%s1288 + $0xb0] sm:$0xf]
  %v1319 = vld [vmem:[%s1288 + $0xb4] sm:$0xff]
  %v1320 = vld [vmem:[%s1288 + $0xbc] sm:$0xf]
  %v1321 = vld [vmem:[%s1288 + $0xc0] sm:$0xff]
  %v1322 = vld [vmem:[%s1288 + $0xc8] sm:$0xf]
  %v1323 = vld [vmem:[%s1288 + $0xcc] sm:$0xff]
  %v1324 = vld [vmem:[%s1288 + $0xd4] sm:$0xf]
  %v1325 = vld [vmem:[%s1288 + $0xd8] sm:$0xff]
  %v1326 = vld [vmem:[%s1288 + $0xe0] sm:$0xf]
  %v1327 = vld [vmem:[%s1288 + $0xe4] sm:$0xff]
  %v1328 = vld [vmem:[%s1288 + $0xec] sm:$0xf]
  %v1329 = vld [vmem:[%s1288 + $0xf0] sm:$0xff]
  %v1330 = vld [vmem:[%s1288 + $0xf8] sm:$0xf]
  %v1331 = vld [vmem:[%s1288 + $0xfc] sm:$0xff]
  %v1332 = vld [vmem:[%s1288 + $0x104] sm:$0xf]
  %v1333 = vld [vmem:[%s1288 + $0x108] sm:$0xff]
  %v1334 = vld [vmem:[%s1288 + $0x110] sm:$0xf]
  %v1335 = vld [vmem:[%s1288 + $0x114] sm:$0xff]
  %v1336 = vld [vmem:[%s1288 + $0x11c] sm:$0xf]
  %v1337 = vld [vmem:[%s1288 + $0x120] sm:$0x33]
  %v1338 = vld [vmem:[%s1288 + $0x128] sm:$0x3]
  %v1389 = vunpack.c.l.b16 %v1289
  %v1390 = vunpack.c.h.b16 %v1289
  %v1391 = vunpack.c.l.b16 %v1290
  %v1392 = vunpack.c.l.b16 %v1291
  %v1393 = vunpack.c.h.b16 %v1291
  %v1394 = vunpack.c.l.b16 %v1292
  %v1395 = vunpack.c.l.b16 %v1293
  %v1396 = vunpack.c.h.b16 %v1293
  %v1397 = vunpack.c.l.b16 %v1294
  %v1398 = vunpack.c.l.b16 %v1295
  %v1399 = vunpack.c.h.b16 %v1295
  %v1400 = vunpack.c.l.b16 %v1296
  %v1401 = vunpack.c.l.b16 %v1297
  %v1402 = vunpack.c.h.b16 %v1297
  %v1403 = vunpack.c.l.b16 %v1298
  %v1404 = vunpack.c.l.b16 %v1299
  %v1405 = vunpack.c.h.b16 %v1299
  %v1406 = vunpack.c.l.b16 %v1300
  %v1407 = vunpack.c.l.b16 %v1301
  %v1408 = vunpack.c.h.b16 %v1301
  %v1409 = vunpack.c.l.b16 %v1302
  %v1410 = vunpack.c.l.b16 %v1303
  %v1411 = vunpack.c.h.b16 %v1303
  %v1412 = vunpack.c.l.b16 %v1304
  %v1413 = vunpack.c.l.b16 %v1305
  %v1414 = vunpack.c.h.b16 %v1305
  %v1415 = vunpack.c.l.b16 %v1306
  %v1416 = vunpack.c.l.b16 %v1307
  %v1417 = vunpack.c.h.b16 %v1307
  %v1418 = vunpack.c.l.b16 %v1308
  %v1419 = vunpack.c.l.b16 %v1309
  %v1420 = vunpack.c.h.b16 %v1309
  %v1421 = vunpack.c.l.b16 %v1310
  %v1422 = vunpack.c.l.b16 %v1311
  %v1423 = vunpack.c.h.b16 %v1311
  %v1424 = vunpack.c.l.b16 %v1312
  %v1425 = vunpack.c.l.b16 %v1313
  %v1426 = vunpack.c.h.b16 %v1313
  %v1427 = vunpack.c.l.b16 %v1314
  %v1428 = vunpack.c.l.b16 %v1315
  %v1429 = vunpack.c.h.b16 %v1315
  %v1430 = vunpack.c.l.b16 %v1316
  %v1431 = vunpack.c.l.b16 %v1317
  %v1432 = vunpack.c.h.b16 %v1317
  %v1433 = vunpack.c.l.b16 %v1318
  %v1434 = vunpack.c.l.b16 %v1319
  %v1435 = vunpack.c.h.b16 %v1319
  %v1436 = vunpack.c.l.b16 %v1320
  %v1437 = vunpack.c.l.b16 %v1321
  %v1438 = vunpack.c.h.b16 %v1321
  %v1439 = vunpack.c.l.b16 %v1322
  %v1440 = vunpack.c.l.b16 %v1323
  %v1441 = vunpack.c.h.b16 %v1323
  %v1442 = vunpack.c.l.b16 %v1324
  %v1443 = vunpack.c.l.b16 %v1325
  %v1444 = vunpack.c.h.b16 %v1325
  %v1445 = vunpack.c.l.b16 %v1326
  %v1446 = vunpack.c.l.b16 %v1327
  %v1447 = vunpack.c.h.b16 %v1327
  %v1448 = vunpack.c.l.b16 %v1328
  %v1449 = vunpack.c.l.b16 %v1329
  %v1450 = vunpack.c.h.b16 %v1329
  %v1451 = vunpack.c.l.b16 %v1330
  %v1452 = vunpack.c.l.b16 %v1331
  %v1453 = vunpack.c.h.b16 %v1331
  %v1454 = vunpack.c.l.b16 %v1332
  %v1455 = vunpack.c.l.b16 %v1333
  %v1456 = vunpack.c.h.b16 %v1333
  %v1457 = vunpack.c.l.b16 %v1334
  %v1458 = vunpack.c.l.b16 %v1335
  %v1459 = vunpack.c.h.b16 %v1335
  %v1460 = vunpack.c.l.b16 %v1336
  %v1461 = vunpack.c.l.b16 %v1337
  %v1462 = vunpack.c.h.b16 %v1337
  %v1463 = vunpack.c.l.b16 %v1338
  %v1464 = vpack.c.b16 %v1392, %v1389
  %v1465 = vpack.c.b16 %v1393, %v1390
  %v1466 = vpack.c.b16 %v1394, %v1391
  %v1467 = vpack.c.b16 %v1398, %v1395
  %v1468 = vpack.c.b16 %v1399, %v1396
  %v1469 = vpack.c.b16 %v1400, %v1397
  %v1470 = vpack.c.b16 %v1404, %v1401
  %v1471 = vpack.c.b16 %v1405, %v1402
  %v1472 = vpack.c.b16 %v1406, %v1403
  %v1473 = vpack.c.b16 %v1410, %v1407
  %v1474 = vpack.c.b16 %v1411, %v1408
  %v1475 = vpack.c.b16 %v1412, %v1409
  %v1476 = vpack.c.b16 %v1416, %v1413
  %v1477 = vpack.c.b16 %v1417, %v1414
  %v1478 = vpack.c.b16 %v1418, %v1415
  %v1479 = vpack.c.b16 %v1422, %v1419
  %v1480 = vpack.c.b16 %v1423, %v1420
  %v1481 = vpack.c.b16 %v1424, %v1421
  %v1482 = vpack.c.b16 %v1428, %v1425
  %v1483 = vpack.c.b16 %v1429, %v1426
  %v1484 = vpack.c.b16 %v1430, %v1427
  %v1485 = vpack.c.b16 %v1434, %v1431
  %v1486 = vpack.c.b16 %v1435, %v1432
  %v1487 = vpack.c.b16 %v1436, %v1433
  %v1488 = vpack.c.b16 %v1440, %v1437
  %v1489 = vpack.c.b16 %v1441, %v1438
  %v1490 = vpack.c.b16 %v1442, %v1439
  %v1491 = vpack.c.b16 %v1446, %v1443
  %v1492 = vpack.c.b16 %v1447, %v1444
  %v1493 = vpack.c.b16 %v1448, %v1445
  %v1494 = vpack.c.b16 %v1452, %v1449
  %v1495 = vpack.c.b16 %v1453, %v1450
  %v1496 = vpack.c.b16 %v1454, %v1451
  %v1497 = vpack.c.b16 %v1458, %v1455
  %v1498 = vpack.c.b16 %v1459, %v1456
  %v1499 = vpack.c.b16 %v1460, %v1457
  %v1500 = vpack.c.b16 %v1461, %v1461
  %v1501 = vpack.c.b16 %v1462, %v1462
  %v1502 = vpack.c.b16 %v1463, %v1463
  %v1530 = vsel %vm399, %v1466, 0
  %v1533 = vsel %vm399, %v1469, 0
  %v1536 = vsel %vm399, %v1472, 0
  %v1539 = vsel %vm399, %v1475, 0
  %v1542 = vsel %vm399, %v1478, 0
  %v1545 = vsel %vm399, %v1481, 0
  %v1548 = vsel %vm399, %v1484, 0
  %v1551 = vsel %vm399, %v1487, 0
  %v1554 = vsel %vm399, %v1490, 0
  %v1557 = vsel %vm399, %v1493, 0
  %v1560 = vsel %vm399, %v1496, 0
  %v1563 = vsel %vm399, %v1499, 0
  %v1566 = vsel %vm399, %v1502, 0
  %1568 = vmatprep.subr.bf16.mxu0 0
  %1569 = vmatpush1.bf16.msra.mxu0 %v363
  %1570 = vmatprep.subr.bf16.mxu0 0
  %1571 = vmatpush1.bf16.msra.mxu0 %v364
  %1572 = vmatprep.subr.bf16.mxu0 0
  %1573 = vmatpush1.bf16.msra.mxu0 %v365
  %1574 = vmatprep.subr.bf16.mxu0 0
  %1575 = vmatpush1.bf16.msra.mxu0 %v366
  %1576 = vmatprep.subr.bf16.mxu0 0
  %1577 = vmatpush1.bf16.msra.mxu0 %v367
  %1578 = vmatprep.subr.bf16.mxu0 0
  %1579 = vmatpush1.bf16.msra.mxu0 %v368
  %1580 = vmatprep.subr.bf16.mxu0 0
  %1581 = vmatpush1.bf16.msra.mxu0 %v369
  %1582 = vmatprep.subr.bf16.mxu0 0
  %1583 = vmatpush1.bf16.msra.mxu0 %v370
  %1584 = vmatprep.subr.bf16.mxu0 0
  %1585 = vmatpush1.bf16.msra.mxu0 %v371
  %1586 = vmatprep.subr.bf16.mxu0 0
  %1587 = vmatpush1.bf16.msra.mxu0 %v372
  %1588 = vmatprep.subr.bf16.mxu0 0
  %1589 = vmatpush1.bf16.msra.mxu0 %v373
  %1590 = vmatprep.subr.bf16.mxu0 0
  %1591 = vmatpush1.bf16.msra.mxu0 %v374
  %1592 = vmatprep.subr.bf16.mxu0 0
  %1593 = vmatpush1.bf16.msra.mxu0 %v375
  %1594 = vmatprep.subr.bf16.mxu0 0
  %1595 = vmatpush1.bf16.msra.mxu0 %v376
  %1596 = vmatprep.subr.bf16.mxu0 0
  %1597 = vmatpush1.bf16.msra.mxu0 %v377
  %1598 = vmatprep.subr.bf16.mxu0 0
  %1599 = vmatpush1.bf16.msra.mxu0 %v378
  %1600 = vmatprep.mubr.bf16.mxu0 %v1465
  %1601 = vmatmul.mubr.bf16.gmra.mrb[0].mxu0 %v1464
  %v1602 = vpop.f32.mrb[0].mxu0
  %v1603 = vadd.f32 0.0, %v1602
  %v1604 = vpop.f32.mrb[0].mxu0
  %v1605 = vpop.f32.mrb[0].mxu0
  %v1606 = vadd.f32 0.0, %v1605
  %v1607 = vpop.f32.mrb[0].mxu0
  %1608 = vmatprep.mubr.bf16.mxu0 %v1468
  %1609 = vmatmul.mubr.bf16.gmra.mrb[0].mxu0 %v1467
  %v1610 = vpop.f32.mrb[0].mxu0
  %v1611 = vadd.f32 0.0, %v1610
  %v1612 = vpop.f32.mrb[0].mxu0
  %v1613 = vpop.f32.mrb[0].mxu0
  %v1614 = vadd.f32 0.0, %v1613
  %v1615 = vpop.f32.mrb[0].mxu0
  %1616 = vmatprep.mubr.bf16.mxu0 %v1471
  %1617 = vmatmul.mubr.bf16.gmra.mrb[0].mxu0 %v1470
  %v1618 = vpop.f32.mrb[0].mxu0
  %v1619 = vadd.f32 0.0, %v1618
  %v1620 = vpop.f32.mrb[0].mxu0
  %v1621 = vpop.f32.mrb[0].mxu0
  %v1622 = vadd.f32 0.0, %v1621
  %v1623 = vpop.f32.mrb[0].mxu0
  %1624 = vmatprep.mubr.bf16.mxu0 %v1474
  %1625 = vmatmul.mubr.bf16.gmra.mrb[0].mxu0 %v1473
  %v1626 = vpop.f32.mrb[0].mxu0
  %v1627 = vadd.f32 0.0, %v1626
  %v1628 = vpop.f32.mrb[0].mxu0
  %v1629 = vpop.f32.mrb[0].mxu0
  %v1630 = vadd.f32 0.0, %v1629
  %v1631 = vpop.f32.mrb[0].mxu0
  %1632 = vmatprep.mubr.bf16.mxu0 %v1477
  %1633 = vmatmul.mubr.bf16.gmra.mrb[0].mxu0 %v1476
  %v1634 = vpop.f32.mrb[0].mxu0
  %v1635 = vadd.f32 0.0, %v1634
  %v1636 = vpop.f32.mrb[0].mxu0
  %v1637 = vpop.f32.mrb[0].mxu0
  %v1638 = vadd.f32 0.0, %v1637
  %v1639 = vpop.f32.mrb[0].mxu0
  %1640 = vmatprep.mubr.bf16.mxu0 %v1480
  %1641 = vmatmul.mubr.bf16.gmra.mrb[0].mxu0 %v1479
  %v1642 = vpop.f32.mrb[0].mxu0
  %v1643 = vadd.f32 0.0, %v1642
  %v1644 = vpop.f32.mrb[0].mxu0
  %v1645 = vpop.f32.mrb[0].mxu0
  %v1646 = vadd.f32 0.0, %v1645
  %v1647 = vpop.f32.mrb[0].mxu0
  %1648 = vmatprep.mubr.bf16.mxu0 %v1483
  %1649 = vmatmul.mubr.bf16.gmra.mrb[0].mxu0 %v1482
  %v1650 = vpop.f32.mrb[0].mxu0
  %v1651 = vadd.f32 0.0, %v1650
  %v1652 = vpop.f32.mrb[0].mxu0
  %v1653 = vpop.f32.mrb[0].mxu0
  %v1654 = vadd.f32 0.0, %v1653
  %v1655 = vpop.f32.mrb[0].mxu0
  %1656 = vmatprep.mubr.bf16.mxu0 %v1486
  %1657 = vmatmul.mubr.bf16.gmra.mrb[0].mxu0 %v1485
  %v1658 = vpop.f32.mrb[0].mxu0
  %v1659 = vadd.f32 0.0, %v1658
  %v1660 = vpop.f32.mrb[0].mxu0
  %v1661 = vpop.f32.mrb[0].mxu0
  %v1662 = vadd.f32 0.0, %v1661
  %v1663 = vpop.f32.mrb[0].mxu0
  %1664 = vmatprep.mubr.bf16.mxu0 %v1489
  %1665 = vmatmul.mubr.bf16.gmra.mrb[0].mxu0 %v1488
  %v1666 = vpop.f32.mrb[0].mxu0
  %v1667 = vadd.f32 0.0, %v1666
  %v1668 = vpop.f32.mrb[0].mxu0
  %v1669 = vpop.f32.mrb[0].mxu0
  %v1670 = vadd.f32 0.0, %v1669
  %v1671 = vpop.f32.mrb[0].mxu0
  %1672 = vmatprep.mubr.bf16.mxu0 %v1492
  %1673 = vmatmul.mubr.bf16.gmra.mrb[0].mxu0 %v1491
  %v1674 = vpop.f32.mrb[0].mxu0
  %v1675 = vadd.f32 0.0, %v1674
  %v1676 = vpop.f32.mrb[0].mxu0
  %v1677 = vpop.f32.mrb[0].mxu0
  %v1678 = vadd.f32 0.0, %v1677
  %v1679 = vpop.f32.mrb[0].mxu0
  %1680 = vmatprep.mubr.bf16.mxu0 %v1495
  %1681 = vmatmul.mubr.bf16.gmra.mrb[0].mxu0 %v1494
  %v1682 = vpop.f32.mrb[0].mxu0
  %v1683 = vadd.f32 0.0, %v1682
  %v1684 = vpop.f32.mrb[0].mxu0
  %v1685 = vpop.f32.mrb[0].mxu0
  %v1686 = vadd.f32 0.0, %v1685
  %v1687 = vpop.f32.mrb[0].mxu0
  %1688 = vmatprep.mubr.bf16.mxu0 %v1498
  %1689 = vmatmul.mubr.bf16.gmra.mrb[0].mxu0 %v1497
  %v1690 = vpop.f32.mrb[0].mxu0
  %v1691 = vadd.f32 0.0, %v1690
  %v1692 = vpop.f32.mrb[0].mxu0
  %v1693 = vpop.f32.mrb[0].mxu0
  %v1694 = vadd.f32 0.0, %v1693
  %v1695 = vpop.f32.mrb[0].mxu0
  %1696 = vmatprep.mubr.bf16.mxu0 %v1501
  %1697 = vmatmul.mubr.bf16.gmra.mrb[0].mxu0 %v1500
  %v1698 = vpop.f32.mrb[0].mxu0
  %v1699 = vadd.f32 0.0, %v1698
  %v1700 = vpop.f32.mrb[0].mxu0
  %v1701 = vpop.f32.mrb[0].mxu0
  %v1702 = vpop.f32.mrb[0].mxu0
  %1703 = vdwg.mxu0
  %1704 = vmatprep.subr.bf16.mxu0 0
  %1705 = vmatpush1.bf16.msra.mxu0 %v379
  %1706 = vmatprep.subr.bf16.mxu0 0
  %1707 = vmatpush1.bf16.msra.mxu0 %v380
  %1708 = vmatprep.subr.bf16.mxu0 0
  %1709 = vmatpush1.bf16.msra.mxu0 0
  %1710 = vmatprep.subr.bf16.mxu0 0
  %1711 = vmatpush1.bf16.msra.mxu0 0
  %1712 = vmatprep.subr.bf16.mxu0 0
  %1713 = vmatpush1.bf16.msra.mxu0 0
  %1714 = vmatprep.subr.bf16.mxu0 0
  %1715 = vmatpush1.bf16.msra.mxu0 0
  %1716 = vmatprep.subr.bf16.mxu0 0
  %1717 = vmatpush1.bf16.msra.mxu0 0
  %1718 = vmatprep.subr.bf16.mxu0 0
  %1719 = vmatpush1.bf16.msra.mxu0 0
  %1720 = vmatprep.subr.bf16.mxu0 0
  %1721 = vmatpush1.bf16.msra.mxu0 0
  %1722 = vmatprep.subr.bf16.mxu0 0
  %1723 = vmatpush1.bf16.msra.mxu0 0
  %1724 = vmatprep.subr.bf16.mxu0 0
  %1725 = vmatpush1.bf16.msra.mxu0 0
  %1726 = vmatprep.subr.bf16.mxu0 0
  %1727 = vmatpush1.bf16.msra.mxu0 0
  %1728 = vmatprep.subr.bf16.mxu0 0
  %1729 = vmatpush1.bf16.msra.mxu0 0
  %1730 = vmatprep.subr.bf16.mxu0 0
  %1731 = vmatpush1.bf16.msra.mxu0 0
  %1732 = vmatprep.subr.bf16.mxu0 0
  %1733 = vmatpush1.bf16.msra.mxu0 0
  %1734 = vmatprep.subr.bf16.mxu0 0
  %1735 = vmatpush1.bf16.msra.mxu0 0
  %1736 = vmatprep.mubr.bf16.mxu0 0
  %1737 = vmatmul.mubr.bf16.gmra.mrb[0].mxu0 %v1530
  %v1738 = vpop.f32.mrb[0].mxu0
  %v1739 = vadd.f32 %v1603, %v1738
  %v1740 = vpop.f32.mrb[0].mxu0
  %v1741 = vpop.f32.mrb[0].mxu0
  %v1742 = vadd.f32 %v1606, %v1741
  %v1743 = vpop.f32.mrb[0].mxu0
  %1744 = vmatprep.mubr.bf16.mxu0 0
  %1745 = vmatmul.mubr.bf16.gmra.mrb[0].mxu0 %v1533
  %v1746 = vpop.f32.mrb[0].mxu0
  %v1747 = vadd.f32 %v1611, %v1746
  %v1748 = vpop.f32.mrb[0].mxu0
  %v1749 = vpop.f32.mrb[0].mxu0
  %v1750 = vadd.f32 %v1614, %v1749
  %v1751 = vpop.f32.mrb[0].mxu0
  %1752 = vmatprep.mubr.bf16.mxu0 0
  %1753 = vmatmul.mubr.bf16.gmra.mrb[0].mxu0 %v1536
  %v1754 = vpop.f32.mrb[0].mxu0
  %v1755 = vadd.f32 %v1619, %v1754
  %v1756 = vpop.f32.mrb[0].mxu0
  %v1757 = vpop.f32.mrb[0].mxu0
  %v1758 = vadd.f32 %v1622, %v1757
  %v1759 = vpop.f32.mrb[0].mxu0
  %1760 = vmatprep.mubr.bf16.mxu0 0
  %1761 = vmatmul.mubr.bf16.gmra.mrb[0].mxu0 %v1539
  %v1762 = vpop.f32.mrb[0].mxu0
  %v1763 = vadd.f32 %v1627, %v1762
  %v1764 = vpop.f32.mrb[0].mxu0
  %v1765 = vpop.f32.mrb[0].mxu0
  %v1766 = vadd.f32 %v1630, %v1765
  %v1767 = vpop.f32.mrb[0].mxu0
  %1768 = vmatprep.mubr.bf16.mxu0 0
  %1769 = vmatmul.mubr.bf16.gmra.mrb[0].mxu0 %v1542
  %v1770 = vpop.f32.mrb[0].mxu0
  %v1771 = vadd.f32 %v1635, %v1770
  %v1772 = vpop.f32.mrb[0].mxu0
  %v1773 = vpop.f32.mrb[0].mxu0
  %v1774 = vadd.f32 %v1638, %v1773
  %v1775 = vpop.f32.mrb[0].mxu0
  %1776 = vmatprep.mubr.bf16.mxu0 0
  %1777 = vmatmul.mubr.bf16.gmra.mrb[0].mxu0 %v1545
  %v1778 = vpop.f32.mrb[0].mxu0
  %v1779 = vadd.f32 %v1643, %v1778
  %v1780 = vpop.f32.mrb[0].mxu0
  %v1781 = vpop.f32.mrb[0].mxu0
  %v1782 = vadd.f32 %v1646, %v1781
  %v1783 = vpop.f32.mrb[0].mxu0
  %1784 = vmatprep.mubr.bf16.mxu0 0
  %1785 = vmatmul.mubr.bf16.gmra.mrb[0].mxu0 %v1548
  %v1786 = vpop.f32.mrb[0].mxu0
  %v1787 = vadd.f32 %v1651, %v1786
  %v1788 = vpop.f32.mrb[0].mxu0
  %v1789 = vpop.f32.mrb[0].mxu0
  %v1790 = vadd.f32 %v1654, %v1789
  %v1791 = vpop.f32.mrb[0].mxu0
  %1792 = vmatprep.mubr.bf16.mxu0 0
  %1793 = vmatmul.mubr.bf16.gmra.mrb[0].mxu0 %v1551
  %v1794 = vpop.f32.mrb[0].mxu0
  %v1795 = vadd.f32 %v1659, %v1794
  %v1796 = vpop.f32.mrb[0].mxu0
  %v1797 = vpop.f32.mrb[0].mxu0
  %v1798 = vadd.f32 %v1662, %v1797
  %v1799 = vpop.f32.mrb[0].mxu0
  %1800 = vmatprep.mubr.bf16.mxu0 0
  %1801 = vmatmul.mubr.bf16.gmra.mrb[0].mxu0 %v1554
  %v1802 = vpop.f32.mrb[0].mxu0
  %v1803 = vadd.f32 %v1667, %v1802
  %v1804 = vpop.f32.mrb[0].mxu0
  %v1805 = vpop.f32.mrb[0].mxu0
  %v1806 = vadd.f32 %v1670, %v1805
  %v1807 = vpop.f32.mrb[0].mxu0
  %1808 = vmatprep.mubr.bf16.mxu0 0
  %1809 = vmatmul.mubr.bf16.gmra.mrb[0].mxu0 %v1557
  %v1810 = vpop.f32.mrb[0].mxu0
  %v1811 = vadd.f32 %v1675, %v1810
  %v1812 = vpop.f32.mrb[0].mxu0
  %v1813 = vpop.f32.mrb[0].mxu0
  %v1814 = vadd.f32 %v1678, %v1813
  %v1815 = vpop.f32.mrb[0].mxu0
  %1816 = vmatprep.mubr.bf16.mxu0 0
  %1817 = vmatmul.mubr.bf16.gmra.mrb[0].mxu0 %v1560
  %v1818 = vpop.f32.mrb[0].mxu0
  %v1819 = vadd.f32 %v1683, %v1818
  %v1820 = vpop.f32.mrb[0].mxu0
  %v1821 = vpop.f32.mrb[0].mxu0
  %v1822 = vadd.f32 %v1686, %v1821
  %v1823 = vpop.f32.mrb[0].mxu0
  %1824 = vmatprep.mubr.bf16.mxu0 0
  %1825 = vmatmul.mubr.bf16.gmra.mrb[0].mxu0 %v1563
  %v1826 = vpop.f32.mrb[0].mxu0
  %v1827 = vadd.f32 %v1691, %v1826
  %v1828 = vpop.f32.mrb[0].mxu0
  %v1829 = vpop.f32.mrb[0].mxu0
  %v1830 = vadd.f32 %v1694, %v1829
  %v1831 = vpop.f32.mrb[0].mxu0
  %1832 = vmatprep.mubr.bf16.mxu0 0
  %1833 = vmatmul.mubr.bf16.gmra.mrb[0].mxu0 %v1566
  %v1834 = vpop.f32.mrb[0].mxu0
  %v1835 = vadd.f32 %v1699, %v1834
  %v1836 = vpop.f32.mrb[0].mxu0
  %v1837 = vpop.f32.mrb[0].mxu0
  %v1838 = vpop.f32.mrb[0].mxu0
  %1839 = vdwg.mxu0
  %v1840 = vmax.f32 %v1263, %v1739
  %v1841 = vmax.f32 %v1264, %v1742
  %v1842 = vmax.f32 %v1265, %v1747
  %v1843 = vmax.f32 %v1266, %v1750
  %v1844 = vmax.f32 %v1267, %v1755
  %v1845 = vmax.f32 %v1268, %v1758
  %v1846 = vmax.f32 %v1269, %v1763
  %v1847 = vmax.f32 %v1270, %v1766
  %v1848 = vmax.f32 %v1271, %v1771
  %v1849 = vmax.f32 %v1272, %v1774
  %v1850 = vmax.f32 %v1273, %v1779
  %v1851 = vmax.f32 %v1274, %v1782
  %v1852 = vmax.f32 %v1275, %v1787
  %v1853 = vmax.f32 %v1276, %v1790
  %v1854 = vmax.f32 %v1277, %v1795
  %v1855 = vmax.f32 %v1278, %v1798
  %v1856 = vmax.f32 %v1279, %v1803
  %v1857 = vmax.f32 %v1280, %v1806
  %v1858 = vmax.f32 %v1281, %v1811
  %v1859 = vmax.f32 %v1282, %v1814
  %v1860 = vmax.f32 %v1283, %v1819
  %v1861 = vmax.f32 %v1284, %v1822
  %v1862 = vmax.f32 %v1285, %v1827
  %v1863 = vmax.f32 %v1286, %v1830
  %v1864 = vmax.f32 %v1287, %v1835
  %s1865 = scalar_lea.vmem %s0, 900
  %v1866 = vld [vmem:[%s1865] sm:$0xff]
  %v1867 = vld [vmem:[%s1865 + $0x8] sm:$0xf]
  %v1868 = vld [vmem:[%s1865 + $0xc] sm:$0xff]
  %v1869 = vld [vmem:[%s1865 + $0x14] sm:$0xf]
  %v1870 = vld [vmem:[%s1865 + $0x18] sm:$0xff]
  %v1871 = vld [vmem:[%s1865 + $0x20] sm:$0xf]
  %v1872 = vld [vmem:[%s1865 + $0x24] sm:$0xff]
  %v1873 = vld [vmem:[%s1865 + $0x2c] sm:$0xf]
  %v1874 = vld [vmem:[%s1865 + $0x30] sm:$0xff]
  %v1875 = vld [vmem:[%s1865 + $0x38] sm:$0xf]
  %v1876 = vld [vmem:[%s1865 + $0x3c] sm:$0xff]
  %v1877 = vld [vmem:[%s1865 + $0x44] sm:$0xf]
  %v1878 = vld [vmem:[%s1865 + $0x48] sm:$0xff]
  %v1879 = vld [vmem:[%s1865 + $0x50] sm:$0xf]
  %v1880 = vld [vmem:[%s1865 + $0x54] sm:$0xff]
  %v1881 = vld [vmem:[%s1865 + $0x5c] sm:$0xf]
  %v1882 = vld [vmem:[%s1865 + $0x60] sm:$0xff]
  %v1883 = vld [vmem:[%s1865 + $0x68] sm:$0xf]
  %v1884 = vld [vmem:[%s1865 + $0x6c] sm:$0xff]
  %v1885 = vld [vmem:[%s1865 + $0x74] sm:$0xf]
  %v1886 = vld [vmem:[%s1865 + $0x78] sm:$0xff]
  %v1887 = vld [vmem:[%s1865 + $0x80] sm:$0xf]
  %v1888 = vld [vmem:[%s1865 + $0x84] sm:$0xff]
  %v1889 = vld [vmem:[%s1865 + $0x8c] sm:$0xf]
  %v1890 = vld [vmem:[%s1865 + $0x90] sm:$0xff]
  %v1891 = vld [vmem:[%s1865 + $0x98] sm:$0xf]
  %v1892 = vld [vmem:[%s1865 + $0x9c] sm:$0xff]
  %v1893 = vld [vmem:[%s1865 + $0xa4] sm:$0xf]
  %v1894 = vld [vmem:[%s1865 + $0xa8] sm:$0xff]
  %v1895 = vld [vmem:[%s1865 + $0xb0] sm:$0xf]
  %v1896 = vld [vmem:[%s1865 + $0xb4] sm:$0xff]
  %v1897 = vld [vmem:[%s1865 + $0xbc] sm:$0xf]
  %v1898 = vld [vmem:[%s1865 + $0xc0] sm:$0xff]
  %v1899 = vld [vmem:[%s1865 + $0xc8] sm:$0xf]
  %v1900 = vld [vmem:[%s1865 + $0xcc] sm:$0xff]
  %v1901 = vld [vmem:[%s1865 + $0xd4] sm:$0xf]
  %v1902 = vld [vmem:[%s1865 + $0xd8] sm:$0xff]
  %v1903 = vld [vmem:[%s1865 + $0xe0] sm:$0xf]
  %v1904 = vld [vmem:[%s1865 + $0xe4] sm:$0xff]
  %v1905 = vld [vmem:[%s1865 + $0xec] sm:$0xf]
  %v1906 = vld [vmem:[%s1865 + $0xf0] sm:$0xff]
  %v1907 = vld [vmem:[%s1865 + $0xf8] sm:$0xf]
  %v1908 = vld [vmem:[%s1865 + $0xfc] sm:$0xff]
  %v1909 = vld [vmem:[%s1865 + $0x104] sm:$0xf]
  %v1910 = vld [vmem:[%s1865 + $0x108] sm:$0xff]
  %v1911 = vld [vmem:[%s1865 + $0x110] sm:$0xf]
  %v1912 = vld [vmem:[%s1865 + $0x114] sm:$0xff]
  %v1913 = vld [vmem:[%s1865 + $0x11c] sm:$0xf]
  %v1914 = vld [vmem:[%s1865 + $0x120] sm:$0x33]
  %v1915 = vld [vmem:[%s1865 + $0x128] sm:$0x3]
  %v1966 = vunpack.c.l.b16 %v1866
  %v1967 = vunpack.c.h.b16 %v1866
  %v1968 = vunpack.c.l.b16 %v1867
  %v1969 = vunpack.c.l.b16 %v1868
  %v1970 = vunpack.c.h.b16 %v1868
  %v1971 = vunpack.c.l.b16 %v1869
  %v1972 = vunpack.c.l.b16 %v1870
  %v1973 = vunpack.c.h.b16 %v1870
  %v1974 = vunpack.c.l.b16 %v1871
  %v1975 = vunpack.c.l.b16 %v1872
  %v1976 = vunpack.c.h.b16 %v1872
  %v1977 = vunpack.c.l.b16 %v1873
  %v1978 = vunpack.c.l.b16 %v1874
  %v1979 = vunpack.c.h.b16 %v1874
  %v1980 = vunpack.c.l.b16 %v1875
  %v1981 = vunpack.c.l.b16 %v1876
  %v1982 = vunpack.c.h.b16 %v1876
  %v1983 = vunpack.c.l.b16 %v1877
  %v1984 = vunpack.c.l.b16 %v1878
  %v1985 = vunpack.c.h.b16 %v1878
  %v1986 = vunpack.c.l.b16 %v1879
  %v1987 = vunpack.c.l.b16 %v1880
  %v1988 = vunpack.c.h.b16 %v1880
  %v1989 = vunpack.c.l.b16 %v1881
  %v1990 = vunpack.c.l.b16 %v1882
  %v1991 = vunpack.c.h.b16 %v1882
  %v1992 = vunpack.c.l.b16 %v1883
  %v1993 = vunpack.c.l.b16 %v1884
  %v1994 = vunpack.c.h.b16 %v1884
  %v1995 = vunpack.c.l.b16 %v1885
  %v1996 = vunpack.c.l.b16 %v1886
  %v1997 = vunpack.c.h.b16 %v1886
  %v1998 = vunpack.c.l.b16 %v1887
  %v1999 = vunpack.c.l.b16 %v1888
  %v2000 = vunpack.c.h.b16 %v1888
  %v2001 = vunpack.c.l.b16 %v1889
  %v2002 = vunpack.c.l.b16 %v1890
  %v2003 = vunpack.c.h.b16 %v1890
  %v2004 = vunpack.c.l.b16 %v1891
  %v2005 = vunpack.c.l.b16 %v1892
  %v2006 = vunpack.c.h.b16 %v1892
  %v2007 = vunpack.c.l.b16 %v1893
  %v2008 = vunpack.c.l.b16 %v1894
  %v2009 = vunpack.c.h.b16 %v1894
  %v2010 = vunpack.c.l.b16 %v1895
  %v2011 = vunpack.c.l.b16 %v1896
  %v2012 = vunpack.c.h.b16 %v1896
  %v2013 = vunpack.c.l.b16 %v1897
  %v2014 = vunpack.c.l.b16 %v1898
  %v2015 = vunpack.c.h.b16 %v1898
  %v2016 = vunpack.c.l.b16 %v1899
  %v2017 = vunpack.c.l.b16 %v1900
  %v2018 = vunpack.c.h.b16 %v1900
  %v2019 = vunpack.c.l.b16 %v1901
  %v2020 = vunpack.c.l.b16 %v1902
  %v2021 = vunpack.c.h.b16 %v1902
  %v2022 = vunpack.c.l.b16 %v1903
  %v2023 = vunpack.c.l.b16 %v1904
  %v2024 = vunpack.c.h.b16 %v1904
  %v2025 = vunpack.c.l.b16 %v1905
  %v2026 = vunpack.c.l.b16 %v1906
  %v2027 = vunpack.c.h.b16 %v1906
  %v2028 = vunpack.c.l.b16 %v1907
  %v2029 = vunpack.c.l.b16 %v1908
  %v2030 = vunpack.c.h.b16 %v1908
  %v2031 = vunpack.c.l.b16 %v1909
  %v2032 = vunpack.c.l.b16 %v1910
  %v2033 = vunpack.c.h.b16 %v1910
  %v2034 = vunpack.c.l.b16 %v1911
  %v2035 = vunpack.c.l.b16 %v1912
  %v2036 = vunpack.c.h.b16 %v1912
  %v2037 = vunpack.c.l.b16 %v1913
  %v2038 = vunpack.c.l.b16 %v1914
  %v2039 = vunpack.c.h.b16 %v1914
  %v2040 = vunpack.c.l.b16 %v1915
  %v2041 = vpack.c.b16 %v1969, %v1966
  %v2042 = vpack.c.b16 %v1970, %v1967
  %v2043 = vpack.c.b16 %v1971, %v1968
  %v2044 = vpack.c.b16 %v1975, %v1972
  %v2045 = vpack.c.b16 %v1976, %v1973
  %v2046 = vpack.c.b16 %v1977, %v1974
  %v2047 = vpack.c.b16 %v1981, %v1978
  %v2048 = vpack.c.b16 %v1982, %v1979
  %v2049 = vpack.c.b16 %v1983, %v1980
  %v2050 = vpack.c.b16 %v1987, %v1984
  %v2051 = vpack.c.b16 %v1988, %v1985
  %v2052 = vpack.c.b16 %v1989, %v1986
  %v2053 = vpack.c.b16 %v1993, %v1990
  %v2054 = vpack.c.b16 %v1994, %v1991
  %v2055 = vpack.c.b16 %v1995, %v1992
  %v2056 = vpack.c.b16 %v1999, %v1996
  %v2057 = vpack.c.b16 %v2000, %v1997
  %v2058 = vpack.c.b16 %v2001, %v1998
  %v2059 = vpack.c.b16 %v2005, %v2002
  %v2060 = vpack.c.b16 %v2006, %v2003
  %v2061 = vpack.c.b16 %v2007, %v2004
  %v2062 = vpack.c.b16 %v2011, %v2008
  %v2063 = vpack.c.b16 %v2012, %v2009
  %v2064 = vpack.c.b16 %v2013, %v2010
  %v2065 = vpack.c.b16 %v2017, %v2014
  %v2066 = vpack.c.b16 %v2018, %v2015
  %v2067 = vpack.c.b16 %v2019, %v2016
  %v2068 = vpack.c.b16 %v2023, %v2020
  %v2069 = vpack.c.b16 %v2024, %v2021
  %v2070 = vpack.c.b16 %v2025, %v2022
  %v2071 = vpack.c.b16 %v2029, %v2026
  %v2072 = vpack.c.b16 %v2030, %v2027
  %v2073 = vpack.c.b16 %v2031, %v2028
  %v2074 = vpack.c.b16 %v2035, %v2032
  %v2075 = vpack.c.b16 %v2036, %v2033
  %v2076 = vpack.c.b16 %v2037, %v2034
  %v2077 = vpack.c.b16 %v2038, %v2038
  %v2078 = vpack.c.b16 %v2039, %v2039
  %v2079 = vpack.c.b16 %v2040, %v2040
  %v2107 = vsel %vm399, %v2043, 0
  %v2110 = vsel %vm399, %v2046, 0
  %v2113 = vsel %vm399, %v2049, 0
  %v2116 = vsel %vm399, %v2052, 0
  %v2119 = vsel %vm399, %v2055, 0
  %v2122 = vsel %vm399, %v2058, 0
  %v2125 = vsel %vm399, %v2061, 0
  %v2128 = vsel %vm399, %v2064, 0
  %v2131 = vsel %vm399, %v2067, 0
  %v2134 = vsel %vm399, %v2070, 0
  %v2137 = vsel %vm399, %v2073, 0
  %v2140 = vsel %vm399, %v2076, 0
  %v2143 = vsel %vm399, %v2079, 0
  %2145 = vmatprep.subr.bf16.mxu0 0
  %2146 = vmatpush1.bf16.msra.mxu0 %v363
  %2147 = vmatprep.subr.bf16.mxu0 0
  %2148 = vmatpush1.bf16.msra.mxu0 %v364
  %2149 = vmatprep.subr.bf16.mxu0 0
  %2150 = vmatpush1.bf16.msra.mxu0 %v365
  %2151 = vmatprep.subr.bf16.mxu0 0
  %2152 = vmatpush1.bf16.msra.mxu0 %v366
  %2153 = vmatprep.subr.bf16.mxu0 0
  %2154 = vmatpush1.bf16.msra.mxu0 %v367
  %2155 = vmatprep.subr.bf16.mxu0 0
  %2156 = vmatpush1.bf16.msra.mxu0 %v368
  %2157 = vmatprep.subr.bf16.mxu0 0
  %2158 = vmatpush1.bf16.msra.mxu0 %v369
  %2159 = vmatprep.subr.bf16.mxu0 0
  %2160 = vmatpush1.bf16.msra.mxu0 %v370
  %2161 = vmatprep.subr.bf16.mxu0 0
  %2162 = vmatpush1.bf16.msra.mxu0 %v371
  %2163 = vmatprep.subr.bf16.mxu0 0
  %2164 = vmatpush1.bf16.msra.mxu0 %v372
  %2165 = vmatprep.subr.bf16.mxu0 0
  %2166 = vmatpush1.bf16.msra.mxu0 %v373
  %2167 = vmatprep.subr.bf16.mxu0 0
  %2168 = vmatpush1.bf16.msra.mxu0 %v374
  %2169 = vmatprep.subr.bf16.mxu0 0
  %2170 = vmatpush1.bf16.msra.mxu0 %v375
  %2171 = vmatprep.subr.bf16.mxu0 0
  %2172 = vmatpush1.bf16.msra.mxu0 %v376
  %2173 = vmatprep.subr.bf16.mxu0 0
  %2174 = vmatpush1.bf16.msra.mxu0 %v377
  %2175 = vmatprep.subr.bf16.mxu0 0
  %2176 = vmatpush1.bf16.msra.mxu0 %v378
  %2177 = vmatprep.mubr.bf16.mxu0 %v2042
  %2178 = vmatmul.mubr.bf16.gmra.mrb[0].mxu0 %v2041
  %v2179 = vpop.f32.mrb[0].mxu0
  %v2180 = vadd.f32 0.0, %v2179
  %v2181 = vpop.f32.mrb[0].mxu0
  %v2182 = vpop.f32.mrb[0].mxu0
  %v2183 = vadd.f32 0.0, %v2182
  %v2184 = vpop.f32.mrb[0].mxu0
  %2185 = vmatprep.mubr.bf16.mxu0 %v2045
  %2186 = vmatmul.mubr.bf16.gmra.mrb[0].mxu0 %v2044
  %v2187 = vpop.f32.mrb[0].mxu0
  %v2188 = vadd.f32 0.0, %v2187
  %v2189 = vpop.f32.mrb[0].mxu0
  %v2190 = vpop.f32.mrb[0].mxu0
  %v2191 = vadd.f32 0.0, %v2190
  %v2192 = vpop.f32.mrb[0].mxu0
  %2193 = vmatprep.mubr.bf16.mxu0 %v2048
  %2194 = vmatmul.mubr.bf16.gmra.mrb[0].mxu0 %v2047
  %v2195 = vpop.f32.mrb[0].mxu0
  %v2196 = vadd.f32 0.0, %v2195
  %v2197 = vpop.f32.mrb[0].mxu0
  %v2198 = vpop.f32.mrb[0].mxu0
  %v2199 = vadd.f32 0.0, %v2198
  %v2200 = vpop.f32.mrb[0].mxu0
  %2201 = vmatprep.mubr.bf16.mxu0 %v2051
  %2202 = vmatmul.mubr.bf16.gmra.mrb[0].mxu0 %v2050
  %v2203 = vpop.f32.mrb[0].mxu0
  %v2204 = vadd.f32 0.0, %v2203
  %v2205 = vpop.f32.mrb[0].mxu0
  %v2206 = vpop.f32.mrb[0].mxu0
  %v2207 = vadd.f32 0.0, %v2206
  %v2208 = vpop.f32.mrb[0].mxu0
  %2209 = vmatprep.mubr.bf16.mxu0 %v2054
  %2210 = vmatmul.mubr.bf16.gmra.mrb[0].mxu0 %v2053
  %v2211 = vpop.f32.mrb[0].mxu0
  %v2212 = vadd.f32 0.0, %v2211
  %v2213 = vpop.f32.mrb[0].mxu0
  %v2214 = vpop.f32.mrb[0].mxu0
  %v2215 = vadd.f32 0.0, %v2214
  %v2216 = vpop.f32.mrb[0].mxu0
  %2217 = vmatprep.mubr.bf16.mxu0 %v2057
  %2218 = vmatmul.mubr.bf16.gmra.mrb[0].mxu0 %v2056
  %v2219 = vpop.f32.mrb[0].mxu0
  %v2220 = vadd.f32 0.0, %v2219
  %v2221 = vpop.f32.mrb[0].mxu0
  %v2222 = vpop.f32.mrb[0].mxu0
  %v2223 = vadd.f32 0.0, %v2222
  %v2224 = vpop.f32.mrb[0].mxu0
  %2225 = vmatprep.mubr.bf16.mxu0 %v2060
  %2226 = vmatmul.mubr.bf16.gmra.mrb[0].mxu0 %v2059
  %v2227 = vpop.f32.mrb[0].mxu0
  %v2228 = vadd.f32 0.0, %v2227
  %v2229 = vpop.f32.mrb[0].mxu0
  %v2230 = vpop.f32.mrb[0].mxu0
  %v2231 = vadd.f32 0.0, %v2230
  %v2232 = vpop.f32.mrb[0].mxu0
  %2233 = vmatprep.mubr.bf16.mxu0 %v2063
  %2234 = vmatmul.mubr.bf16.gmra.mrb[0].mxu0 %v2062
  %v2235 = vpop.f32.mrb[0].mxu0
  %v2236 = vadd.f32 0.0, %v2235
  %v2237 = vpop.f32.mrb[0].mxu0
  %v2238 = vpop.f32.mrb[0].mxu0
  %v2239 = vadd.f32 0.0, %v2238
  %v2240 = vpop.f32.mrb[0].mxu0
  %2241 = vmatprep.mubr.bf16.mxu0 %v2066
  %2242 = vmatmul.mubr.bf16.gmra.mrb[0].mxu0 %v2065
  %v2243 = vpop.f32.mrb[0].mxu0
  %v2244 = vadd.f32 0.0, %v2243
  %v2245 = vpop.f32.mrb[0].mxu0
  %v2246 = vpop.f32.mrb[0].mxu0
  %v2247 = vadd.f32 0.0, %v2246
  %v2248 = vpop.f32.mrb[0].mxu0
  %2249 = vmatprep.mubr.bf16.mxu0 %v2069
  %2250 = vmatmul.mubr.bf16.gmra.mrb[0].mxu0 %v2068
  %v2251 = vpop.f32.mrb[0].mxu0
  %v2252 = vadd.f32 0.0, %v2251
  %v2253 = vpop.f32.mrb[0].mxu0
  %v2254 = vpop.f32.mrb[0].mxu0
  %v2255 = vadd.f32 0.0, %v2254
  %v2256 = vpop.f32.mrb[0].mxu0
  %2257 = vmatprep.mubr.bf16.mxu0 %v2072
  %2258 = vmatmul.mubr.bf16.gmra.mrb[0].mxu0 %v2071
  %v2259 = vpop.f32.mrb[0].mxu0
  %v2260 = vadd.f32 0.0, %v2259
  %v2261 = vpop.f32.mrb[0].mxu0
  %v2262 = vpop.f32.mrb[0].mxu0
  %v2263 = vadd.f32 0.0, %v2262
  %v2264 = vpop.f32.mrb[0].mxu0
  %2265 = vmatprep.mubr.bf16.mxu0 %v2075
  %2266 = vmatmul.mubr.bf16.gmra.mrb[0].mxu0 %v2074
  %v2267 = vpop.f32.mrb[0].mxu0
  %v2268 = vadd.f32 0.0, %v2267
  %v2269 = vpop.f32.mrb[0].mxu0
  %v2270 = vpop.f32.mrb[0].mxu0
  %v2271 = vadd.f32 0.0, %v2270
  %v2272 = vpop.f32.mrb[0].mxu0
  %2273 = vmatprep.mubr.bf16.mxu0 %v2078
  %2274 = vmatmul.mubr.bf16.gmra.mrb[0].mxu0 %v2077
  %v2275 = vpop.f32.mrb[0].mxu0
  %v2276 = vadd.f32 0.0, %v2275
  %v2277 = vpop.f32.mrb[0].mxu0
  %v2278 = vpop.f32.mrb[0].mxu0
  %v2279 = vpop.f32.mrb[0].mxu0
  %2280 = vdwg.mxu0
  %2281 = vmatprep.subr.bf16.mxu0 0
  %2282 = vmatpush1.bf16.msra.mxu0 %v379
  %2283 = vmatprep.subr.bf16.mxu0 0
  %2284 = vmatpush1.bf16.msra.mxu0 %v380
  %2285 = vmatprep.subr.bf16.mxu0 0
  %2286 = vmatpush1.bf16.msra.mxu0 0
  %2287 = vmatprep.subr.bf16.mxu0 0
  %2288 = vmatpush1.bf16.msra.mxu0 0
  %2289 = vmatprep.subr.bf16.mxu0 0
  %2290 = vmatpush1.bf16.msra.mxu0 0
  %2291 = vmatprep.subr.bf16.mxu0 0
  %2292 = vmatpush1.bf16.msra.mxu0 0
  %2293 = vmatprep.subr.bf16.mxu0 0
  %2294 = vmatpush1.bf16.msra.mxu0 0
  %2295 = vmatprep.subr.bf16.mxu0 0
  %2296 = vmatpush1.bf16.msra.mxu0 0
  %2297 = vmatprep.subr.bf16.mxu0 0
  %2298 = vmatpush1.bf16.msra.mxu0 0
  %2299 = vmatprep.subr.bf16.mxu0 0
  %2300 = vmatpush1.bf16.msra.mxu0 0
  %2301 = vmatprep.subr.bf16.mxu0 0
  %2302 = vmatpush1.bf16.msra.mxu0 0
  %2303 = vmatprep.subr.bf16.mxu0 0
  %2304 = vmatpush1.bf16.msra.mxu0 0
  %2305 = vmatprep.subr.bf16.mxu0 0
  %2306 = vmatpush1.bf16.msra.mxu0 0
  %2307 = vmatprep.subr.bf16.mxu0 0
  %2308 = vmatpush1.bf16.msra.mxu0 0
  %2309 = vmatprep.subr.bf16.mxu0 0
  %2310 = vmatpush1.bf16.msra.mxu0 0
  %2311 = vmatprep.subr.bf16.mxu0 0
  %2312 = vmatpush1.bf16.msra.mxu0 0
  %2313 = vmatprep.mubr.bf16.mxu0 0
  %2314 = vmatmul.mubr.bf16.gmra.mrb[0].mxu0 %v2107
  %v2315 = vpop.f32.mrb[0].mxu0
  %v2316 = vadd.f32 %v2180, %v2315
  %v2317 = vpop.f32.mrb[0].mxu0
  %v2318 = vpop.f32.mrb[0].mxu0
  %v2319 = vadd.f32 %v2183, %v2318
  %v2320 = vpop.f32.mrb[0].mxu0
  %2321 = vmatprep.mubr.bf16.mxu0 0
  %2322 = vmatmul.mubr.bf16.gmra.mrb[0].mxu0 %v2110
  %v2323 = vpop.f32.mrb[0].mxu0
  %v2324 = vadd.f32 %v2188, %v2323
  %v2325 = vpop.f32.mrb[0].mxu0
  %v2326 = vpop.f32.mrb[0].mxu0
  %v2327 = vadd.f32 %v2191, %v2326
  %v2328 = vpop.f32.mrb[0].mxu0
  %2329 = vmatprep.mubr.bf16.mxu0 0
  %2330 = vmatmul.mubr.bf16.gmra.mrb[0].mxu0 %v2113
  %v2331 = vpop.f32.mrb[0].mxu0
  %v2332 = vadd.f32 %v2196, %v2331
  %v2333 = vpop.f32.mrb[0].mxu0
  %v2334 = vpop.f32.mrb[0].mxu0
  %v2335 = vadd.f32 %v2199, %v2334
  %v2336 = vpop.f32.mrb[0].mxu0
  %2337 = vmatprep.mubr.bf16.mxu0 0
  %2338 = vmatmul.mubr.bf16.gmra.mrb[0].mxu0 %v2116
  %v2339 = vpop.f32.mrb[0].mxu0
  %v2340 = vadd.f32 %v2204, %v2339
  %v2341 = vpop.f32.mrb[0].mxu0
  %v2342 = vpop.f32.mrb[0].mxu0
  %v2343 = vadd.f32 %v2207, %v2342
  %v2344 = vpop.f32.mrb[0].mxu0
  %2345 = vmatprep.mubr.bf16.mxu0 0
  %2346 = vmatmul.mubr.bf16.gmra.mrb[0].mxu0 %v2119
  %v2347 = vpop.f32.mrb[0].mxu0
  %v2348 = vadd.f32 %v2212, %v2347
  %v2349 = vpop.f32.mrb[0].mxu0
  %v2350 = vpop.f32.mrb[0].mxu0
  %v2351 = vadd.f32 %v2215, %v2350
  %v2352 = vpop.f32.mrb[0].mxu0
  %2353 = vmatprep.mubr.bf16.mxu0 0
  %2354 = vmatmul.mubr.bf16.gmra.mrb[0].mxu0 %v2122
  %v2355 = vpop.f32.mrb[0].mxu0
  %v2356 = vadd.f32 %v2220, %v2355
  %v2357 = vpop.f32.mrb[0].mxu0
  %v2358 = vpop.f32.mrb[0].mxu0
  %v2359 = vadd.f32 %v2223, %v2358
  %v2360 = vpop.f32.mrb[0].mxu0
  %2361 = vmatprep.mubr.bf16.mxu0 0
  %2362 = vmatmul.mubr.bf16.gmra.mrb[0].mxu0 %v2125
  %v2363 = vpop.f32.mrb[0].mxu0
  %v2364 = vadd.f32 %v2228, %v2363
  %v2365 = vpop.f32.mrb[0].mxu0
  %v2366 = vpop.f32.mrb[0].mxu0
  %v2367 = vadd.f32 %v2231, %v2366
  %v2368 = vpop.f32.mrb[0].mxu0
  %2369 = vmatprep.mubr.bf16.mxu0 0
  %2370 = vmatmul.mubr.bf16.gmra.mrb[0].mxu0 %v2128
  %v2371 = vpop.f32.mrb[0].mxu0
  %v2372 = vadd.f32 %v2236, %v2371
  %v2373 = vpop.f32.mrb[0].mxu0
  %v2374 = vpop.f32.mrb[0].mxu0
  %v2375 = vadd.f32 %v2239, %v2374
  %v2376 = vpop.f32.mrb[0].mxu0
  %2377 = vmatprep.mubr.bf16.mxu0 0
  %2378 = vmatmul.mubr.bf16.gmra.mrb[0].mxu0 %v2131
  %v2379 = vpop.f32.mrb[0].mxu0
  %v2380 = vadd.f32 %v2244, %v2379
  %v2381 = vpop.f32.mrb[0].mxu0
  %v2382 = vpop.f32.mrb[0].mxu0
  %v2383 = vadd.f32 %v2247, %v2382
  %v2384 = vpop.f32.mrb[0].mxu0
  %2385 = vmatprep.mubr.bf16.mxu0 0
  %2386 = vmatmul.mubr.bf16.gmra.mrb[0].mxu0 %v2134
  %v2387 = vpop.f32.mrb[0].mxu0
  %v2388 = vadd.f32 %v2252, %v2387
  %v2389 = vpop.f32.mrb[0].mxu0
  %v2390 = vpop.f32.mrb[0].mxu0
  %v2391 = vadd.f32 %v2255, %v2390
  %v2392 = vpop.f32.mrb[0].mxu0
  %2393 = vmatprep.mubr.bf16.mxu0 0
  %2394 = vmatmul.mubr.bf16.gmra.mrb[0].mxu0 %v2137
  %v2395 = vpop.f32.mrb[0].mxu0
  %v2396 = vadd.f32 %v2260, %v2395
  %v2397 = vpop.f32.mrb[0].mxu0
  %v2398 = vpop.f32.mrb[0].mxu0
  %v2399 = vadd.f32 %v2263, %v2398
  %v2400 = vpop.f32.mrb[0].mxu0
  %2401 = vmatprep.mubr.bf16.mxu0 0
  %2402 = vmatmul.mubr.bf16.gmra.mrb[0].mxu0 %v2140
  %v2403 = vpop.f32.mrb[0].mxu0
  %v2404 = vadd.f32 %v2268, %v2403
  %v2405 = vpop.f32.mrb[0].mxu0
  %v2406 = vpop.f32.mrb[0].mxu0
  %v2407 = vadd.f32 %v2271, %v2406
  %v2408 = vpop.f32.mrb[0].mxu0
  %2409 = vmatprep.mubr.bf16.mxu0 0
  %2410 = vmatmul.mubr.bf16.gmra.mrb[0].mxu0 %v2143
  %v2411 = vpop.f32.mrb[0].mxu0
  %v2412 = vadd.f32 %v2276, %v2411
  %v2413 = vpop.f32.mrb[0].mxu0
  %v2414 = vpop.f32.mrb[0].mxu0
  %v2415 = vpop.f32.mrb[0].mxu0
  %2416 = vdwg.mxu0
  %v2417 = vmax.f32 %v1840, %v2316
  %v2418 = vmax.f32 %v1841, %v2319
  %v2419 = vmax.f32 %v1842, %v2324
  %v2420 = vmax.f32 %v1843, %v2327
  %v2421 = vmax.f32 %v1844, %v2332
  %v2422 = vmax.f32 %v1845, %v2335
  %v2423 = vmax.f32 %v1846, %v2340
  %v2424 = vmax.f32 %v1847, %v2343
  %v2425 = vmax.f32 %v1848, %v2348
  %v2426 = vmax.f32 %v1849, %v2351
  %v2427 = vmax.f32 %v1850, %v2356
  %v2428 = vmax.f32 %v1851, %v2359
  %v2429 = vmax.f32 %v1852, %v2364
  %v2430 = vmax.f32 %v1853, %v2367
  %v2431 = vmax.f32 %v1854, %v2372
  %v2432 = vmax.f32 %v1855, %v2375
  %v2433 = vmax.f32 %v1856, %v2380
  %v2434 = vmax.f32 %v1857, %v2383
  %v2435 = vmax.f32 %v1858, %v2388
  %v2436 = vmax.f32 %v1859, %v2391
  %v2437 = vmax.f32 %v1860, %v2396
  %v2438 = vmax.f32 %v1861, %v2399
  %v2439 = vmax.f32 %v1862, %v2404
  %v2440 = vmax.f32 %v1863, %v2407
  %v2441 = vmax.f32 %v1864, %v2412
  %v2442 = vld [vmem:[%s2] sm:$0x1]
  %v2444 = vlaneseq
  %v2445 = vshrl.u32 %v2444, 7
  %v2446 = vsub.s32 0, %v2445
  %v2447 = vrot.slane %v2442, %v2446
  %v2449 = vadd.f32 %v2417, %v2447
  %v2450 = vadd.f32 %v2418, %v2447
  %v2451 = vadd.f32 %v2419, %v2447
  %v2452 = vadd.f32 %v2420, %v2447
  %v2453 = vadd.f32 %v2421, %v2447
  %v2454 = vadd.f32 %v2422, %v2447
  %v2455 = vadd.f32 %v2423, %v2447
  %v2456 = vadd.f32 %v2424, %v2447
  %v2457 = vadd.f32 %v2425, %v2447
  %v2458 = vadd.f32 %v2426, %v2447
  %v2459 = vadd.f32 %v2427, %v2447
  %v2460 = vadd.f32 %v2428, %v2447
  %v2461 = vadd.f32 %v2429, %v2447
  %v2462 = vadd.f32 %v2430, %v2447
  %v2463 = vadd.f32 %v2431, %v2447
  %v2464 = vadd.f32 %v2432, %v2447
  %v2465 = vadd.f32 %v2433, %v2447
  %v2466 = vadd.f32 %v2434, %v2447
  %v2467 = vadd.f32 %v2435, %v2447
  %v2468 = vadd.f32 %v2436, %v2447
  %v2469 = vadd.f32 %v2437, %v2447
  %v2470 = vadd.f32 %v2438, %v2447
  %v2471 = vadd.f32 %v2439, %v2447
  %v2472 = vadd.f32 %v2440, %v2447
  %v2473 = vadd.f32 %v2441, %v2447
  %v2474 = vmax.f32 %v2449, 0.0
  %v2475 = vmax.f32 %v2450, 0.0
  %v2476 = vmax.f32 %v2451, 0.0
  %v2477 = vmax.f32 %v2452, 0.0
  %v2478 = vmax.f32 %v2453, 0.0
  %v2479 = vmax.f32 %v2454, 0.0
  %v2480 = vmax.f32 %v2455, 0.0
  %v2481 = vmax.f32 %v2456, 0.0
  %v2482 = vmax.f32 %v2457, 0.0
  %v2483 = vmax.f32 %v2458, 0.0
  %v2484 = vmax.f32 %v2459, 0.0
  %v2485 = vmax.f32 %v2460, 0.0
  %v2486 = vmax.f32 %v2461, 0.0
  %v2487 = vmax.f32 %v2462, 0.0
  %v2488 = vmax.f32 %v2463, 0.0
  %v2489 = vmax.f32 %v2464, 0.0
  %v2490 = vmax.f32 %v2465, 0.0
  %v2491 = vmax.f32 %v2466, 0.0
  %v2492 = vmax.f32 %v2467, 0.0
  %v2493 = vmax.f32 %v2468, 0.0
  %v2494 = vmax.f32 %v2469, 0.0
  %v2495 = vmax.f32 %v2470, 0.0
  %v2496 = vmax.f32 %v2471, 0.0
  %v2497 = vmax.f32 %v2472, 0.0
  %v2498 = vmax.f32 %v2473, 0.0
  %v2499 = vpack.c.bf16 %v2475, %v2474
  %v2500 = vpack.c.bf16 %v2477, %v2476
  %v2501 = vpack.c.bf16 %v2479, %v2478
  %v2502 = vpack.c.bf16 %v2481, %v2480
  %v2503 = vpack.c.bf16 %v2483, %v2482
  %v2504 = vpack.c.bf16 %v2485, %v2484
  %v2505 = vpack.c.bf16 %v2487, %v2486
  %v2506 = vpack.c.bf16 %v2489, %v2488
  %v2507 = vpack.c.bf16 %v2491, %v2490
  %v2508 = vpack.c.bf16 %v2493, %v2492
  %v2509 = vpack.c.bf16 %v2495, %v2494
  %v2510 = vpack.c.bf16 %v2497, %v2496
  %v2511 = vpack.c.bf16 %v2498, %v2498
  %v2525 = vunpack.c.l.b16 %v2499
  %v2526 = vunpack.c.h.b16 %v2499
  %v2527 = vunpack.c.l.b16 %v2500
  %v2528 = vunpack.c.h.b16 %v2500
  %v2529 = vunpack.c.l.b16 %v2501
  %v2530 = vunpack.c.h.b16 %v2501
  %v2531 = vunpack.c.l.b16 %v2502
  %v2532 = vunpack.c.h.b16 %v2502
  %v2533 = vunpack.c.l.b16 %v2503
  %v2534 = vunpack.c.h.b16 %v2503
  %v2535 = vunpack.c.l.b16 %v2504
  %v2536 = vunpack.c.h.b16 %v2504
  %v2537 = vunpack.c.l.b16 %v2505
  %v2538 = vunpack.c.h.b16 %v2505
  %v2539 = vunpack.c.l.b16 %v2506
  %v2540 = vunpack.c.h.b16 %v2506
  %v2541 = vunpack.c.l.b16 %v2507
  %v2542 = vunpack.c.h.b16 %v2507
  %v2543 = vunpack.c.l.b16 %v2508
  %v2544 = vunpack.c.h.b16 %v2508
  %v2545 = vunpack.c.l.b16 %v2509
  %v2546 = vunpack.c.h.b16 %v2509
  %v2547 = vunpack.c.l.b16 %v2510
  %v2548 = vunpack.c.h.b16 %v2510
  %v2549 = vunpack.c.l.b16 %v2511
  %v2550 = vpack.c.b16 %v2525, %v2525
  %v2551 = vpack.c.b16 %v2526, %v2526
  %v2552 = vpack.c.b16 %v2527, %v2527
  %v2553 = vpack.c.b16 %v2528, %v2528
  %v2554 = vpack.c.b16 %v2529, %v2529
  %v2555 = vpack.c.b16 %v2530, %v2530
  %v2556 = vpack.c.b16 %v2531, %v2531
  %v2557 = vpack.c.b16 %v2532, %v2532
  %v2558 = vpack.c.b16 %v2533, %v2533
  %v2559 = vpack.c.b16 %v2534, %v2534
  %v2560 = vpack.c.b16 %v2535, %v2535
  %v2561 = vpack.c.b16 %v2536, %v2536
  %v2562 = vpack.c.b16 %v2537, %v2537
  %v2563 = vpack.c.b16 %v2538, %v2538
  %v2564 = vpack.c.b16 %v2539, %v2539
  %v2565 = vpack.c.b16 %v2540, %v2540
  %v2566 = vpack.c.b16 %v2541, %v2541
  %v2567 = vpack.c.b16 %v2542, %v2542
  %v2568 = vpack.c.b16 %v2543, %v2543
  %v2569 = vpack.c.b16 %v2544, %v2544
  %v2570 = vpack.c.b16 %v2545, %v2545
  %v2571 = vpack.c.b16 %v2546, %v2546
  %v2572 = vpack.c.b16 %v2547, %v2547
  %v2573 = vpack.c.b16 %v2548, %v2548
  %v2574 = vpack.c.b16 %v2549, %v2549
  %vm2600 = vcmask 519168
  %2601 = vst.msk [vmem:[%s3] sm:$0xf] %vm2600, %v2550
  %2602 = vst.msk [vmem:[%s3 + $0x4] sm:$0xf] %vm2600, %v2551
  %2603 = vst.msk [vmem:[%s3 + $0x8] sm:$0xf] %vm2600, %v2552
  %2604 = vst.msk [vmem:[%s3 + $0xc] sm:$0xf] %vm2600, %v2553
  %2605 = vst.msk [vmem:[%s3 + $0x10] sm:$0xf] %vm2600, %v2554
  %2606 = vst.msk [vmem:[%s3 + $0x14] sm:$0xf] %vm2600, %v2555
  %2607 = vst.msk [vmem:[%s3 + $0x18] sm:$0xf] %vm2600, %v2556
  %2608 = vst.msk [vmem:[%s3 + $0x1c] sm:$0xf] %vm2600, %v2557
  %2609 = vst.msk [vmem:[%s3 + $0x20] sm:$0xf] %vm2600, %v2558
  %2610 = vst.msk [vmem:[%s3 + $0x24] sm:$0xf] %vm2600, %v2559
  %2611 = vst.msk [vmem:[%s3 + $0x28] sm:$0xf] %vm2600, %v2560
  %2612 = vst.msk [vmem:[%s3 + $0x2c] sm:$0xf] %vm2600, %v2561
  %2613 = vst.msk [vmem:[%s3 + $0x30] sm:$0xf] %vm2600, %v2562
  %2614 = vst.msk [vmem:[%s3 + $0x34] sm:$0xf] %vm2600, %v2563
  %2615 = vst.msk [vmem:[%s3 + $0x38] sm:$0xf] %vm2600, %v2564
  %2616 = vst.msk [vmem:[%s3 + $0x3c] sm:$0xf] %vm2600, %v2565
  %2617 = vst.msk [vmem:[%s3 + $0x40] sm:$0xf] %vm2600, %v2566
  %2618 = vst.msk [vmem:[%s3 + $0x44] sm:$0xf] %vm2600, %v2567
  %2619 = vst.msk [vmem:[%s3 + $0x48] sm:$0xf] %vm2600, %v2568
  %2620 = vst.msk [vmem:[%s3 + $0x4c] sm:$0xf] %vm2600, %v2569
  %2621 = vst.msk [vmem:[%s3 + $0x50] sm:$0xf] %vm2600, %v2570
  %2622 = vst.msk [vmem:[%s3 + $0x54] sm:$0xf] %vm2600, %v2571
  %2623 = vst.msk [vmem:[%s3 + $0x58] sm:$0xf] %vm2600, %v2572
  %2624 = vst.msk [vmem:[%s3 + $0x5c] sm:$0xf] %vm2600, %v2573
  %vm2625 = vcmask 517120
  %2626 = vst.msk [vmem:[%s3 + $0x60] sm:$0x3] %vm2625, %v2574
  // Predicated region
  $region14: #{_lambda_.5} parent=0 // pred_check
    _
  $region15: #{_lambda_.5} parent=0 // pred_check_branch
    %2628 = sbr.rel (0) target = $region17
  $region16: #{_lambda_.5} parent=0 // pred_region
    _
  $region17: #{_lambda_.5} parent=0 // pred_fallthru
    _
  // Predicated region
  $region18: #{_lambda_.5} parent=0 // pred_check
    _
  $region19: #{_lambda_.5} parent=0 // pred_check_branch
    %2630 = sbr.rel (0) target = $region21
  $region20: #{_lambda_.5} parent=0 // pred_region
    _
  $region21: #{_lambda_.5} parent=0 // pred_fallthru
    _

// kernel: _lambda_.6
$region0: #{_lambda_.6}
  #allocation0 [shape = 'u32[]', space=smem, size = 0x4, offset = 0x4, fixed_abs, tag = 'smem constant byte address 0x4 - core index']
  #allocation1 [shape = 'u32[144,128]{1,0:T(1,128)}', space=vmem, size = 0x12000, scoped, tag = 'internal scratch']
  %s0 = inlined_call_operand.vmem [shape: bf16[4,36,576], index: 0, kind: input, shape index: {}]
  %s1 = inlined_call_operand.vmem [shape: bf16[576,128], index: 1, kind: input, shape index: {}]
  %s2 = inlined_call_operand.vmem [shape: f32[1,128], index: 2, kind: input, shape index: {}]
  %s3 = inlined_call_operand.vmem [shape: bf16[36,128], index: 3, kind: output, shape index: {}]
  %s4 = sld [smem:[#allocation0]]
  $region22: #{_lambda_.6} parent=0
    _
  %s6 = ssub.s32 1, %s4
  %s7 = scalar_select 0, %s6, %s4
  // Predicated region
  $region2: #{_lambda_.6} parent=0 // pred_check
    _
  $region3: #{_lambda_.6} parent=0 // pred_check_branch
    %9 = sbr.rel (0) target = $region5
  $region4: #{_lambda_.6} parent=0 // pred_region
    _
  $region5: #{_lambda_.6} parent=0 // pred_fallthru
    _
  // Predicated region
  $region6: #{_lambda_.6} parent=0 // pred_check
    _
  $region7: #{_lambda_.6} parent=0 // pred_check_branch
    %11 = sbr.rel (0) target = $region9
  $region8: #{_lambda_.6} parent=0 // pred_region
    _
  $region9: #{_lambda_.6} parent=0 // pred_fallthru
    _
  // Predicated region
  $region10: #{_lambda_.6} parent=0 // pred_check
    _
  $region11: #{_lambda_.6} parent=0 // pred_check_branch
    %13 = sbr.rel (0) target = $region13
  $region12: #{_lambda_.6} parent=0 // pred_region
    _
  $region13: #{_lambda_.6} parent=0 // pred_fallthru
    _
  %v15 = vld [vmem:[%s1] sm:$0xf]
  %v16 = vld [vmem:[%s1 + $0x4] sm:$0xf]
  %v17 = vld [vmem:[%s1 + $0x8] sm:$0xf]
  %v18 = vld [vmem:[%s1 + $0xc] sm:$0xf]
  %v19 = vld [vmem:[%s1 + $0x10] sm:$0xf]
  %v20 = vld [vmem:[%s1 + $0x14] sm:$0xf]
  %v21 = vld [vmem:[%s1 + $0x18] sm:$0xf]
  %v22 = vld [vmem:[%s1 + $0x1c] sm:$0xf]
  %v23 = vld [vmem:[%s1 + $0x20] sm:$0xf]
  %v24 = vld [vmem:[%s1 + $0x24] sm:$0xf]
  %v25 = vld [vmem:[%s1 + $0x28] sm:$0xf]
  %v26 = vld [vmem:[%s1 + $0x2c] sm:$0xf]
  %v27 = vld [vmem:[%s1 + $0x30] sm:$0xf]
  %v28 = vld [vmem:[%s1 + $0x34] sm:$0xf]
  %v29 = vld [vmem:[%s1 + $0x38] sm:$0xf]
  %v30 = vld [vmem:[%s1 + $0x3c] sm:$0xf]
  %v31 = vld [vmem:[%s1 + $0x40] sm:$0xf]
  %v32 = vld [vmem:[%s1 + $0x44] sm:$0xf]
  %v33 = vld [vmem:[%s1 + $0x48] sm:$0xf]
  %v34 = vld [vmem:[%s1 + $0x4c] sm:$0xf]
  %v35 = vld [vmem:[%s1 + $0x50] sm:$0xf]
  %v36 = vld [vmem:[%s1 + $0x54] sm:$0xf]
  %v37 = vld [vmem:[%s1 + $0x58] sm:$0xf]
  %v38 = vld [vmem:[%s1 + $0x5c] sm:$0xf]
  %v39 = vld [vmem:[%s1 + $0x60] sm:$0xf]
  %v40 = vld [vmem:[%s1 + $0x64] sm:$0xf]
  %v41 = vld [vmem:[%s1 + $0x68] sm:$0xf]
  %v42 = vld [vmem:[%s1 + $0x6c] sm:$0xf]
  %v43 = vld [vmem:[%s1 + $0x70] sm:$0xf]
  %v44 = vld [vmem:[%s1 + $0x74] sm:$0xf]
  %v45 = vld [vmem:[%s1 + $0x78] sm:$0xf]
  %v46 = vld [vmem:[%s1 + $0x7c] sm:$0xf]
  %v47 = vld [vmem:[%s1 + $0x80] sm:$0xf]
  %v48 = vld [vmem:[%s1 + $0x84] sm:$0xf]
  %v49 = vld [vmem:[%s1 + $0x88] sm:$0xf]
  %v50 = vld [vmem:[%s1 + $0x8c] sm:$0xf]
  %v51 = vld [vmem:[%s1 + $0x90] sm:$0xf]
  %v52 = vld [vmem:[%s1 + $0x94] sm:$0xf]
  %v53 = vld [vmem:[%s1 + $0x98] sm:$0xf]
  %v54 = vld [vmem:[%s1 + $0x9c] sm:$0xf]
  %v55 = vld [vmem:[%s1 + $0xa0] sm:$0xf]
  %v56 = vld [vmem:[%s1 + $0xa4] sm:$0xf]
  %v57 = vld [vmem:[%s1 + $0xa8] sm:$0xf]
  %v58 = vld [vmem:[%s1 + $0xac] sm:$0xf]
  %v59 = vld [vmem:[%s1 + $0xb0] sm:$0xf]
  %v60 = vld [vmem:[%s1 + $0xb4] sm:$0xf]
  %v61 = vld [vmem:[%s1 + $0xb8] sm:$0xf]
  %v62 = vld [vmem:[%s1 + $0xbc] sm:$0xf]
  %v63 = vld [vmem:[%s1 + $0xc0] sm:$0xf]
  %v64 = vld [vmem:[%s1 + $0xc4] sm:$0xf]
  %v65 = vld [vmem:[%s1 + $0xc8] sm:$0xf]
  %v66 = vld [vmem:[%s1 + $0xcc] sm:$0xf]
  %v67 = vld [vmem:[%s1 + $0xd0] sm:$0xf]
  %v68 = vld [vmem:[%s1 + $0xd4] sm:$0xf]
  %v69 = vld [vmem:[%s1 + $0xd8] sm:$0xf]
  %v70 = vld [vmem:[%s1 + $0xdc] sm:$0xf]
  %v71 = vld [vmem:[%s1 + $0xe0] sm:$0xf]
  %v72 = vld [vmem:[%s1 + $0xe4] sm:$0xf]
  %v73 = vld [vmem:[%s1 + $0xe8] sm:$0xf]
  %v74 = vld [vmem:[%s1 + $0xec] sm:$0xf]
  %v75 = vld [vmem:[%s1 + $0xf0] sm:$0xf]
  %v76 = vld [vmem:[%s1 + $0xf4] sm:$0xf]
  %v77 = vld [vmem:[%s1 + $0xf8] sm:$0xf]
  %v78 = vld [vmem:[%s1 + $0xfc] sm:$0xf]
  %v79 = vld [vmem:[%s1 + $0x100] sm:$0xf]
  %v80 = vld [vmem:[%s1 + $0x104] sm:$0xf]
  %v81 = vld [vmem:[%s1 + $0x108] sm:$0xf]
  %v82 = vld [vmem:[%s1 + $0x10c] sm:$0xf]
  %v83 = vld [vmem:[%s1 + $0x110] sm:$0xf]
  %v84 = vld [vmem:[%s1 + $0x114] sm:$0xf]
  %v85 = vld [vmem:[%s1 + $0x118] sm:$0xf]
  %v86 = vld [vmem:[%s1 + $0x11c] sm:$0xf]
  %v87 = vld [vmem:[%s0] sm:$0xff]
  %v88 = vld [vmem:[%s0 + $0x8] sm:$0xff]
  %v89 = vld [vmem:[%s0 + $0x10] sm:$0xf]
  %v90 = vld [vmem:[%s0 + $0x14] sm:$0xff]
  %v91 = vld [vmem:[%s0 + $0x1c] sm:$0xff]
  %v92 = vld [vmem:[%s0 + $0x24] sm:$0xf]
  %v93 = vld [vmem:[%s0 + $0x28] sm:$0xff]
  %v94 = vld [vmem:[%s0 + $0x30] sm:$0xff]
  %v95 = vld [vmem:[%s0 + $0x38] sm:$0xf]
  %v96 = vld [vmem:[%s0 + $0x3c] sm:$0xff]
  %v97 = vld [vmem:[%s0 + $0x44] sm:$0xff]
  %v98 = vld [vmem:[%s0 + $0x4c] sm:$0xf]
  %v99 = vld [vmem:[%s0 + $0x50] sm:$0x33]
  %v100 = vld [vmem:[%s0 + $0x58] sm:$0x33]
  %v101 = vld [vmem:[%s0 + $0x60] sm:$0x3]
  %v117 = vunpack.c.l.b16 %v87
  %v118 = vunpack.c.h.b16 %v87
  %v119 = vunpack.c.l.b16 %v88
  %v120 = vunpack.c.h.b16 %v88
  %v121 = vunpack.c.l.b16 %v89
  %v122 = vunpack.c.l.b16 %v90
  %v123 = vunpack.c.h.b16 %v90
  %v124 = vunpack.c.l.b16 %v91
  %v125 = vunpack.c.h.b16 %v91
  %v126 = vunpack.c.l.b16 %v92
  %v127 = vunpack.c.l.b16 %v93
  %v128 = vunpack.c.h.b16 %v93
  %v129 = vunpack.c.l.b16 %v94
  %v130 = vunpack.c.h.b16 %v94
  %v131 = vunpack.c.l.b16 %v95
  %v132 = vunpack.c.l.b16 %v96
  %v133 = vunpack.c.h.b16 %v96
  %v134 = vunpack.c.l.b16 %v97
  %v135 = vunpack.c.h.b16 %v97
  %v136 = vunpack.c.l.b16 %v98
  %v137 = vunpack.c.l.b16 %v99
  %v138 = vunpack.c.h.b16 %v99
  %v139 = vunpack.c.l.b16 %v100
  %v140 = vunpack.c.h.b16 %v100
  %v141 = vunpack.c.l.b16 %v101
  %v142 = vpack.c.b16 %v122, %v117
  %v143 = vpack.c.b16 %v123, %v118
  %v144 = vpack.c.b16 %v124, %v119
  %v145 = vpack.c.b16 %v125, %v120
  %v146 = vpack.c.b16 %v126, %v121
  %v147 = vpack.c.b16 %v132, %v127
  %v148 = vpack.c.b16 %v133, %v128
  %v149 = vpack.c.b16 %v134, %v129
  %v150 = vpack.c.b16 %v135, %v130
  %v151 = vpack.c.b16 %v136, %v131
  %v152 = vpack.c.b16 %v137, %v137
  %v153 = vpack.c.b16 %v138, %v138
  %v154 = vpack.c.b16 %v139, %v139
  %v155 = vpack.c.b16 %v140, %v140
  %v156 = vpack.c.b16 %v141, %v141
  %v241 = vunpack.c.l.b16 %v15
  %v242 = vunpack.c.l.b16 %v16
  %v243 = vunpack.c.l.b16 %v17
  %v244 = vunpack.c.l.b16 %v18
  %v245 = vunpack.c.l.b16 %v19
  %v246 = vunpack.c.l.b16 %v20
  %v247 = vunpack.c.l.b16 %v21
  %v248 = vunpack.c.l.b16 %v22
  %v249 = vunpack.c.l.b16 %v23
  %v250 = vunpack.c.l.b16 %v24
  %v251 = vunpack.c.l.b16 %v25
  %v252 = vunpack.c.l.b16 %v26
  %v253 = vunpack.c.l.b16 %v27
  %v254 = vunpack.c.l.b16 %v28
  %v255 = vunpack.c.l.b16 %v29
  %v256 = vunpack.c.l.b16 %v30
  %v257 = vunpack.c.l.b16 %v31
  %v258 = vunpack.c.l.b16 %v32
  %v259 = vunpack.c.l.b16 %v33
  %v260 = vunpack.c.l.b16 %v34
  %v261 = vunpack.c.l.b16 %v35
  %v262 = vunpack.c.l.b16 %v36
  %v263 = vunpack.c.l.b16 %v37
  %v264 = vunpack.c.l.b16 %v38
  %v265 = vunpack.c.l.b16 %v39
  %v266 = vunpack.c.l.b16 %v40
  %v267 = vunpack.c.l.b16 %v41
  %v268 = vunpack.c.l.b16 %v42
  %v269 = vunpack.c.l.b16 %v43
  %v270 = vunpack.c.l.b16 %v44
  %v271 = vunpack.c.l.b16 %v45
  %v272 = vunpack.c.l.b16 %v46
  %v273 = vunpack.c.l.b16 %v47
  %v274 = vunpack.c.l.b16 %v48
  %v275 = vunpack.c.l.b16 %v49
  %v276 = vunpack.c.l.b16 %v50
  %v277 = vunpack.c.l.b16 %v51
  %v278 = vunpack.c.l.b16 %v52
  %v279 = vunpack.c.l.b16 %v53
  %v280 = vunpack.c.l.b16 %v54
  %v281 = vunpack.c.l.b16 %v55
  %v282 = vunpack.c.l.b16 %v56
  %v283 = vunpack.c.l.b16 %v57
  %v284 = vunpack.c.l.b16 %v58
  %v285 = vunpack.c.l.b16 %v59
  %v286 = vunpack.c.l.b16 %v60
  %v287 = vunpack.c.l.b16 %v61
  %v288 = vunpack.c.l.b16 %v62
  %v289 = vunpack.c.l.b16 %v63
  %v290 = vunpack.c.l.b16 %v64
  %v291 = vunpack.c.l.b16 %v65
  %v292 = vunpack.c.l.b16 %v66
  %v293 = vunpack.c.l.b16 %v67
  %v294 = vunpack.c.l.b16 %v68
  %v295 = vunpack.c.l.b16 %v69
  %v296 = vunpack.c.l.b16 %v70
  %v297 = vunpack.c.l.b16 %v71
  %v298 = vunpack.c.l.b16 %v72
  %v299 = vunpack.c.l.b16 %v73
  %v300 = vunpack.c.l.b16 %v74
  %v301 = vunpack.c.l.b16 %v75
  %v302 = vunpack.c.l.b16 %v76
  %v303 = vunpack.c.l.b16 %v77
  %v304 = vunpack.c.l.b16 %v78
  %v305 = vunpack.c.l.b16 %v79
  %v306 = vunpack.c.l.b16 %v80
  %v307 = vunpack.c.l.b16 %v81
  %v308 = vunpack.c.l.b16 %v82
  %v309 = vunpack.c.l.b16 %v83
  %v310 = vunpack.c.l.b16 %v84
  %v311 = vunpack.c.l.b16 %v85
  %v312 = vunpack.c.l.b16 %v86
  %v313 = vpack.c.b16 %v242, %v241
  %v314 = vpack.c.b16 %v244, %v243
  %v315 = vpack.c.b16 %v246, %v245
  %v316 = vpack.c.b16 %v248, %v247
  %v317 = vpack.c.b16 %v250, %v249
  %v318 = vpack.c.b16 %v252, %v251
  %v319 = vpack.c.b16 %v254, %v253
  %v320 = vpack.c.b16 %v256, %v255
  %v321 = vpack.c.b16 %v258, %v257
  %v322 = vpack.c.b16 %v260, %v259
  %v323 = vpack.c.b16 %v262, %v261
  %v324 = vpack.c.b16 %v264, %v263
  %v325 = vpack.c.b16 %v266, %v265
  %v326 = vpack.c.b16 %v268, %v267
  %v327 = vpack.c.b16 %v270, %v269
  %v328 = vpack.c.b16 %v272, %v271
  %v329 = vpack.c.b16 %v274, %v273
  %v330 = vpack.c.b16 %v276, %v275
  %v331 = vpack.c.b16 %v278, %v277
  %v332 = vpack.c.b16 %v280, %v279
  %v333 = vpack.c.b16 %v282, %v281
  %v334 = vpack.c.b16 %v284, %v283
  %v335 = vpack.c.b16 %v286, %v285
  %v336 = vpack.c.b16 %v288, %v287
  %v337 = vpack.c.b16 %v290, %v289
  %v338 = vpack.c.b16 %v292, %v291
  %v339 = vpack.c.b16 %v294, %v293
  %v340 = vpack.c.b16 %v296, %v295
  %v341 = vpack.c.b16 %v298, %v297
  %v342 = vpack.c.b16 %v300, %v299
  %v343 = vpack.c.b16 %v302, %v301
  %v344 = vpack.c.b16 %v304, %v303
  %v345 = vpack.c.b16 %v306, %v305
  %v346 = vpack.c.b16 %v308, %v307
  %v347 = vpack.c.b16 %v310, %v309
  %v348 = vpack.c.b16 %v312, %v311
  %vm385 = vcmask 523264
  %v387 = vsel %vm385, %v146, 0
  %v390 = vsel %vm385, %v151, 0
  %v393 = vsel %vm385, %v156, 0
  %395 = vmatprep.subr.bf16.mxu0 0
  %396 = vmatpush1.bf16.msra.mxu0 %v313
  %397 = vmatprep.subr.bf16.mxu0 0
  %398 = vmatpush1.bf16.msra.mxu0 %v314
  %399 = vmatprep.subr.bf16.mxu0 0
  %400 = vmatpush1.bf16.msra.mxu0 %v315
  %401 = vmatprep.subr.bf16.mxu0 0
  %402 = vmatpush1.bf16.msra.mxu0 %v316
  %403 = vmatprep.subr.bf16.mxu0 0
  %404 = vmatpush1.bf16.msra.mxu0 %v317
  %405 = vmatprep.subr.bf16.mxu0 0
  %406 = vmatpush1.bf16.msra.mxu0 %v318
  %407 = vmatprep.subr.bf16.mxu0 0
  %408 = vmatpush1.bf16.msra.mxu0 %v319
  %409 = vmatprep.subr.bf16.mxu0 0
  %410 = vmatpush1.bf16.msra.mxu0 %v320
  %411 = vmatprep.subr.bf16.mxu0 0
  %412 = vmatpush1.bf16.msra.mxu0 %v321
  %413 = vmatprep.subr.bf16.mxu0 0
  %414 = vmatpush1.bf16.msra.mxu0 %v322
  %415 = vmatprep.subr.bf16.mxu0 0
  %416 = vmatpush1.bf16.msra.mxu0 %v323
  %417 = vmatprep.subr.bf16.mxu0 0
  %418 = vmatpush1.bf16.msra.mxu0 %v324
  %419 = vmatprep.subr.bf16.mxu0 0
  %420 = vmatpush1.bf16.msra.mxu0 %v325
  %421 = vmatprep.subr.bf16.mxu0 0
  %422 = vmatpush1.bf16.msra.mxu0 %v326
  %423 = vmatprep.subr.bf16.mxu0 0
  %424 = vmatpush1.bf16.msra.mxu0 %v327
  %425 = vmatprep.subr.bf16.mxu0 0
  %426 = vmatpush1.bf16.msra.mxu0 %v328
  %427 = vmatprep.mubr.bf16.mxu0 %v143
  %428 = vmatmul.mubr.bf16.gmra.mrb[0].mxu0 %v142
  %v429 = vpop.f32.mrb[0].mxu0
  %v430 = vadd.f32 0.0, %v429
  %v431 = vpop.f32.mrb[0].mxu0
  %v432 = vpop.f32.mrb[0].mxu0
  %v433 = vadd.f32 0.0, %v432
  %v434 = vpop.f32.mrb[0].mxu0
  %435 = vmatprep.mubr.bf16.mxu0 %v148
  %436 = vmatmul.mubr.bf16.gmra.mrb[0].mxu0 %v147
  %v437 = vpop.f32.mrb[0].mxu0
  %v438 = vadd.f32 0.0, %v437
  %v439 = vpop.f32.mrb[0].mxu0
  %v440 = vpop.f32.mrb[0].mxu0
  %v441 = vadd.f32 0.0, %v440
  %v442 = vpop.f32.mrb[0].mxu0
  %443 = vmatprep.mubr.bf16.mxu0 %v153
  %444 = vmatmul.mubr.bf16.gmra.mrb[0].mxu0 %v152
  %v445 = vpop.f32.mrb[0].mxu0
  %v446 = vadd.f32 0.0, %v445
  %v447 = vpop.f32.mrb[0].mxu0
  %v448 = vpop.f32.mrb[0].mxu0
  %v449 = vpop.f32.mrb[0].mxu0
  %450 = vdwg.mxu0
  %451 = vmatprep.subr.bf16.mxu0 0
  %452 = vmatpush1.bf16.msra.mxu0 %v329
  %453 = vmatprep.subr.bf16.mxu0 0
  %454 = vmatpush1.bf16.msra.mxu0 %v330
  %455 = vmatprep.subr.bf16.mxu0 0
  %456 = vmatpush1.bf16.msra.mxu0 %v331
  %457 = vmatprep.subr.bf16.mxu0 0
  %458 = vmatpush1.bf16.msra.mxu0 %v332
  %459 = vmatprep.subr.bf16.mxu0 0
  %460 = vmatpush1.bf16.msra.mxu0 %v333
  %461 = vmatprep.subr.bf16.mxu0 0
  %462 = vmatpush1.bf16.msra.mxu0 %v334
  %463 = vmatprep.subr.bf16.mxu0 0
  %464 = vmatpush1.bf16.msra.mxu0 %v335
  %465 = vmatprep.subr.bf16.mxu0 0
  %466 = vmatpush1.bf16.msra.mxu0 %v336
  %467 = vmatprep.subr.bf16.mxu0 0
  %468 = vmatpush1.bf16.msra.mxu0 %v337
  %469 = vmatprep.subr.bf16.mxu0 0
  %470 = vmatpush1.bf16.msra.mxu0 %v338
  %471 = vmatprep.subr.bf16.mxu0 0
  %472 = vmatpush1.bf16.msra.mxu0 %v339
  %473 = vmatprep.subr.bf16.mxu0 0
  %474 = vmatpush1.bf16.msra.mxu0 %v340
  %475 = vmatprep.subr.bf16.mxu0 0
  %476 = vmatpush1.bf16.msra.mxu0 %v341
  %477 = vmatprep.subr.bf16.mxu0 0
  %478 = vmatpush1.bf16.msra.mxu0 %v342
  %479 = vmatprep.subr.bf16.mxu0 0
  %480 = vmatpush1.bf16.msra.mxu0 %v343
  %481 = vmatprep.subr.bf16.mxu0 0
  %482 = vmatpush1.bf16.msra.mxu0 %v344
  %483 = vmatprep.mubr.bf16.mxu0 %v145
  %484 = vmatmul.mubr.bf16.gmra.mrb[0].mxu0 %v144
  %v485 = vpop.f32.mrb[0].mxu0
  %v486 = vadd.f32 %v430, %v485
  %v487 = vpop.f32.mrb[0].mxu0
  %v488 = vpop.f32.mrb[0].mxu0
  %v489 = vadd.f32 %v433, %v488
  %v490 = vpop.f32.mrb[0].mxu0
  %491 = vmatprep.mubr.bf16.mxu0 %v150
  %492 = vmatmul.mubr.bf16.gmra.mrb[0].mxu0 %v149
  %v493 = vpop.f32.mrb[0].mxu0
  %v494 = vadd.f32 %v438, %v493
  %v495 = vpop.f32.mrb[0].mxu0
  %v496 = vpop.f32.mrb[0].mxu0
  %v497 = vadd.f32 %v441, %v496
  %v498 = vpop.f32.mrb[0].mxu0
  %499 = vmatprep.mubr.bf16.mxu0 %v155
  %500 = vmatmul.mubr.bf16.gmra.mrb[0].mxu0 %v154
  %v501 = vpop.f32.mrb[0].mxu0
  %v502 = vadd.f32 %v446, %v501
  %v503 = vpop.f32.mrb[0].mxu0
  %v504 = vpop.f32.mrb[0].mxu0
  %v505 = vpop.f32.mrb[0].mxu0
  %506 = vdwg.mxu0
  %507 = vmatprep.subr.bf16.mxu0 0
  %508 = vmatpush1.bf16.msra.mxu0 %v345
  %509 = vmatprep.subr.bf16.mxu0 0
  %510 = vmatpush1.bf16.msra.mxu0 %v346
  %511 = vmatprep.subr.bf16.mxu0 0
  %512 = vmatpush1.bf16.msra.mxu0 %v347
  %513 = vmatprep.subr.bf16.mxu0 0
  %514 = vmatpush1.bf16.msra.mxu0 %v348
  %515 = vmatprep.subr.bf16.mxu0 0
  %516 = vmatpush1.bf16.msra.mxu0 0
  %517 = vmatprep.subr.bf16.mxu0 0
  %518 = vmatpush1.bf16.msra.mxu0 0
  %519 = vmatprep.subr.bf16.mxu0 0
  %520 = vmatpush1.bf16.msra.mxu0 0
  %521 = vmatprep.subr.bf16.mxu0 0
  %522 = vmatpush1.bf16.msra.mxu0 0
  %523 = vmatprep.subr.bf16.mxu0 0
  %524 = vmatpush1.bf16.msra.mxu0 0
  %525 = vmatprep.subr.bf16.mxu0 0
  %526 = vmatpush1.bf16.msra.mxu0 0
  %527 = vmatprep.subr.bf16.mxu0 0
  %528 = vmatpush1.bf16.msra.mxu0 0
  %529 = vmatprep.subr.bf16.mxu0 0
  %530 = vmatpush1.bf16.msra.mxu0 0
  %531 = vmatprep.subr.bf16.mxu0 0
  %532 = vmatpush1.bf16.msra.mxu0 0
  %533 = vmatprep.subr.bf16.mxu0 0
  %534 = vmatpush1.bf16.msra.mxu0 0
  %535 = vmatprep.subr.bf16.mxu0 0
  %536 = vmatpush1.bf16.msra.mxu0 0
  %537 = vmatprep.subr.bf16.mxu0 0
  %538 = vmatpush1.bf16.msra.mxu0 0
  %539 = vmatprep.mubr.bf16.mxu0 0
  %540 = vmatmul.mubr.bf16.gmra.mrb[0].mxu0 %v387
  %v541 = vpop.f32.mrb[0].mxu0
  %v542 = vadd.f32 %v486, %v541
  %v543 = vpop.f32.mrb[0].mxu0
  %v544 = vpop.f32.mrb[0].mxu0
  %v545 = vadd.f32 %v489, %v544
  %v546 = vpop.f32.mrb[0].mxu0
  %547 = vmatprep.mubr.bf16.mxu0 0
  %548 = vmatmul.mubr.bf16.gmra.mrb[0].mxu0 %v390
  %v549 = vpop.f32.mrb[0].mxu0
  %v550 = vadd.f32 %v494, %v549
  %v551 = vpop.f32.mrb[0].mxu0
  %v552 = vpop.f32.mrb[0].mxu0
  %v553 = vadd.f32 %v497, %v552
  %v554 = vpop.f32.mrb[0].mxu0
  %555 = vmatprep.mubr.bf16.mxu0 0
  %556 = vmatmul.mubr.bf16.gmra.mrb[0].mxu0 %v393
  %v557 = vpop.f32.mrb[0].mxu0
  %v558 = vadd.f32 %v502, %v557
  %v559 = vpop.f32.mrb[0].mxu0
  %v560 = vpop.f32.mrb[0].mxu0
  %v561 = vpop.f32.mrb[0].mxu0
  %562 = vdwg.mxu0
  %s563 = scalar_lea.vmem %s0, 100
  %v564 = vld [vmem:[%s563] sm:$0xff]
  %v565 = vld [vmem:[%s563 + $0x8] sm:$0xff]
  %v566 = vld [vmem:[%s563 + $0x10] sm:$0xf]
  %v567 = vld [vmem:[%s563 + $0x14] sm:$0xff]
  %v568 = vld [vmem:[%s563 + $0x1c] sm:$0xff]
  %v569 = vld [vmem:[%s563 + $0x24] sm:$0xf]
  %v570 = vld [vmem:[%s563 + $0x28] sm:$0xff]
  %v571 = vld [vmem:[%s563 + $0x30] sm:$0xff]
  %v572 = vld [vmem:[%s563 + $0x38] sm:$0xf]
  %v573 = vld [vmem:[%s563 + $0x3c] sm:$0xff]
  %v574 = vld [vmem:[%s563 + $0x44] sm:$0xff]
  %v575 = vld [vmem:[%s563 + $0x4c] sm:$0xf]
  %v576 = vld [vmem:[%s563 + $0x50] sm:$0x33]
  %v577 = vld [vmem:[%s563 + $0x58] sm:$0x33]
  %v578 = vld [vmem:[%s563 + $0x60] sm:$0x3]
  %v594 = vunpack.c.l.b16 %v564
  %v595 = vunpack.c.h.b16 %v564
  %v596 = vunpack.c.l.b16 %v565
  %v597 = vunpack.c.h.b16 %v565
  %v598 = vunpack.c.l.b16 %v566
  %v599 = vunpack.c.l.b16 %v567
  %v600 = vunpack.c.h.b16 %v567
  %v601 = vunpack.c.l.b16 %v568
  %v602 = vunpack.c.h.b16 %v568
  %v603 = vunpack.c.l.b16 %v569
  %v604 = vunpack.c.l.b16 %v570
  %v605 = vunpack.c.h.b16 %v570
  %v606 = vunpack.c.l.b16 %v571
  %v607 = vunpack.c.h.b16 %v571
  %v608 = vunpack.c.l.b16 %v572
  %v609 = vunpack.c.l.b16 %v573
  %v610 = vunpack.c.h.b16 %v573
  %v611 = vunpack.c.l.b16 %v574
  %v612 = vunpack.c.h.b16 %v574
  %v613 = vunpack.c.l.b16 %v575
  %v614 = vunpack.c.l.b16 %v576
  %v615 = vunpack.c.h.b16 %v576
  %v616 = vunpack.c.l.b16 %v577
  %v617 = vunpack.c.h.b16 %v577
  %v618 = vunpack.c.l.b16 %v578
  %v619 = vpack.c.b16 %v599, %v594
  %v620 = vpack.c.b16 %v600, %v595
  %v621 = vpack.c.b16 %v601, %v596
  %v622 = vpack.c.b16 %v602, %v597
  %v623 = vpack.c.b16 %v603, %v598
  %v624 = vpack.c.b16 %v609, %v604
  %v625 = vpack.c.b16 %v610, %v605
  %v626 = vpack.c.b16 %v611, %v606
  %v627 = vpack.c.b16 %v612, %v607
  %v628 = vpack.c.b16 %v613, %v608
  %v629 = vpack.c.b16 %v614, %v614
  %v630 = vpack.c.b16 %v615, %v615
  %v631 = vpack.c.b16 %v616, %v616
  %v632 = vpack.c.b16 %v617, %v617
  %v633 = vpack.c.b16 %v618, %v618
  %v647 = vsel %vm385, %v623, 0
  %v650 = vsel %vm385, %v628, 0
  %v653 = vsel %vm385, %v633, 0
  %655 = vmatprep.subr.bf16.mxu0 0
  %656 = vmatpush1.bf16.msra.mxu0 %v313
  %657 = vmatprep.subr.bf16.mxu0 0
  %658 = vmatpush1.bf16.msra.mxu0 %v314
  %659 = vmatprep.subr.bf16.mxu0 0
  %660 = vmatpush1.bf16.msra.mxu0 %v315
  %661 = vmatprep.subr.bf16.mxu0 0
  %662 = vmatpush1.bf16.msra.mxu0 %v316
  %663 = vmatprep.subr.bf16.mxu0 0
  %664 = vmatpush1.bf16.msra.mxu0 %v317
  %665 = vmatprep.subr.bf16.mxu0 0
  %666 = vmatpush1.bf16.msra.mxu0 %v318
  %667 = vmatprep.subr.bf16.mxu0 0
  %668 = vmatpush1.bf16.msra.mxu0 %v319
  %669 = vmatprep.subr.bf16.mxu0 0
  %670 = vmatpush1.bf16.msra.mxu0 %v320
  %671 = vmatprep.subr.bf16.mxu0 0
  %672 = vmatpush1.bf16.msra.mxu0 %v321
  %673 = vmatprep.subr.bf16.mxu0 0
  %674 = vmatpush1.bf16.msra.mxu0 %v322
  %675 = vmatprep.subr.bf16.mxu0 0
  %676 = vmatpush1.bf16.msra.mxu0 %v323
  %677 = vmatprep.subr.bf16.mxu0 0
  %678 = vmatpush1.bf16.msra.mxu0 %v324
  %679 = vmatprep.subr.bf16.mxu0 0
  %680 = vmatpush1.bf16.msra.mxu0 %v325
  %681 = vmatprep.subr.bf16.mxu0 0
  %682 = vmatpush1.bf16.msra.mxu0 %v326
  %683 = vmatprep.subr.bf16.mxu0 0
  %684 = vmatpush1.bf16.msra.mxu0 %v327
  %685 = vmatprep.subr.bf16.mxu0 0
  %686 = vmatpush1.bf16.msra.mxu0 %v328
  %687 = vmatprep.mubr.bf16.mxu0 %v620
  %688 = vmatmul.mubr.bf16.gmra.mrb[0].mxu0 %v619
  %v689 = vpop.f32.mrb[0].mxu0
  %v690 = vadd.f32 0.0, %v689
  %v691 = vpop.f32.mrb[0].mxu0
  %v692 = vpop.f32.mrb[0].mxu0
  %v693 = vadd.f32 0.0, %v692
  %v694 = vpop.f32.mrb[0].mxu0
  %695 = vmatprep.mubr.bf16.mxu0 %v625
  %696 = vmatmul.mubr.bf16.gmra.mrb[0].mxu0 %v624
  %v697 = vpop.f32.mrb[0].mxu0
  %v698 = vadd.f32 0.0, %v697
  %v699 = vpop.f32.mrb[0].mxu0
  %v700 = vpop.f32.mrb[0].mxu0
  %v701 = vadd.f32 0.0, %v700
  %v702 = vpop.f32.mrb[0].mxu0
  %703 = vmatprep.mubr.bf16.mxu0 %v630
  %704 = vmatmul.mubr.bf16.gmra.mrb[0].mxu0 %v629
  %v705 = vpop.f32.mrb[0].mxu0
  %v706 = vadd.f32 0.0, %v705
  %v707 = vpop.f32.mrb[0].mxu0
  %v708 = vpop.f32.mrb[0].mxu0
  %v709 = vpop.f32.mrb[0].mxu0
  %710 = vdwg.mxu0
  %711 = vmatprep.subr.bf16.mxu0 0
  %712 = vmatpush1.bf16.msra.mxu0 %v329
  %713 = vmatprep.subr.bf16.mxu0 0
  %714 = vmatpush1.bf16.msra.mxu0 %v330
  %715 = vmatprep.subr.bf16.mxu0 0
  %716 = vmatpush1.bf16.msra.mxu0 %v331
  %717 = vmatprep.subr.bf16.mxu0 0
  %718 = vmatpush1.bf16.msra.mxu0 %v332
  %719 = vmatprep.subr.bf16.mxu0 0
  %720 = vmatpush1.bf16.msra.mxu0 %v333
  %721 = vmatprep.subr.bf16.mxu0 0
  %722 = vmatpush1.bf16.msra.mxu0 %v334
  %723 = vmatprep.subr.bf16.mxu0 0
  %724 = vmatpush1.bf16.msra.mxu0 %v335
  %725 = vmatprep.subr.bf16.mxu0 0
  %726 = vmatpush1.bf16.msra.mxu0 %v336
  %727 = vmatprep.subr.bf16.mxu0 0
  %728 = vmatpush1.bf16.msra.mxu0 %v337
  %729 = vmatprep.subr.bf16.mxu0 0
  %730 = vmatpush1.bf16.msra.mxu0 %v338
  %731 = vmatprep.subr.bf16.mxu0 0
  %732 = vmatpush1.bf16.msra.mxu0 %v339
  %733 = vmatprep.subr.bf16.mxu0 0
  %734 = vmatpush1.bf16.msra.mxu0 %v340
  %735 = vmatprep.subr.bf16.mxu0 0
  %736 = vmatpush1.bf16.msra.mxu0 %v341
  %737 = vmatprep.subr.bf16.mxu0 0
  %738 = vmatpush1.bf16.msra.mxu0 %v342
  %739 = vmatprep.subr.bf16.mxu0 0
  %740 = vmatpush1.bf16.msra.mxu0 %v343
  %741 = vmatprep.subr.bf16.mxu0 0
  %742 = vmatpush1.bf16.msra.mxu0 %v344
  %743 = vmatprep.mubr.bf16.mxu0 %v622
  %744 = vmatmul.mubr.bf16.gmra.mrb[0].mxu0 %v621
  %v745 = vpop.f32.mrb[0].mxu0
  %v746 = vadd.f32 %v690, %v745
  %v747 = vpop.f32.mrb[0].mxu0
  %v748 = vpop.f32.mrb[0].mxu0
  %v749 = vadd.f32 %v693, %v748
  %v750 = vpop.f32.mrb[0].mxu0
  %751 = vmatprep.mubr.bf16.mxu0 %v627
  %752 = vmatmul.mubr.bf16.gmra.mrb[0].mxu0 %v626
  %v753 = vpop.f32.mrb[0].mxu0
  %v754 = vadd.f32 %v698, %v753
  %v755 = vpop.f32.mrb[0].mxu0
  %v756 = vpop.f32.mrb[0].mxu0
  %v757 = vadd.f32 %v701, %v756
  %v758 = vpop.f32.mrb[0].mxu0
  %759 = vmatprep.mubr.bf16.mxu0 %v632
  %760 = vmatmul.mubr.bf16.gmra.mrb[0].mxu0 %v631
  %v761 = vpop.f32.mrb[0].mxu0
  %v762 = vadd.f32 %v706, %v761
  %v763 = vpop.f32.mrb[0].mxu0
  %v764 = vpop.f32.mrb[0].mxu0
  %v765 = vpop.f32.mrb[0].mxu0
  %766 = vdwg.mxu0
  %767 = vmatprep.subr.bf16.mxu0 0
  %768 = vmatpush1.bf16.msra.mxu0 %v345
  %769 = vmatprep.subr.bf16.mxu0 0
  %770 = vmatpush1.bf16.msra.mxu0 %v346
  %771 = vmatprep.subr.bf16.mxu0 0
  %772 = vmatpush1.bf16.msra.mxu0 %v347
  %773 = vmatprep.subr.bf16.mxu0 0
  %774 = vmatpush1.bf16.msra.mxu0 %v348
  %775 = vmatprep.subr.bf16.mxu0 0
  %776 = vmatpush1.bf16.msra.mxu0 0
  %777 = vmatprep.subr.bf16.mxu0 0
  %778 = vmatpush1.bf16.msra.mxu0 0
  %779 = vmatprep.subr.bf16.mxu0 0
  %780 = vmatpush1.bf16.msra.mxu0 0
  %781 = vmatprep.subr.bf16.mxu0 0
  %782 = vmatpush1.bf16.msra.mxu0 0
  %783 = vmatprep.subr.bf16.mxu0 0
  %784 = vmatpush1.bf16.msra.mxu0 0
  %785 = vmatprep.subr.bf16.mxu0 0
  %786 = vmatpush1.bf16.msra.mxu0 0
  %787 = vmatprep.subr.bf16.mxu0 0
  %788 = vmatpush1.bf16.msra.mxu0 0
  %789 = vmatprep.subr.bf16.mxu0 0
  %790 = vmatpush1.bf16.msra.mxu0 0
  %791 = vmatprep.subr.bf16.mxu0 0
  %792 = vmatpush1.bf16.msra.mxu0 0
  %793 = vmatprep.subr.bf16.mxu0 0
  %794 = vmatpush1.bf16.msra.mxu0 0
  %795 = vmatprep.subr.bf16.mxu0 0
  %796 = vmatpush1.bf16.msra.mxu0 0
  %797 = vmatprep.subr.bf16.mxu0 0
  %798 = vmatpush1.bf16.msra.mxu0 0
  %799 = vmatprep.mubr.bf16.mxu0 0
  %800 = vmatmul.mubr.bf16.gmra.mrb[0].mxu0 %v647
  %v801 = vpop.f32.mrb[0].mxu0
  %v802 = vadd.f32 %v746, %v801
  %v803 = vpop.f32.mrb[0].mxu0
  %v804 = vpop.f32.mrb[0].mxu0
  %v805 = vadd.f32 %v749, %v804
  %v806 = vpop.f32.mrb[0].mxu0
  %807 = vmatprep.mubr.bf16.mxu0 0
  %808 = vmatmul.mubr.bf16.gmra.mrb[0].mxu0 %v650
  %v809 = vpop.f32.mrb[0].mxu0
  %v810 = vadd.f32 %v754, %v809
  %v811 = vpop.f32.mrb[0].mxu0
  %v812 = vpop.f32.mrb[0].mxu0
  %v813 = vadd.f32 %v757, %v812
  %v814 = vpop.f32.mrb[0].mxu0
  %815 = vmatprep.mubr.bf16.mxu0 0
  %816 = vmatmul.mubr.bf16.gmra.mrb[0].mxu0 %v653
  %v817 = vpop.f32.mrb[0].mxu0
  %v818 = vadd.f32 %v762, %v817
  %v819 = vpop.f32.mrb[0].mxu0
  %v820 = vpop.f32.mrb[0].mxu0
  %v821 = vpop.f32.mrb[0].mxu0
  %822 = vdwg.mxu0
  %v823 = vmax.f32 %v542, %v802
  %v824 = vmax.f32 %v545, %v805
  %v825 = vmax.f32 %v550, %v810
  %v826 = vmax.f32 %v553, %v813
  %v827 = vmax.f32 %v558, %v818
  %s828 = scalar_lea.vmem %s0, 200
  %v829 = vld [vmem:[%s828] sm:$0xff]
  %v830 = vld [vmem:[%s828 + $0x8] sm:$0xff]
  %v831 = vld [vmem:[%s828 + $0x10] sm:$0xf]
  %v832 = vld [vmem:[%s828 + $0x14] sm:$0xff]
  %v833 = vld [vmem:[%s828 + $0x1c] sm:$0xff]
  %v834 = vld [vmem:[%s828 + $0x24] sm:$0xf]
  %v835 = vld [vmem:[%s828 + $0x28] sm:$0xff]
  %v836 = vld [vmem:[%s828 + $0x30] sm:$0xff]
  %v837 = vld [vmem:[%s828 + $0x38] sm:$0xf]
  %v838 = vld [vmem:[%s828 + $0x3c] sm:$0xff]
  %v839 = vld [vmem:[%s828 + $0x44] sm:$0xff]
  %v840 = vld [vmem:[%s828 + $0x4c] sm:$0xf]
  %v841 = vld [vmem:[%s828 + $0x50] sm:$0x33]
  %v842 = vld [vmem:[%s828 + $0x58] sm:$0x33]
  %v843 = vld [vmem:[%s828 + $0x60] sm:$0x3]
  %v859 = vunpack.c.l.b16 %v829
  %v860 = vunpack.c.h.b16 %v829
  %v861 = vunpack.c.l.b16 %v830
  %v862 = vunpack.c.h.b16 %v830
  %v863 = vunpack.c.l.b16 %v831
  %v864 = vunpack.c.l.b16 %v832
  %v865 = vunpack.c.h.b16 %v832
  %v866 = vunpack.c.l.b16 %v833
  %v867 = vunpack.c.h.b16 %v833
  %v868 = vunpack.c.l.b16 %v834
  %v869 = vunpack.c.l.b16 %v835
  %v870 = vunpack.c.h.b16 %v835
  %v871 = vunpack.c.l.b16 %v836
  %v872 = vunpack.c.h.b16 %v836
  %v873 = vunpack.c.l.b16 %v837
  %v874 = vunpack.c.l.b16 %v838
  %v875 = vunpack.c.h.b16 %v838
  %v876 = vunpack.c.l.b16 %v839
  %v877 = vunpack.c.h.b16 %v839
  %v878 = vunpack.c.l.b16 %v840
  %v879 = vunpack.c.l.b16 %v841
  %v880 = vunpack.c.h.b16 %v841
  %v881 = vunpack.c.l.b16 %v842
  %v882 = vunpack.c.h.b16 %v842
  %v883 = vunpack.c.l.b16 %v843
  %v884 = vpack.c.b16 %v864, %v859
  %v885 = vpack.c.b16 %v865, %v860
  %v886 = vpack.c.b16 %v866, %v861
  %v887 = vpack.c.b16 %v867, %v862
  %v888 = vpack.c.b16 %v868, %v863
  %v889 = vpack.c.b16 %v874, %v869
  %v890 = vpack.c.b16 %v875, %v870
  %v891 = vpack.c.b16 %v876, %v871
  %v892 = vpack.c.b16 %v877, %v872
  %v893 = vpack.c.b16 %v878, %v873
  %v894 = vpack.c.b16 %v879, %v879
  %v895 = vpack.c.b16 %v880, %v880
  %v896 = vpack.c.b16 %v881, %v881
  %v897 = vpack.c.b16 %v882, %v882
  %v898 = vpack.c.b16 %v883, %v883
  %v912 = vsel %vm385, %v888, 0
  %v915 = vsel %vm385, %v893, 0
  %v918 = vsel %vm385, %v898, 0
  %920 = vmatprep.subr.bf16.mxu0 0
  %921 = vmatpush1.bf16.msra.mxu0 %v313
  %922 = vmatprep.subr.bf16.mxu0 0
  %923 = vmatpush1.bf16.msra.mxu0 %v314
  %924 = vmatprep.subr.bf16.mxu0 0
  %925 = vmatpush1.bf16.msra.mxu0 %v315
  %926 = vmatprep.subr.bf16.mxu0 0
  %927 = vmatpush1.bf16.msra.mxu0 %v316
  %928 = vmatprep.subr.bf16.mxu0 0
  %929 = vmatpush1.bf16.msra.mxu0 %v317
  %930 = vmatprep.subr.bf16.mxu0 0
  %931 = vmatpush1.bf16.msra.mxu0 %v318
  %932 = vmatprep.subr.bf16.mxu0 0
  %933 = vmatpush1.bf16.msra.mxu0 %v319
  %934 = vmatprep.subr.bf16.mxu0 0
  %935 = vmatpush1.bf16.msra.mxu0 %v320
  %936 = vmatprep.subr.bf16.mxu0 0
  %937 = vmatpush1.bf16.msra.mxu0 %v321
  %938 = vmatprep.subr.bf16.mxu0 0
  %939 = vmatpush1.bf16.msra.mxu0 %v322
  %940 = vmatprep.subr.bf16.mxu0 0
  %941 = vmatpush1.bf16.msra.mxu0 %v323
  %942 = vmatprep.subr.bf16.mxu0 0
  %943 = vmatpush1.bf16.msra.mxu0 %v324
  %944 = vmatprep.subr.bf16.mxu0 0
  %945 = vmatpush1.bf16.msra.mxu0 %v325
  %946 = vmatprep.subr.bf16.mxu0 0
  %947 = vmatpush1.bf16.msra.mxu0 %v326
  %948 = vmatprep.subr.bf16.mxu0 0
  %949 = vmatpush1.bf16.msra.mxu0 %v327
  %950 = vmatprep.subr.bf16.mxu0 0
  %951 = vmatpush1.bf16.msra.mxu0 %v328
  %952 = vmatprep.mubr.bf16.mxu0 %v885
  %953 = vmatmul.mubr.bf16.gmra.mrb[0].mxu0 %v884
  %v954 = vpop.f32.mrb[0].mxu0
  %v955 = vadd.f32 0.0, %v954
  %v956 = vpop.f32.mrb[0].mxu0
  %v957 = vpop.f32.mrb[0].mxu0
  %v958 = vadd.f32 0.0, %v957
  %v959 = vpop.f32.mrb[0].mxu0
  %960 = vmatprep.mubr.bf16.mxu0 %v890
  %961 = vmatmul.mubr.bf16.gmra.mrb[0].mxu0 %v889
  %v962 = vpop.f32.mrb[0].mxu0
  %v963 = vadd.f32 0.0, %v962
  %v964 = vpop.f32.mrb[0].mxu0
  %v965 = vpop.f32.mrb[0].mxu0
  %v966 = vadd.f32 0.0, %v965
  %v967 = vpop.f32.mrb[0].mxu0
  %968 = vmatprep.mubr.bf16.mxu0 %v895
  %969 = vmatmul.mubr.bf16.gmra.mrb[0].mxu0 %v894
  %v970 = vpop.f32.mrb[0].mxu0
  %v971 = vadd.f32 0.0, %v970
  %v972 = vpop.f32.mrb[0].mxu0
  %v973 = vpop.f32.mrb[0].mxu0
  %v974 = vpop.f32.mrb[0].mxu0
  %975 = vdwg.mxu0
  %976 = vmatprep.subr.bf16.mxu0 0
  %977 = vmatpush1.bf16.msra.mxu0 %v329
  %978 = vmatprep.subr.bf16.mxu0 0
  %979 = vmatpush1.bf16.msra.mxu0 %v330
  %980 = vmatprep.subr.bf16.mxu0 0
  %981 = vmatpush1.bf16.msra.mxu0 %v331
  %982 = vmatprep.subr.bf16.mxu0 0
  %983 = vmatpush1.bf16.msra.mxu0 %v332
  %984 = vmatprep.subr.bf16.mxu0 0
  %985 = vmatpush1.bf16.msra.mxu0 %v333
  %986 = vmatprep.subr.bf16.mxu0 0
  %987 = vmatpush1.bf16.msra.mxu0 %v334
  %988 = vmatprep.subr.bf16.mxu0 0
  %989 = vmatpush1.bf16.msra.mxu0 %v335
  %990 = vmatprep.subr.bf16.mxu0 0
  %991 = vmatpush1.bf16.msra.mxu0 %v336
  %992 = vmatprep.subr.bf16.mxu0 0
  %993 = vmatpush1.bf16.msra.mxu0 %v337
  %994 = vmatprep.subr.bf16.mxu0 0
  %995 = vmatpush1.bf16.msra.mxu0 %v338
  %996 = vmatprep.subr.bf16.mxu0 0
  %997 = vmatpush1.bf16.msra.mxu0 %v339
  %998 = vmatprep.subr.bf16.mxu0 0
  %999 = vmatpush1.bf16.msra.mxu0 %v340
  %1000 = vmatprep.subr.bf16.mxu0 0
  %1001 = vmatpush1.bf16.msra.mxu0 %v341
  %1002 = vmatprep.subr.bf16.mxu0 0
  %1003 = vmatpush1.bf16.msra.mxu0 %v342
  %1004 = vmatprep.subr.bf16.mxu0 0
  %1005 = vmatpush1.bf16.msra.mxu0 %v343
  %1006 = vmatprep.subr.bf16.mxu0 0
  %1007 = vmatpush1.bf16.msra.mxu0 %v344
  %1008 = vmatprep.mubr.bf16.mxu0 %v887
  %1009 = vmatmul.mubr.bf16.gmra.mrb[0].mxu0 %v886
  %v1010 = vpop.f32.mrb[0].mxu0
  %v1011 = vadd.f32 %v955, %v1010
  %v1012 = vpop.f32.mrb[0].mxu0
  %v1013 = vpop.f32.mrb[0].mxu0
  %v1014 = vadd.f32 %v958, %v1013
  %v1015 = vpop.f32.mrb[0].mxu0
  %1016 = vmatprep.mubr.bf16.mxu0 %v892
  %1017 = vmatmul.mubr.bf16.gmra.mrb[0].mxu0 %v891
  %v1018 = vpop.f32.mrb[0].mxu0
  %v1019 = vadd.f32 %v963, %v1018
  %v1020 = vpop.f32.mrb[0].mxu0
  %v1021 = vpop.f32.mrb[0].mxu0
  %v1022 = vadd.f32 %v966, %v1021
  %v1023 = vpop.f32.mrb[0].mxu0
  %1024 = vmatprep.mubr.bf16.mxu0 %v897
  %1025 = vmatmul.mubr.bf16.gmra.mrb[0].mxu0 %v896
  %v1026 = vpop.f32.mrb[0].mxu0
  %v1027 = vadd.f32 %v971, %v1026
  %v1028 = vpop.f32.mrb[0].mxu0
  %v1029 = vpop.f32.mrb[0].mxu0
  %v1030 = vpop.f32.mrb[0].mxu0
  %1031 = vdwg.mxu0
  %1032 = vmatprep.subr.bf16.mxu0 0
  %1033 = vmatpush1.bf16.msra.mxu0 %v345
  %1034 = vmatprep.subr.bf16.mxu0 0
  %1035 = vmatpush1.bf16.msra.mxu0 %v346
  %1036 = vmatprep.subr.bf16.mxu0 0
  %1037 = vmatpush1.bf16.msra.mxu0 %v347
  %1038 = vmatprep.subr.bf16.mxu0 0
  %1039 = vmatpush1.bf16.msra.mxu0 %v348
  %1040 = vmatprep.subr.bf16.mxu0 0
  %1041 = vmatpush1.bf16.msra.mxu0 0
  %1042 = vmatprep.subr.bf16.mxu0 0
  %1043 = vmatpush1.bf16.msra.mxu0 0
  %1044 = vmatprep.subr.bf16.mxu0 0
  %1045 = vmatpush1.bf16.msra.mxu0 0
  %1046 = vmatprep.subr.bf16.mxu0 0
  %1047 = vmatpush1.bf16.msra.mxu0 0
  %1048 = vmatprep.subr.bf16.mxu0 0
  %1049 = vmatpush1.bf16.msra.mxu0 0
  %1050 = vmatprep.subr.bf16.mxu0 0
  %1051 = vmatpush1.bf16.msra.mxu0 0
  %1052 = vmatprep.subr.bf16.mxu0 0
  %1053 = vmatpush1.bf16.msra.mxu0 0
  %1054 = vmatprep.subr.bf16.mxu0 0
  %1055 = vmatpush1.bf16.msra.mxu0 0
  %1056 = vmatprep.subr.bf16.mxu0 0
  %1057 = vmatpush1.bf16.msra.mxu0 0
  %1058 = vmatprep.subr.bf16.mxu0 0
  %1059 = vmatpush1.bf16.msra.mxu0 0
  %1060 = vmatprep.subr.bf16.mxu0 0
  %1061 = vmatpush1.bf16.msra.mxu0 0
  %1062 = vmatprep.subr.bf16.mxu0 0
  %1063 = vmatpush1.bf16.msra.mxu0 0
  %1064 = vmatprep.mubr.bf16.mxu0 0
  %1065 = vmatmul.mubr.bf16.gmra.mrb[0].mxu0 %v912
  %v1066 = vpop.f32.mrb[0].mxu0
  %v1067 = vadd.f32 %v1011, %v1066
  %v1068 = vpop.f32.mrb[0].mxu0
  %v1069 = vpop.f32.mrb[0].mxu0
  %v1070 = vadd.f32 %v1014, %v1069
  %v1071 = vpop.f32.mrb[0].mxu0
  %1072 = vmatprep.mubr.bf16.mxu0 0
  %1073 = vmatmul.mubr.bf16.gmra.mrb[0].mxu0 %v915
  %v1074 = vpop.f32.mrb[0].mxu0
  %v1075 = vadd.f32 %v1019, %v1074
  %v1076 = vpop.f32.mrb[0].mxu0
  %v1077 = vpop.f32.mrb[0].mxu0
  %v1078 = vadd.f32 %v1022, %v1077
  %v1079 = vpop.f32.mrb[0].mxu0
  %1080 = vmatprep.mubr.bf16.mxu0 0
  %1081 = vmatmul.mubr.bf16.gmra.mrb[0].mxu0 %v918
  %v1082 = vpop.f32.mrb[0].mxu0
  %v1083 = vadd.f32 %v1027, %v1082
  %v1084 = vpop.f32.mrb[0].mxu0
  %v1085 = vpop.f32.mrb[0].mxu0
  %v1086 = vpop.f32.mrb[0].mxu0
  %1087 = vdwg.mxu0
  %v1088 = vmax.f32 %v823, %v1067
  %v1089 = vmax.f32 %v824, %v1070
  %v1090 = vmax.f32 %v825, %v1075
  %v1091 = vmax.f32 %v826, %v1078
  %v1092 = vmax.f32 %v827, %v1083
  %s1093 = scalar_lea.vmem %s0, 300
  %v1094 = vld [vmem:[%s1093] sm:$0xff]
  %v1095 = vld [vmem:[%s1093 + $0x8] sm:$0xff]
  %v1096 = vld [vmem:[%s1093 + $0x10] sm:$0xf]
  %v1097 = vld [vmem:[%s1093 + $0x14] sm:$0xff]
  %v1098 = vld [vmem:[%s1093 + $0x1c] sm:$0xff]
  %v1099 = vld [vmem:[%s1093 + $0x24] sm:$0xf]
  %v1100 = vld [vmem:[%s1093 + $0x28] sm:$0xff]
  %v1101 = vld [vmem:[%s1093 + $0x30] sm:$0xff]
  %v1102 = vld [vmem:[%s1093 + $0x38] sm:$0xf]
  %v1103 = vld [vmem:[%s1093 + $0x3c] sm:$0xff]
  %v1104 = vld [vmem:[%s1093 + $0x44] sm:$0xff]
  %v1105 = vld [vmem:[%s1093 + $0x4c] sm:$0xf]
  %v1106 = vld [vmem:[%s1093 + $0x50] sm:$0x33]
  %v1107 = vld [vmem:[%s1093 + $0x58] sm:$0x33]
  %v1108 = vld [vmem:[%s1093 + $0x60] sm:$0x3]
  %v1124 = vunpack.c.l.b16 %v1094
  %v1125 = vunpack.c.h.b16 %v1094
  %v1126 = vunpack.c.l.b16 %v1095
  %v1127 = vunpack.c.h.b16 %v1095
  %v1128 = vunpack.c.l.b16 %v1096
  %v1129 = vunpack.c.l.b16 %v1097
  %v1130 = vunpack.c.h.b16 %v1097
  %v1131 = vunpack.c.l.b16 %v1098
  %v1132 = vunpack.c.h.b16 %v1098
  %v1133 = vunpack.c.l.b16 %v1099
  %v1134 = vunpack.c.l.b16 %v1100
  %v1135 = vunpack.c.h.b16 %v1100
  %v1136 = vunpack.c.l.b16 %v1101
  %v1137 = vunpack.c.h.b16 %v1101
  %v1138 = vunpack.c.l.b16 %v1102
  %v1139 = vunpack.c.l.b16 %v1103
  %v1140 = vunpack.c.h.b16 %v1103
  %v1141 = vunpack.c.l.b16 %v1104
  %v1142 = vunpack.c.h.b16 %v1104
  %v1143 = vunpack.c.l.b16 %v1105
  %v1144 = vunpack.c.l.b16 %v1106
  %v1145 = vunpack.c.h.b16 %v1106
  %v1146 = vunpack.c.l.b16 %v1107
  %v1147 = vunpack.c.h.b16 %v1107
  %v1148 = vunpack.c.l.b16 %v1108
  %v1149 = vpack.c.b16 %v1129, %v1124
  %v1150 = vpack.c.b16 %v1130, %v1125
  %v1151 = vpack.c.b16 %v1131, %v1126
  %v1152 = vpack.c.b16 %v1132, %v1127
  %v1153 = vpack.c.b16 %v1133, %v1128
  %v1154 = vpack.c.b16 %v1139, %v1134
  %v1155 = vpack.c.b16 %v1140, %v1135
  %v1156 = vpack.c.b16 %v1141, %v1136
  %v1157 = vpack.c.b16 %v1142, %v1137
  %v1158 = vpack.c.b16 %v1143, %v1138
  %v1159 = vpack.c.b16 %v1144, %v1144
  %v1160 = vpack.c.b16 %v1145, %v1145
  %v1161 = vpack.c.b16 %v1146, %v1146
  %v1162 = vpack.c.b16 %v1147, %v1147
  %v1163 = vpack.c.b16 %v1148, %v1148
  %v1177 = vsel %vm385, %v1153, 0
  %v1180 = vsel %vm385, %v1158, 0
  %v1183 = vsel %vm385, %v1163, 0
  %1185 = vmatprep.subr.bf16.mxu0 0
  %1186 = vmatpush1.bf16.msra.mxu0 %v313
  %1187 = vmatprep.subr.bf16.mxu0 0
  %1188 = vmatpush1.bf16.msra.mxu0 %v314
  %1189 = vmatprep.subr.bf16.mxu0 0
  %1190 = vmatpush1.bf16.msra.mxu0 %v315
  %1191 = vmatprep.subr.bf16.mxu0 0
  %1192 = vmatpush1.bf16.msra.mxu0 %v316
  %1193 = vmatprep.subr.bf16.mxu0 0
  %1194 = vmatpush1.bf16.msra.mxu0 %v317
  %1195 = vmatprep.subr.bf16.mxu0 0
  %1196 = vmatpush1.bf16.msra.mxu0 %v318
  %1197 = vmatprep.subr.bf16.mxu0 0
  %1198 = vmatpush1.bf16.msra.mxu0 %v319
  %1199 = vmatprep.subr.bf16.mxu0 0
  %1200 = vmatpush1.bf16.msra.mxu0 %v320
  %1201 = vmatprep.subr.bf16.mxu0 0
  %1202 = vmatpush1.bf16.msra.mxu0 %v321
  %1203 = vmatprep.subr.bf16.mxu0 0
  %1204 = vmatpush1.bf16.msra.mxu0 %v322
  %1205 = vmatprep.subr.bf16.mxu0 0
  %1206 = vmatpush1.bf16.msra.mxu0 %v323
  %1207 = vmatprep.subr.bf16.mxu0 0
  %1208 = vmatpush1.bf16.msra.mxu0 %v324
  %1209 = vmatprep.subr.bf16.mxu0 0
  %1210 = vmatpush1.bf16.msra.mxu0 %v325
  %1211 = vmatprep.subr.bf16.mxu0 0
  %1212 = vmatpush1.bf16.msra.mxu0 %v326
  %1213 = vmatprep.subr.bf16.mxu0 0
  %1214 = vmatpush1.bf16.msra.mxu0 %v327
  %1215 = vmatprep.subr.bf16.mxu0 0
  %1216 = vmatpush1.bf16.msra.mxu0 %v328
  %1217 = vmatprep.mubr.bf16.mxu0 %v1150
  %1218 = vmatmul.mubr.bf16.gmra.mrb[0].mxu0 %v1149
  %v1219 = vpop.f32.mrb[0].mxu0
  %v1220 = vadd.f32 0.0, %v1219
  %v1221 = vpop.f32.mrb[0].mxu0
  %v1222 = vpop.f32.mrb[0].mxu0
  %v1223 = vadd.f32 0.0, %v1222
  %v1224 = vpop.f32.mrb[0].mxu0
  %1225 = vmatprep.mubr.bf16.mxu0 %v1155
  %1226 = vmatmul.mubr.bf16.gmra.mrb[0].mxu0 %v1154
  %v1227 = vpop.f32.mrb[0].mxu0
  %v1228 = vadd.f32 0.0, %v1227
  %v1229 = vpop.f32.mrb[0].mxu0
  %v1230 = vpop.f32.mrb[0].mxu0
  %v1231 = vadd.f32 0.0, %v1230
  %v1232 = vpop.f32.mrb[0].mxu0
  %1233 = vmatprep.mubr.bf16.mxu0 %v1160
  %1234 = vmatmul.mubr.bf16.gmra.mrb[0].mxu0 %v1159
  %v1235 = vpop.f32.mrb[0].mxu0
  %v1236 = vadd.f32 0.0, %v1235
  %v1237 = vpop.f32.mrb[0].mxu0
  %v1238 = vpop.f32.mrb[0].mxu0
  %v1239 = vpop.f32.mrb[0].mxu0
  %1240 = vdwg.mxu0
  %1241 = vmatprep.subr.bf16.mxu0 0
  %1242 = vmatpush1.bf16.msra.mxu0 %v329
  %1243 = vmatprep.subr.bf16.mxu0 0
  %1244 = vmatpush1.bf16.msra.mxu0 %v330
  %1245 = vmatprep.subr.bf16.mxu0 0
  %1246 = vmatpush1.bf16.msra.mxu0 %v331
  %1247 = vmatprep.subr.bf16.mxu0 0
  %1248 = vmatpush1.bf16.msra.mxu0 %v332
  %1249 = vmatprep.subr.bf16.mxu0 0
  %1250 = vmatpush1.bf16.msra.mxu0 %v333
  %1251 = vmatprep.subr.bf16.mxu0 0
  %1252 = vmatpush1.bf16.msra.mxu0 %v334
  %1253 = vmatprep.subr.bf16.mxu0 0
  %1254 = vmatpush1.bf16.msra.mxu0 %v335
  %1255 = vmatprep.subr.bf16.mxu0 0
  %1256 = vmatpush1.bf16.msra.mxu0 %v336
  %1257 = vmatprep.subr.bf16.mxu0 0
  %1258 = vmatpush1.bf16.msra.mxu0 %v337
  %1259 = vmatprep.subr.bf16.mxu0 0
  %1260 = vmatpush1.bf16.msra.mxu0 %v338
  %1261 = vmatprep.subr.bf16.mxu0 0
  %1262 = vmatpush1.bf16.msra.mxu0 %v339
  %1263 = vmatprep.subr.bf16.mxu0 0
  %1264 = vmatpush1.bf16.msra.mxu0 %v340
  %1265 = vmatprep.subr.bf16.mxu0 0
  %1266 = vmatpush1.bf16.msra.mxu0 %v341
  %1267 = vmatprep.subr.bf16.mxu0 0
  %1268 = vmatpush1.bf16.msra.mxu0 %v342
  %1269 = vmatprep.subr.bf16.mxu0 0
  %1270 = vmatpush1.bf16.msra.mxu0 %v343
  %1271 = vmatprep.subr.bf16.mxu0 0
  %1272 = vmatpush1.bf16.msra.mxu0 %v344
  %1273 = vmatprep.mubr.bf16.mxu0 %v1152
  %1274 = vmatmul.mubr.bf16.gmra.mrb[0].mxu0 %v1151
  %v1275 = vpop.f32.mrb[0].mxu0
  %v1276 = vadd.f32 %v1220, %v1275
  %v1277 = vpop.f32.mrb[0].mxu0
  %v1278 = vpop.f32.mrb[0].mxu0
  %v1279 = vadd.f32 %v1223, %v1278
  %v1280 = vpop.f32.mrb[0].mxu0
  %1281 = vmatprep.mubr.bf16.mxu0 %v1157
  %1282 = vmatmul.mubr.bf16.gmra.mrb[0].mxu0 %v1156
  %v1283 = vpop.f32.mrb[0].mxu0
  %v1284 = vadd.f32 %v1228, %v1283
  %v1285 = vpop.f32.mrb[0].mxu0
  %v1286 = vpop.f32.mrb[0].mxu0
  %v1287 = vadd.f32 %v1231, %v1286
  %v1288 = vpop.f32.mrb[0].mxu0
  %1289 = vmatprep.mubr.bf16.mxu0 %v1162
  %1290 = vmatmul.mubr.bf16.gmra.mrb[0].mxu0 %v1161
  %v1291 = vpop.f32.mrb[0].mxu0
  %v1292 = vadd.f32 %v1236, %v1291
  %v1293 = vpop.f32.mrb[0].mxu0
  %v1294 = vpop.f32.mrb[0].mxu0
  %v1295 = vpop.f32.mrb[0].mxu0
  %1296 = vdwg.mxu0
  %1297 = vmatprep.subr.bf16.mxu0 0
  %1298 = vmatpush1.bf16.msra.mxu0 %v345
  %1299 = vmatprep.subr.bf16.mxu0 0
  %1300 = vmatpush1.bf16.msra.mxu0 %v346
  %1301 = vmatprep.subr.bf16.mxu0 0
  %1302 = vmatpush1.bf16.msra.mxu0 %v347
  %1303 = vmatprep.subr.bf16.mxu0 0
  %1304 = vmatpush1.bf16.msra.mxu0 %v348
  %1305 = vmatprep.subr.bf16.mxu0 0
  %1306 = vmatpush1.bf16.msra.mxu0 0
  %1307 = vmatprep.subr.bf16.mxu0 0
  %1308 = vmatpush1.bf16.msra.mxu0 0
  %1309 = vmatprep.subr.bf16.mxu0 0
  %1310 = vmatpush1.bf16.msra.mxu0 0
  %1311 = vmatprep.subr.bf16.mxu0 0
  %1312 = vmatpush1.bf16.msra.mxu0 0
  %1313 = vmatprep.subr.bf16.mxu0 0
  %1314 = vmatpush1.bf16.msra.mxu0 0
  %1315 = vmatprep.subr.bf16.mxu0 0
  %1316 = vmatpush1.bf16.msra.mxu0 0
  %1317 = vmatprep.subr.bf16.mxu0 0
  %1318 = vmatpush1.bf16.msra.mxu0 0
  %1319 = vmatprep.subr.bf16.mxu0 0
  %1320 = vmatpush1.bf16.msra.mxu0 0
  %1321 = vmatprep.subr.bf16.mxu0 0
  %1322 = vmatpush1.bf16.msra.mxu0 0
  %1323 = vmatprep.subr.bf16.mxu0 0
  %1324 = vmatpush1.bf16.msra.mxu0 0
  %1325 = vmatprep.subr.bf16.mxu0 0
  %1326 = vmatpush1.bf16.msra.mxu0 0
  %1327 = vmatprep.subr.bf16.mxu0 0
  %1328 = vmatpush1.bf16.msra.mxu0 0
  %1329 = vmatprep.mubr.bf16.mxu0 0
  %1330 = vmatmul.mubr.bf16.gmra.mrb[0].mxu0 %v1177
  %v1331 = vpop.f32.mrb[0].mxu0
  %v1332 = vadd.f32 %v1276, %v1331
  %v1333 = vpop.f32.mrb[0].mxu0
  %v1334 = vpop.f32.mrb[0].mxu0
  %v1335 = vadd.f32 %v1279, %v1334
  %v1336 = vpop.f32.mrb[0].mxu0
  %1337 = vmatprep.mubr.bf16.mxu0 0
  %1338 = vmatmul.mubr.bf16.gmra.mrb[0].mxu0 %v1180
  %v1339 = vpop.f32.mrb[0].mxu0
  %v1340 = vadd.f32 %v1284, %v1339
  %v1341 = vpop.f32.mrb[0].mxu0
  %v1342 = vpop.f32.mrb[0].mxu0
  %v1343 = vadd.f32 %v1287, %v1342
  %v1344 = vpop.f32.mrb[0].mxu0
  %1345 = vmatprep.mubr.bf16.mxu0 0
  %1346 = vmatmul.mubr.bf16.gmra.mrb[0].mxu0 %v1183
  %v1347 = vpop.f32.mrb[0].mxu0
  %v1348 = vadd.f32 %v1292, %v1347
  %v1349 = vpop.f32.mrb[0].mxu0
  %v1350 = vpop.f32.mrb[0].mxu0
  %v1351 = vpop.f32.mrb[0].mxu0
  %1352 = vdwg.mxu0
  %v1353 = vmax.f32 %v1088, %v1332
  %v1354 = vmax.f32 %v1089, %v1335
  %v1355 = vmax.f32 %v1090, %v1340
  %v1356 = vmax.f32 %v1091, %v1343
  %v1357 = vmax.f32 %v1092, %v1348
  %v1358 = vld [vmem:[%s2] sm:$0x1]
  %v1360 = vlaneseq
  %v1361 = vshrl.u32 %v1360, 7
  %v1362 = vsub.s32 0, %v1361
  %v1363 = vrot.slane %v1358, %v1362
  %v1365 = vadd.f32 %v1353, %v1363
  %v1366 = vadd.f32 %v1354, %v1363
  %v1367 = vadd.f32 %v1355, %v1363
  %v1368 = vadd.f32 %v1356, %v1363
  %v1369 = vadd.f32 %v1357, %v1363
  %v1370 = vmax.f32 %v1365, 0.0
  %v1371 = vmax.f32 %v1366, 0.0
  %v1372 = vmax.f32 %v1367, 0.0
  %v1373 = vmax.f32 %v1368, 0.0
  %v1374 = vmax.f32 %v1369, 0.0
  %v1375 = vpack.c.bf16 %v1371, %v1370
  %v1376 = vpack.c.bf16 %v1373, %v1372
  %v1377 = vpack.c.bf16 %v1374, %v1374
  %v1381 = vunpack.c.l.b16 %v1375
  %v1382 = vunpack.c.h.b16 %v1375
  %v1383 = vunpack.c.l.b16 %v1376
  %v1384 = vunpack.c.h.b16 %v1376
  %v1385 = vunpack.c.l.b16 %v1377
  %v1386 = vpack.c.b16 %v1381, %v1381
  %v1387 = vpack.c.b16 %v1382, %v1382
  %v1388 = vpack.c.b16 %v1383, %v1383
  %v1389 = vpack.c.b16 %v1384, %v1384
  %v1390 = vpack.c.b16 %v1385, %v1385
  %1396 = vst [vmem:[%s3] sm:$0xf] %v1386
  %1397 = vst [vmem:[%s3 + $0x4] sm:$0xf] %v1387
  %1398 = vst [vmem:[%s3 + $0x8] sm:$0xf] %v1388
  %1399 = vst [vmem:[%s3 + $0xc] sm:$0xf] %v1389
  %1400 = vst [vmem:[%s3 + $0x10] sm:$0x3] %v1390
  // Predicated region
  $region14: #{_lambda_.6} parent=0 // pred_check
    _
  $region15: #{_lambda_.6} parent=0 // pred_check_branch
    %1402 = sbr.rel (0) target = $region17
  $region16: #{_lambda_.6} parent=0 // pred_region
    _
  $region17: #{_lambda_.6} parent=0 // pred_fallthru
    _
  // Predicated region
  $region18: #{_lambda_.6} parent=0 // pred_check
    _
  $region19: #{_lambda_.6} parent=0 // pred_check_branch
    %1404 = sbr.rel (0) target = $region21
  $region20: #{_lambda_.6} parent=0 // pred_region
    _
  $region21: #{_lambda_.6} parent=0 // pred_fallthru
    _

// kernel: _lambda_.7
$region0: #{_lambda_.7}
  #allocation0 [shape = 'u32[]', space=smem, size = 0x4, offset = 0x4, fixed_abs, tag = 'smem constant byte address 0x4 - core index']
  #allocation1 [shape = 'u32[144,128]{1,0:T(1,128)}', space=vmem, size = 0x12000, scoped, tag = 'internal scratch']
  %s0 = inlined_call_operand.vmem [shape: bf16[4,1152], index: 0, kind: input, shape index: {}]
  %s1 = inlined_call_operand.vmem [shape: bf16[1152,256], index: 1, kind: input, shape index: {}]
  %s2 = inlined_call_operand.vmem [shape: f32[1,256], index: 2, kind: input, shape index: {}]
  %s3 = inlined_call_operand.vmem [shape: bf16[256,10], index: 3, kind: input, shape index: {}]
  %s4 = inlined_call_operand.vmem [shape: f32[1,10], index: 4, kind: input, shape index: {}]
  %s5 = inlined_call_operand.hbm [shape: f32[4,10], index: 5, kind: output, shape index: {}]
  %s6 = sld [smem:[#allocation0]]
  $region30: #{_lambda_.7} parent=0
    _
  %s8 = ssub.s32 1, %s6
  %s9 = scalar_select 0, %s8, %s6
  $region1: #{_lambda_.7} parent=0
    #allocation2 [shape = 'u8[2048]{0}', space=vmem, size = 0x800, scoped, tag = 'output window, operand 0, single buffered']
    #allocation3 [shape = 's32[1]{0}', space=sflag, size = 0x4, scoped, tag = 'scoped memory for _lambda_.7']
    %10 = vsyncpa [#allocation3], 0
    // Predicated region
    $region2: #{_lambda_.7} parent=1 // pred_check
      _
    $region3: #{_lambda_.7} parent=1 // pred_check_branch
      %12 = sbr.rel (0) target = $region5
    $region4: #{_lambda_.7} parent=1 // pred_region
      _
    $region5: #{_lambda_.7} parent=1 // pred_fallthru
      _
    // Predicated region
    $region6: #{_lambda_.7} parent=1 // pred_check
      _
    $region7: #{_lambda_.7} parent=1 // pred_check_branch
      %14 = sbr.rel (0) target = $region9
    $region8: #{_lambda_.7} parent=1 // pred_region
      _
    $region9: #{_lambda_.7} parent=1 // pred_fallthru
      _
    // Predicated region
    $region10: #{_lambda_.7} parent=1 // pred_check
      _
    $region11: #{_lambda_.7} parent=1 // pred_check_branch
      %16 = sbr.rel (0) target = $region13
    $region12: #{_lambda_.7} parent=1 // pred_region
      _
    $region13: #{_lambda_.7} parent=1 // pred_fallthru
      _
    // Predicated region
    $region14: #{_lambda_.7} parent=1 // pred_check
      _
    $region15: #{_lambda_.7} parent=1 // pred_check_branch
      %18 = sbr.rel (0) target = $region17
    $region16: #{_lambda_.7} parent=1 // pred_region
      _
    $region17: #{_lambda_.7} parent=1 // pred_fallthru
      _
    // Predicated region
    $region18: #{_lambda_.7} parent=1 // pred_check
      _
    $region19: #{_lambda_.7} parent=1 // pred_check_branch
      %20 = sbr.rel (0) target = $region21
    $region20: #{_lambda_.7} parent=1 // pred_region
      _
    $region21: #{_lambda_.7} parent=1 // pred_fallthru
      _
    %v22 = vld [vmem:[%s0] sm:$0xff]
    %v23 = vld [vmem:[%s0 + $0x8] sm:$0xff]
    %v24 = vld [vmem:[%s0 + $0x10] sm:$0x3]
    %v25 = vld [vmem:[%s1] sm:$0xff]
    %v26 = vld [vmem:[%s1 + $0x8] sm:$0xff]
    %v27 = vld [vmem:[%s1 + $0x10] sm:$0xff]
    %v28 = vld [vmem:[%s1 + $0x18] sm:$0xff]
    %v29 = vld [vmem:[%s1 + $0x20] sm:$0xff]
    %v30 = vld [vmem:[%s1 + $0x28] sm:$0xff]
    %v31 = vld [vmem:[%s1 + $0x30] sm:$0xff]
    %v32 = vld [vmem:[%s1 + $0x38] sm:$0xff]
    %v33 = vld [vmem:[%s1 + $0x40] sm:$0xff]
    %v34 = vld [vmem:[%s1 + $0x48] sm:$0xff]
    %v35 = vld [vmem:[%s1 + $0x50] sm:$0xff]
    %v36 = vld [vmem:[%s1 + $0x58] sm:$0xff]
    %v37 = vld [vmem:[%s1 + $0x60] sm:$0xff]
    %v38 = vld [vmem:[%s1 + $0x68] sm:$0xff]
    %v39 = vld [vmem:[%s1 + $0x70] sm:$0xff]
    %v40 = vld [vmem:[%s1 + $0x78] sm:$0xff]
    %v41 = vld [vmem:[%s1 + $0x80] sm:$0xff]
    %v42 = vld [vmem:[%s1 + $0x88] sm:$0xff]
    %v43 = vld [vmem:[%s1 + $0x90] sm:$0xff]
    %v44 = vld [vmem:[%s1 + $0x98] sm:$0xff]
    %v45 = vld [vmem:[%s1 + $0xa0] sm:$0xff]
    %v46 = vld [vmem:[%s1 + $0xa8] sm:$0xff]
    %v47 = vld [vmem:[%s1 + $0xb0] sm:$0xff]
    %v48 = vld [vmem:[%s1 + $0xb8] sm:$0xff]
    %v49 = vld [vmem:[%s1 + $0xc0] sm:$0xff]
    %v50 = vld [vmem:[%s1 + $0xc8] sm:$0xff]
    %v51 = vld [vmem:[%s1 + $0xd0] sm:$0xff]
    %v52 = vld [vmem:[%s1 + $0xd8] sm:$0xff]
    %v53 = vld [vmem:[%s1 + $0xe0] sm:$0xff]
    %v54 = vld [vmem:[%s1 + $0xe8] sm:$0xff]
    %v55 = vld [vmem:[%s1 + $0xf0] sm:$0xff]
    %v56 = vld [vmem:[%s1 + $0xf8] sm:$0xff]
    %v57 = vld [vmem:[%s1 + $0x100] sm:$0xff]
    %v58 = vld [vmem:[%s1 + $0x108] sm:$0xff]
    %v59 = vld [vmem:[%s1 + $0x110] sm:$0xff]
    %v60 = vld [vmem:[%s1 + $0x118] sm:$0xff]
    %v61 = vld [vmem:[%s1 + $0x120] sm:$0xff]
    %v62 = vld [vmem:[%s1 + $0x128] sm:$0xff]
    %v63 = vld [vmem:[%s1 + $0x130] sm:$0xff]
    %v64 = vld [vmem:[%s1 + $0x138] sm:$0xff]
    %v65 = vld [vmem:[%s1 + $0x140] sm:$0xff]
    %v66 = vld [vmem:[%s1 + $0x148] sm:$0xff]
    %v67 = vld [vmem:[%s1 + $0x150] sm:$0xff]
    %v68 = vld [vmem:[%s1 + $0x158] sm:$0xff]
    %v69 = vld [vmem:[%s1 + $0x160] sm:$0xff]
    %v70 = vld [vmem:[%s1 + $0x168] sm:$0xff]
    %v71 = vld [vmem:[%s1 + $0x170] sm:$0xff]
    %v72 = vld [vmem:[%s1 + $0x178] sm:$0xff]
    %v73 = vld [vmem:[%s1 + $0x180] sm:$0xff]
    %v74 = vld [vmem:[%s1 + $0x188] sm:$0xff]
    %v75 = vld [vmem:[%s1 + $0x190] sm:$0xff]
    %v76 = vld [vmem:[%s1 + $0x198] sm:$0xff]
    %v77 = vld [vmem:[%s1 + $0x1a0] sm:$0xff]
    %v78 = vld [vmem:[%s1 + $0x1a8] sm:$0xff]
    %v79 = vld [vmem:[%s1 + $0x1b0] sm:$0xff]
    %v80 = vld [vmem:[%s1 + $0x1b8] sm:$0xff]
    %v81 = vld [vmem:[%s1 + $0x1c0] sm:$0xff]
    %v82 = vld [vmem:[%s1 + $0x1c8] sm:$0xff]
    %v83 = vld [vmem:[%s1 + $0x1d0] sm:$0xff]
    %v84 = vld [vmem:[%s1 + $0x1d8] sm:$0xff]
    %v85 = vld [vmem:[%s1 + $0x1e0] sm:$0xff]
    %v86 = vld [vmem:[%s1 + $0x1e8] sm:$0xff]
    %v87 = vld [vmem:[%s1 + $0x1f0] sm:$0xff]
    %v88 = vld [vmem:[%s1 + $0x1f8] sm:$0xff]
    %v89 = vld [vmem:[%s1 + $0x200] sm:$0xff]
    %v90 = vld [vmem:[%s1 + $0x208] sm:$0xff]
    %v91 = vld [vmem:[%s1 + $0x210] sm:$0xff]
    %v92 = vld [vmem:[%s1 + $0x218] sm:$0xff]
    %v93 = vld [vmem:[%s1 + $0x220] sm:$0xff]
    %v94 = vld [vmem:[%s1 + $0x228] sm:$0xff]
    %v95 = vld [vmem:[%s1 + $0x230] sm:$0xff]
    %v96 = vld [vmem:[%s1 + $0x238] sm:$0xff]
    %v97 = vld [vmem:[%s1 + $0x240] sm:$0xff]
    %v98 = vld [vmem:[%s1 + $0x248] sm:$0xff]
    %v99 = vld [vmem:[%s1 + $0x250] sm:$0xff]
    %v100 = vld [vmem:[%s1 + $0x258] sm:$0xff]
    %v101 = vld [vmem:[%s1 + $0x260] sm:$0xff]
    %v102 = vld [vmem:[%s1 + $0x268] sm:$0xff]
    %v103 = vld [vmem:[%s1 + $0x270] sm:$0xff]
    %v104 = vld [vmem:[%s1 + $0x278] sm:$0xff]
    %v105 = vld [vmem:[%s1 + $0x280] sm:$0xff]
    %v106 = vld [vmem:[%s1 + $0x288] sm:$0xff]
    %v107 = vld [vmem:[%s1 + $0x290] sm:$0xff]
    %v108 = vld [vmem:[%s1 + $0x298] sm:$0xff]
    %v109 = vld [vmem:[%s1 + $0x2a0] sm:$0xff]
    %v110 = vld [vmem:[%s1 + $0x2a8] sm:$0xff]
    %v111 = vld [vmem:[%s1 + $0x2b0] sm:$0xff]
    %v112 = vld [vmem:[%s1 + $0x2b8] sm:$0xff]
    %v113 = vld [vmem:[%s1 + $0x2c0] sm:$0xff]
    %v114 = vld [vmem:[%s1 + $0x2c8] sm:$0xff]
    %v115 = vld [vmem:[%s1 + $0x2d0] sm:$0xff]
    %v116 = vld [vmem:[%s1 + $0x2d8] sm:$0xff]
    %v117 = vld [vmem:[%s1 + $0x2e0] sm:$0xff]
    %v118 = vld [vmem:[%s1 + $0x2e8] sm:$0xff]
    %v119 = vld [vmem:[%s1 + $0x2f0] sm:$0xff]
    %v120 = vld [vmem:[%s1 + $0x2f8] sm:$0xff]
    %v121 = vld [vmem:[%s1 + $0x300] sm:$0xff]
    %v122 = vld [vmem:[%s1 + $0x308] sm:$0xff]
    %v123 = vld [vmem:[%s1 + $0x310] sm:$0xff]
    %v124 = vld [vmem:[%s1 + $0x318] sm:$0xff]
    %v125 = vld [vmem:[%s1 + $0x320] sm:$0xff]
    %v126 = vld [vmem:[%s1 + $0x328] sm:$0xff]
    %v127 = vld [vmem:[%s1 + $0x330] sm:$0xff]
    %v128 = vld [vmem:[%s1 + $0x338] sm:$0xff]
    %v129 = vld [vmem:[%s1 + $0x340] sm:$0xff]
    %v130 = vld [vmem:[%s1 + $0x348] sm:$0xff]
    %v131 = vld [vmem:[%s1 + $0x350] sm:$0xff]
    %v132 = vld [vmem:[%s1 + $0x358] sm:$0xff]
    %v133 = vld [vmem:[%s1 + $0x360] sm:$0xff]
    %v134 = vld [vmem:[%s1 + $0x368] sm:$0xff]
    %v135 = vld [vmem:[%s1 + $0x370] sm:$0xff]
    %v136 = vld [vmem:[%s1 + $0x378] sm:$0xff]
    %v137 = vld [vmem:[%s1 + $0x380] sm:$0xff]
    %v138 = vld [vmem:[%s1 + $0x388] sm:$0xff]
    %v139 = vld [vmem:[%s1 + $0x390] sm:$0xff]
    %v140 = vld [vmem:[%s1 + $0x398] sm:$0xff]
    %v141 = vld [vmem:[%s1 + $0x3a0] sm:$0xff]
    %v142 = vld [vmem:[%s1 + $0x3a8] sm:$0xff]
    %v143 = vld [vmem:[%s1 + $0x3b0] sm:$0xff]
    %v144 = vld [vmem:[%s1 + $0x3b8] sm:$0xff]
    %v145 = vld [vmem:[%s1 + $0x3c0] sm:$0xff]
    %v146 = vld [vmem:[%s1 + $0x3c8] sm:$0xff]
    %v147 = vld [vmem:[%s1 + $0x3d0] sm:$0xff]
    %v148 = vld [vmem:[%s1 + $0x3d8] sm:$0xff]
    %v149 = vld [vmem:[%s1 + $0x3e0] sm:$0xff]
    %v150 = vld [vmem:[%s1 + $0x3e8] sm:$0xff]
    %v151 = vld [vmem:[%s1 + $0x3f0] sm:$0xff]
    %v152 = vld [vmem:[%s1 + $0x3f8] sm:$0xff]
    %v153 = vld [vmem:[%s1 + $0x400] sm:$0xff]
    %v154 = vld [vmem:[%s1 + $0x408] sm:$0xff]
    %v155 = vld [vmem:[%s1 + $0x410] sm:$0xff]
    %v156 = vld [vmem:[%s1 + $0x418] sm:$0xff]
    %v157 = vld [vmem:[%s1 + $0x420] sm:$0xff]
    %v158 = vld [vmem:[%s1 + $0x428] sm:$0xff]
    %v159 = vld [vmem:[%s1 + $0x430] sm:$0xff]
    %v160 = vld [vmem:[%s1 + $0x438] sm:$0xff]
    %v161 = vld [vmem:[%s1 + $0x440] sm:$0xff]
    %v162 = vld [vmem:[%s1 + $0x448] sm:$0xff]
    %v163 = vld [vmem:[%s1 + $0x450] sm:$0xff]
    %v164 = vld [vmem:[%s1 + $0x458] sm:$0xff]
    %v165 = vld [vmem:[%s1 + $0x460] sm:$0xff]
    %v166 = vld [vmem:[%s1 + $0x468] sm:$0xff]
    %v167 = vld [vmem:[%s1 + $0x470] sm:$0xff]
    %v168 = vld [vmem:[%s1 + $0x478] sm:$0xff]
    %v169 = vld [vmem:[%s2] sm:$0x3]
    %v171 = vlaneseq
    %v172 = vshrl.u32 %v171, 7
    %v173 = vsub.s32 0, %v172
    %v174 = vrot.slane %v169, %v173
    %v175 = vlaneseq
    %v176 = vshrl.u32 %v175, 7
    %v177 = vsub.s32 1, %v176
    %v178 = vrot.slane %v169, %v177
    %v184 = vcombine.high %v22, %v22
    %v186 = vunpack.c.l.s4 1983009808
    %v187 = vunpack.c.0.s8 %v186
    %v188 = vlaneseq
    %v189 = vshrl.u32 %v188, 7
    %v190 = vsub.s32 %v187, %v189
    %v191 = vrot.slane %v22, %v190
    %v193 = vunpack.c.l.s4 1983009808
    %v194 = vunpack.c.0.s8 %v193
    %v195 = vlaneseq
    %v196 = vshrl.u32 %v195, 7
    %v197 = vsub.s32 %v194, %v196
    %v198 = vrot.slane %v184, %v197
    %v199 = vcombine.high %v191, %v191
    %v200 = vcombine.high %v198, %v198
    %v201 = vcombine.high %v23, %v23
    %v203 = vunpack.c.l.s4 1983009808
    %v204 = vunpack.c.0.s8 %v203
    %v205 = vlaneseq
    %v206 = vshrl.u32 %v205, 7
    %v207 = vsub.s32 %v204, %v206
    %v208 = vrot.slane %v23, %v207
    %v210 = vunpack.c.l.s4 1983009808
    %v211 = vunpack.c.0.s8 %v210
    %v212 = vlaneseq
    %v213 = vshrl.u32 %v212, 7
    %v214 = vsub.s32 %v211, %v213
    %v215 = vrot.slane %v201, %v214
    %v216 = vcombine.high %v208, %v208
    %v217 = vcombine.high %v215, %v215
    %v219 = vunpack.c.l.s4 1983009808
    %v220 = vunpack.c.0.s8 %v219
    %v221 = vlaneseq
    %v222 = vshrl.u32 %v221, 7
    %v223 = vsub.s32 %v220, %v222
    %v224 = vrot.slane %v24, %v223
    %v378 = vunpack.c.l.b16 %v25
    %v379 = vunpack.c.h.b16 %v25
    %v380 = vunpack.c.l.b16 %v26
    %v381 = vunpack.c.h.b16 %v26
    %v382 = vunpack.c.l.b16 %v27
    %v383 = vunpack.c.h.b16 %v27
    %v384 = vunpack.c.l.b16 %v28
    %v385 = vunpack.c.h.b16 %v28
    %v386 = vunpack.c.l.b16 %v29
    %v387 = vunpack.c.h.b16 %v29
    %v388 = vunpack.c.l.b16 %v30
    %v389 = vunpack.c.h.b16 %v30
    %v390 = vunpack.c.l.b16 %v31
    %v391 = vunpack.c.h.b16 %v31
    %v392 = vunpack.c.l.b16 %v32
    %v393 = vunpack.c.h.b16 %v32
    %v394 = vunpack.c.l.b16 %v33
    %v395 = vunpack.c.h.b16 %v33
    %v396 = vunpack.c.l.b16 %v34
    %v397 = vunpack.c.h.b16 %v34
    %v398 = vunpack.c.l.b16 %v35
    %v399 = vunpack.c.h.b16 %v35
    %v400 = vunpack.c.l.b16 %v36
    %v401 = vunpack.c.h.b16 %v36
    %v402 = vunpack.c.l.b16 %v37
    %v403 = vunpack.c.h.b16 %v37
    %v404 = vunpack.c.l.b16 %v38
    %v405 = vunpack.c.h.b16 %v38
    %v406 = vunpack.c.l.b16 %v39
    %v407 = vunpack.c.h.b16 %v39
    %v408 = vunpack.c.l.b16 %v40
    %v409 = vunpack.c.h.b16 %v40
    %v410 = vunpack.c.l.b16 %v41
    %v411 = vunpack.c.h.b16 %v41
    %v412 = vunpack.c.l.b16 %v42
    %v413 = vunpack.c.h.b16 %v42
    %v414 = vunpack.c.l.b16 %v43
    %v415 = vunpack.c.h.b16 %v43
    %v416 = vunpack.c.l.b16 %v44
    %v417 = vunpack.c.h.b16 %v44
    %v418 = vunpack.c.l.b16 %v45
    %v419 = vunpack.c.h.b16 %v45
    %v420 = vunpack.c.l.b16 %v46
    %v421 = vunpack.c.h.b16 %v46
    %v422 = vunpack.c.l.b16 %v47
    %v423 = vunpack.c.h.b16 %v47
    %v424 = vunpack.c.l.b16 %v48
    %v425 = vunpack.c.h.b16 %v48
    %v426 = vunpack.c.l.b16 %v49
    %v427 = vunpack.c.h.b16 %v49
    %v428 = vunpack.c.l.b16 %v50
    %v429 = vunpack.c.h.b16 %v50
    %v430 = vunpack.c.l.b16 %v51
    %v431 = vunpack.c.h.b16 %v51
    %v432 = vunpack.c.l.b16 %v52
    %v433 = vunpack.c.h.b16 %v52
    %v434 = vunpack.c.l.b16 %v53
    %v435 = vunpack.c.h.b16 %v53
    %v436 = vunpack.c.l.b16 %v54
    %v437 = vunpack.c.h.b16 %v54
    %v438 = vunpack.c.l.b16 %v55
    %v439 = vunpack.c.h.b16 %v55
    %v440 = vunpack.c.l.b16 %v56
    %v441 = vunpack.c.h.b16 %v56
    %v442 = vunpack.c.l.b16 %v57
    %v443 = vunpack.c.h.b16 %v57
    %v444 = vunpack.c.l.b16 %v58
    %v445 = vunpack.c.h.b16 %v58
    %v446 = vunpack.c.l.b16 %v59
    %v447 = vunpack.c.h.b16 %v59
    %v448 = vunpack.c.l.b16 %v60
    %v449 = vunpack.c.h.b16 %v60
    %v450 = vunpack.c.l.b16 %v61
    %v451 = vunpack.c.h.b16 %v61
    %v452 = vunpack.c.l.b16 %v62
    %v453 = vunpack.c.h.b16 %v62
    %v454 = vunpack.c.l.b16 %v63
    %v455 = vunpack.c.h.b16 %v63
    %v456 = vunpack.c.l.b16 %v64
    %v457 = vunpack.c.h.b16 %v64
    %v458 = vunpack.c.l.b16 %v65
    %v459 = vunpack.c.h.b16 %v65
    %v460 = vunpack.c.l.b16 %v66
    %v461 = vunpack.c.h.b16 %v66
    %v462 = vunpack.c.l.b16 %v67
    %v463 = vunpack.c.h.b16 %v67
    %v464 = vunpack.c.l.b16 %v68
    %v465 = vunpack.c.h.b16 %v68
    %v466 = vunpack.c.l.b16 %v69
    %v467 = vunpack.c.h.b16 %v69
    %v468 = vunpack.c.l.b16 %v70
    %v469 = vunpack.c.h.b16 %v70
    %v470 = vunpack.c.l.b16 %v71
    %v471 = vunpack.c.h.b16 %v71
    %v472 = vunpack.c.l.b16 %v72
    %v473 = vunpack.c.h.b16 %v72
    %v474 = vunpack.c.l.b16 %v73
    %v475 = vunpack.c.h.b16 %v73
    %v476 = vunpack.c.l.b16 %v74
    %v477 = vunpack.c.h.b16 %v74
    %v478 = vunpack.c.l.b16 %v75
    %v479 = vunpack.c.h.b16 %v75
    %v480 = vunpack.c.l.b16 %v76
    %v481 = vunpack.c.h.b16 %v76
    %v482 = vunpack.c.l.b16 %v77
    %v483 = vunpack.c.h.b16 %v77
    %v484 = vunpack.c.l.b16 %v78
    %v485 = vunpack.c.h.b16 %v78
    %v486 = vunpack.c.l.b16 %v79
    %v487 = vunpack.c.h.b16 %v79
    %v488 = vunpack.c.l.b16 %v80
    %v489 = vunpack.c.h.b16 %v80
    %v490 = vunpack.c.l.b16 %v81
    %v491 = vunpack.c.h.b16 %v81
    %v492 = vunpack.c.l.b16 %v82
    %v493 = vunpack.c.h.b16 %v82
    %v494 = vunpack.c.l.b16 %v83
    %v495 = vunpack.c.h.b16 %v83
    %v496 = vunpack.c.l.b16 %v84
    %v497 = vunpack.c.h.b16 %v84
    %v498 = vunpack.c.l.b16 %v85
    %v499 = vunpack.c.h.b16 %v85
    %v500 = vunpack.c.l.b16 %v86
    %v501 = vunpack.c.h.b16 %v86
    %v502 = vunpack.c.l.b16 %v87
    %v503 = vunpack.c.h.b16 %v87
    %v504 = vunpack.c.l.b16 %v88
    %v505 = vunpack.c.h.b16 %v88
    %v506 = vunpack.c.l.b16 %v89
    %v507 = vunpack.c.h.b16 %v89
    %v508 = vunpack.c.l.b16 %v90
    %v509 = vunpack.c.h.b16 %v90
    %v510 = vunpack.c.l.b16 %v91
    %v511 = vunpack.c.h.b16 %v91
    %v512 = vunpack.c.l.b16 %v92
    %v513 = vunpack.c.h.b16 %v92
    %v514 = vunpack.c.l.b16 %v93
    %v515 = vunpack.c.h.b16 %v93
    %v516 = vunpack.c.l.b16 %v94
    %v517 = vunpack.c.h.b16 %v94
    %v518 = vunpack.c.l.b16 %v95
    %v519 = vunpack.c.h.b16 %v95
    %v520 = vunpack.c.l.b16 %v96
    %v521 = vunpack.c.h.b16 %v96
    %v522 = vunpack.c.l.b16 %v97
    %v523 = vunpack.c.h.b16 %v97
    %v524 = vunpack.c.l.b16 %v98
    %v525 = vunpack.c.h.b16 %v98
    %v526 = vunpack.c.l.b16 %v99
    %v527 = vunpack.c.h.b16 %v99
    %v528 = vunpack.c.l.b16 %v100
    %v529 = vunpack.c.h.b16 %v100
    %v530 = vunpack.c.l.b16 %v101
    %v531 = vunpack.c.h.b16 %v101
    %v532 = vunpack.c.l.b16 %v102
    %v533 = vunpack.c.h.b16 %v102
    %v534 = vunpack.c.l.b16 %v103
    %v535 = vunpack.c.h.b16 %v103
    %v536 = vunpack.c.l.b16 %v104
    %v537 = vunpack.c.h.b16 %v104
    %v538 = vunpack.c.l.b16 %v105
    %v539 = vunpack.c.h.b16 %v105
    %v540 = vunpack.c.l.b16 %v106
    %v541 = vunpack.c.h.b16 %v106
    %v542 = vunpack.c.l.b16 %v107
    %v543 = vunpack.c.h.b16 %v107
    %v544 = vunpack.c.l.b16 %v108
    %v545 = vunpack.c.h.b16 %v108
    %v546 = vunpack.c.l.b16 %v109
    %v547 = vunpack.c.h.b16 %v109
    %v548 = vunpack.c.l.b16 %v110
    %v549 = vunpack.c.h.b16 %v110
    %v550 = vunpack.c.l.b16 %v111
    %v551 = vunpack.c.h.b16 %v111
    %v552 = vunpack.c.l.b16 %v112
    %v553 = vunpack.c.h.b16 %v112
    %v554 = vunpack.c.l.b16 %v113
    %v555 = vunpack.c.h.b16 %v113
    %v556 = vunpack.c.l.b16 %v114
    %v557 = vunpack.c.h.b16 %v114
    %v558 = vunpack.c.l.b16 %v115
    %v559 = vunpack.c.h.b16 %v115
    %v560 = vunpack.c.l.b16 %v116
    %v561 = vunpack.c.h.b16 %v116
    %v562 = vunpack.c.l.b16 %v117
    %v563 = vunpack.c.h.b16 %v117
    %v564 = vunpack.c.l.b16 %v118
    %v565 = vunpack.c.h.b16 %v118
    %v566 = vunpack.c.l.b16 %v119
    %v567 = vunpack.c.h.b16 %v119
    %v568 = vunpack.c.l.b16 %v120
    %v569 = vunpack.c.h.b16 %v120
    %v570 = vunpack.c.l.b16 %v121
    %v571 = vunpack.c.h.b16 %v121
    %v572 = vunpack.c.l.b16 %v122
    %v573 = vunpack.c.h.b16 %v122
    %v574 = vunpack.c.l.b16 %v123
    %v575 = vunpack.c.h.b16 %v123
    %v576 = vunpack.c.l.b16 %v124
    %v577 = vunpack.c.h.b16 %v124
    %v578 = vunpack.c.l.b16 %v125
    %v579 = vunpack.c.h.b16 %v125
    %v580 = vunpack.c.l.b16 %v126
    %v581 = vunpack.c.h.b16 %v126
    %v582 = vunpack.c.l.b16 %v127
    %v583 = vunpack.c.h.b16 %v127
    %v584 = vunpack.c.l.b16 %v128
    %v585 = vunpack.c.h.b16 %v128
    %v586 = vunpack.c.l.b16 %v129
    %v587 = vunpack.c.h.b16 %v129
    %v588 = vunpack.c.l.b16 %v130
    %v589 = vunpack.c.h.b16 %v130
    %v590 = vunpack.c.l.b16 %v131
    %v591 = vunpack.c.h.b16 %v131
    %v592 = vunpack.c.l.b16 %v132
    %v593 = vunpack.c.h.b16 %v132
    %v594 = vunpack.c.l.b16 %v133
    %v595 = vunpack.c.h.b16 %v133
    %v596 = vunpack.c.l.b16 %v134
    %v597 = vunpack.c.h.b16 %v134
    %v598 = vunpack.c.l.b16 %v135
    %v599 = vunpack.c.h.b16 %v135
    %v600 = vunpack.c.l.b16 %v136
    %v601 = vunpack.c.h.b16 %v136
    %v602 = vunpack.c.l.b16 %v137
    %v603 = vunpack.c.h.b16 %v137
    %v604 = vunpack.c.l.b16 %v138
    %v605 = vunpack.c.h.b16 %v138
    %v606 = vunpack.c.l.b16 %v139
    %v607 = vunpack.c.h.b16 %v139
    %v608 = vunpack.c.l.b16 %v140
    %v609 = vunpack.c.h.b16 %v140
    %v610 = vunpack.c.l.b16 %v141
    %v611 = vunpack.c.h.b16 %v141
    %v612 = vunpack.c.l.b16 %v142
    %v613 = vunpack.c.h.b16 %v142
    %v614 = vunpack.c.l.b16 %v143
    %v615 = vunpack.c.h.b16 %v143
    %v616 = vunpack.c.l.b16 %v144
    %v617 = vunpack.c.h.b16 %v144
    %v618 = vunpack.c.l.b16 %v145
    %v619 = vunpack.c.h.b16 %v145
    %v620 = vunpack.c.l.b16 %v146
    %v621 = vunpack.c.h.b16 %v146
    %v622 = vunpack.c.l.b16 %v147
    %v623 = vunpack.c.h.b16 %v147
    %v624 = vunpack.c.l.b16 %v148
    %v625 = vunpack.c.h.b16 %v148
    %v626 = vunpack.c.l.b16 %v149
    %v627 = vunpack.c.h.b16 %v149
    %v628 = vunpack.c.l.b16 %v150
    %v629 = vunpack.c.h.b16 %v150
    %v630 = vunpack.c.l.b16 %v151
    %v631 = vunpack.c.h.b16 %v151
    %v632 = vunpack.c.l.b16 %v152
    %v633 = vunpack.c.h.b16 %v152
    %v634 = vunpack.c.l.b16 %v153
    %v635 = vunpack.c.h.b16 %v153
    %v636 = vunpack.c.l.b16 %v154
    %v637 = vunpack.c.h.b16 %v154
    %v638 = vunpack.c.l.b16 %v155
    %v639 = vunpack.c.h.b16 %v155
    %v640 = vunpack.c.l.b16 %v156
    %v641 = vunpack.c.h.b16 %v156
    %v642 = vunpack.c.l.b16 %v157
    %v643 = vunpack.c.h.b16 %v157
    %v644 = vunpack.c.l.b16 %v158
    %v645 = vunpack.c.h.b16 %v158
    %v646 = vunpack.c.l.b16 %v159
    %v647 = vunpack.c.h.b16 %v159
    %v648 = vunpack.c.l.b16 %v160
    %v649 = vunpack.c.h.b16 %v160
    %v650 = vunpack.c.l.b16 %v161
    %v651 = vunpack.c.h.b16 %v161
    %v652 = vunpack.c.l.b16 %v162
    %v653 = vunpack.c.h.b16 %v162
    %v654 = vunpack.c.l.b16 %v163
    %v655 = vunpack.c.h.b16 %v163
    %v656 = vunpack.c.l.b16 %v164
    %v657 = vunpack.c.h.b16 %v164
    %v658 = vunpack.c.l.b16 %v165
    %v659 = vunpack.c.h.b16 %v165
    %v660 = vunpack.c.l.b16 %v166
    %v661 = vunpack.c.h.b16 %v166
    %v662 = vunpack.c.l.b16 %v167
    %v663 = vunpack.c.h.b16 %v167
    %v664 = vunpack.c.l.b16 %v168
    %v665 = vunpack.c.h.b16 %v168
    %v666 = vpack.c.b16 %v380, %v378
    %v667 = vpack.c.b16 %v381, %v379
    %v668 = vpack.c.b16 %v384, %v382
    %v669 = vpack.c.b16 %v385, %v383
    %v670 = vpack.c.b16 %v388, %v386
    %v671 = vpack.c.b16 %v389, %v387
    %v672 = vpack.c.b16 %v392, %v390
    %v673 = vpack.c.b16 %v393, %v391
    %v674 = vpack.c.b16 %v396, %v394
    %v675 = vpack.c.b16 %v397, %v395
    %v676 = vpack.c.b16 %v400, %v398
    %v677 = vpack.c.b16 %v401, %v399
    %v678 = vpack.c.b16 %v404, %v402
    %v679 = vpack.c.b16 %v405, %v403
    %v680 = vpack.c.b16 %v408, %v406
    %v681 = vpack.c.b16 %v409, %v407
    %v682 = vpack.c.b16 %v412, %v410
    %v683 = vpack.c.b16 %v413, %v411
    %v684 = vpack.c.b16 %v416, %v414
    %v685 = vpack.c.b16 %v417, %v415
    %v686 = vpack.c.b16 %v420, %v418
    %v687 = vpack.c.b16 %v421, %v419
    %v688 = vpack.c.b16 %v424, %v422
    %v689 = vpack.c.b16 %v425, %v423
    %v690 = vpack.c.b16 %v428, %v426
    %v691 = vpack.c.b16 %v429, %v427
    %v692 = vpack.c.b16 %v432, %v430
    %v693 = vpack.c.b16 %v433, %v431
    %v694 = vpack.c.b16 %v436, %v434
    %v695 = vpack.c.b16 %v437, %v435
    %v696 = vpack.c.b16 %v440, %v438
    %v697 = vpack.c.b16 %v441, %v439
    %v698 = vpack.c.b16 %v444, %v442
    %v699 = vpack.c.b16 %v445, %v443
    %v700 = vpack.c.b16 %v448, %v446
    %v701 = vpack.c.b16 %v449, %v447
    %v702 = vpack.c.b16 %v452, %v450
    %v703 = vpack.c.b16 %v453, %v451
    %v704 = vpack.c.b16 %v456, %v454
    %v705 = vpack.c.b16 %v457, %v455
    %v706 = vpack.c.b16 %v460, %v458
    %v707 = vpack.c.b16 %v461, %v459
    %v708 = vpack.c.b16 %v464, %v462
    %v709 = vpack.c.b16 %v465, %v463
    %v710 = vpack.c.b16 %v468, %v466
    %v711 = vpack.c.b16 %v469, %v467
    %v712 = vpack.c.b16 %v472, %v470
    %v713 = vpack.c.b16 %v473, %v471
    %v714 = vpack.c.b16 %v476, %v474
    %v715 = vpack.c.b16 %v477, %v475
    %v716 = vpack.c.b16 %v480, %v478
    %v717 = vpack.c.b16 %v481, %v479
    %v718 = vpack.c.b16 %v484, %v482
    %v719 = vpack.c.b16 %v485, %v483
    %v720 = vpack.c.b16 %v488, %v486
    %v721 = vpack.c.b16 %v489, %v487
    %v722 = vpack.c.b16 %v492, %v490
    %v723 = vpack.c.b16 %v493, %v491
    %v724 = vpack.c.b16 %v496, %v494
    %v725 = vpack.c.b16 %v497, %v495
    %v726 = vpack.c.b16 %v500, %v498
    %v727 = vpack.c.b16 %v501, %v499
    %v728 = vpack.c.b16 %v504, %v502
    %v729 = vpack.c.b16 %v505, %v503
    %v730 = vpack.c.b16 %v508, %v506
    %v731 = vpack.c.b16 %v509, %v507
    %v732 = vpack.c.b16 %v512, %v510
    %v733 = vpack.c.b16 %v513, %v511
    %v734 = vpack.c.b16 %v516, %v514
    %v735 = vpack.c.b16 %v517, %v515
    %v736 = vpack.c.b16 %v520, %v518
    %v737 = vpack.c.b16 %v521, %v519
    %v738 = vpack.c.b16 %v524, %v522
    %v739 = vpack.c.b16 %v525, %v523
    %v740 = vpack.c.b16 %v528, %v526
    %v741 = vpack.c.b16 %v529, %v527
    %v742 = vpack.c.b16 %v532, %v530
    %v743 = vpack.c.b16 %v533, %v531
    %v744 = vpack.c.b16 %v536, %v534
    %v745 = vpack.c.b16 %v537, %v535
    %v746 = vpack.c.b16 %v540, %v538
    %v747 = vpack.c.b16 %v541, %v539
    %v748 = vpack.c.b16 %v544, %v542
    %v749 = vpack.c.b16 %v545, %v543
    %v750 = vpack.c.b16 %v548, %v546
    %v751 = vpack.c.b16 %v549, %v547
    %v752 = vpack.c.b16 %v552, %v550
    %v753 = vpack.c.b16 %v553, %v551
    %v754 = vpack.c.b16 %v556, %v554
    %v755 = vpack.c.b16 %v557, %v555
    %v756 = vpack.c.b16 %v560, %v558
    %v757 = vpack.c.b16 %v561, %v559
    %v758 = vpack.c.b16 %v564, %v562
    %v759 = vpack.c.b16 %v565, %v563
    %v760 = vpack.c.b16 %v568, %v566
    %v761 = vpack.c.b16 %v569, %v567
    %v762 = vpack.c.b16 %v572, %v570
    %v763 = vpack.c.b16 %v573, %v571
    %v764 = vpack.c.b16 %v576, %v574
    %v765 = vpack.c.b16 %v577, %v575
    %v766 = vpack.c.b16 %v580, %v578
    %v767 = vpack.c.b16 %v581, %v579
    %v768 = vpack.c.b16 %v584, %v582
    %v769 = vpack.c.b16 %v585, %v583
    %v770 = vpack.c.b16 %v588, %v586
    %v771 = vpack.c.b16 %v589, %v587
    %v772 = vpack.c.b16 %v592, %v590
    %v773 = vpack.c.b16 %v593, %v591
    %v774 = vpack.c.b16 %v596, %v594
    %v775 = vpack.c.b16 %v597, %v595
    %v776 = vpack.c.b16 %v600, %v598
    %v777 = vpack.c.b16 %v601, %v599
    %v778 = vpack.c.b16 %v604, %v602
    %v779 = vpack.c.b16 %v605, %v603
    %v780 = vpack.c.b16 %v608, %v606
    %v781 = vpack.c.b16 %v609, %v607
    %v782 = vpack.c.b16 %v612, %v610
    %v783 = vpack.c.b16 %v613, %v611
    %v784 = vpack.c.b16 %v616, %v614
    %v785 = vpack.c.b16 %v617, %v615
    %v786 = vpack.c.b16 %v620, %v618
    %v787 = vpack.c.b16 %v621, %v619
    %v788 = vpack.c.b16 %v624, %v622
    %v789 = vpack.c.b16 %v625, %v623
    %v790 = vpack.c.b16 %v628, %v626
    %v791 = vpack.c.b16 %v629, %v627
    %v792 = vpack.c.b16 %v632, %v630
    %v793 = vpack.c.b16 %v633, %v631
    %v794 = vpack.c.b16 %v636, %v634
    %v795 = vpack.c.b16 %v637, %v635
    %v796 = vpack.c.b16 %v640, %v638
    %v797 = vpack.c.b16 %v641, %v639
    %v798 = vpack.c.b16 %v644, %v642
    %v799 = vpack.c.b16 %v645, %v643
    %v800 = vpack.c.b16 %v648, %v646
    %v801 = vpack.c.b16 %v649, %v647
    %v802 = vpack.c.b16 %v652, %v650
    %v803 = vpack.c.b16 %v653, %v651
    %v804 = vpack.c.b16 %v656, %v654
    %v805 = vpack.c.b16 %v657, %v655
    %v806 = vpack.c.b16 %v660, %v658
    %v807 = vpack.c.b16 %v661, %v659
    %v808 = vpack.c.b16 %v664, %v662
    %v809 = vpack.c.b16 %v665, %v663
    %954 = vmatprep.subr.bf16.mxu0 %v667
    %955 = vmatpush1.bf16.msra.mxu0 %v666
    %956 = vmatprep.subr.bf16.mxu0 %v669
    %957 = vmatpush1.bf16.msra.mxu0 %v668
    %958 = vmatprep.subr.bf16.mxu0 %v671
    %959 = vmatpush1.bf16.msra.mxu0 %v670
    %960 = vmatprep.subr.bf16.mxu0 %v673
    %961 = vmatpush1.bf16.msra.mxu0 %v672
    %962 = vmatprep.subr.bf16.mxu0 %v675
    %963 = vmatpush1.bf16.msra.mxu0 %v674
    %964 = vmatprep.subr.bf16.mxu0 %v677
    %965 = vmatpush1.bf16.msra.mxu0 %v676
    %966 = vmatprep.subr.bf16.mxu0 %v679
    %967 = vmatpush1.bf16.msra.mxu0 %v678
    %968 = vmatprep.subr.bf16.mxu0 %v681
    %969 = vmatpush1.bf16.msra.mxu0 %v680
    %970 = vmatprep.subr.bf16.mxu0 %v683
    %971 = vmatpush1.bf16.msra.mxu0 %v682
    %972 = vmatprep.subr.bf16.mxu0 %v685
    %973 = vmatpush1.bf16.msra.mxu0 %v684
    %974 = vmatprep.subr.bf16.mxu0 %v687
    %975 = vmatpush1.bf16.msra.mxu0 %v686
    %976 = vmatprep.subr.bf16.mxu0 %v689
    %977 = vmatpush1.bf16.msra.mxu0 %v688
    %978 = vmatprep.subr.bf16.mxu0 %v691
    %979 = vmatpush1.bf16.msra.mxu0 %v690
    %980 = vmatprep.subr.bf16.mxu0 %v693
    %981 = vmatpush1.bf16.msra.mxu0 %v692
    %982 = vmatprep.subr.bf16.mxu0 %v695
    %983 = vmatpush1.bf16.msra.mxu0 %v694
    %984 = vmatprep.subr.bf16.mxu0 %v697
    %985 = vmatpush1.bf16.msra.mxu0 %v696
    %986 = vmatprep.mubr.bf16.mxu0 %v199
    %987 = vmatmul.mubr.bf16.gmra.mrb[0].mxu0 %v191
    %v988 = vpop.f32.mrb[0].mxu0
    %v989 = vadd.f32 %v174, %v988
    %v990 = vpop.f32.mrb[0].mxu0
    %v991 = vadd.f32 %v178, %v990
    %v992 = vpop.f32.mrb[0].mxu0
    %v993 = vpop.f32.mrb[0].mxu0
    %994 = vdwg.mxu0
    %995 = vmatprep.subr.bf16.mxu0 %v699
    %996 = vmatpush1.bf16.msra.mxu0 %v698
    %997 = vmatprep.subr.bf16.mxu0 %v701
    %998 = vmatpush1.bf16.msra.mxu0 %v700
    %999 = vmatprep.subr.bf16.mxu0 %v703
    %1000 = vmatpush1.bf16.msra.mxu0 %v702
    %1001 = vmatprep.subr.bf16.mxu0 %v705
    %1002 = vmatpush1.bf16.msra.mxu0 %v704
    %1003 = vmatprep.subr.bf16.mxu0 %v707
    %1004 = vmatpush1.bf16.msra.mxu0 %v706
    %1005 = vmatprep.subr.bf16.mxu0 %v709
    %1006 = vmatpush1.bf16.msra.mxu0 %v708
    %1007 = vmatprep.subr.bf16.mxu0 %v711
    %1008 = vmatpush1.bf16.msra.mxu0 %v710
    %1009 = vmatprep.subr.bf16.mxu0 %v713
    %1010 = vmatpush1.bf16.msra.mxu0 %v712
    %1011 = vmatprep.subr.bf16.mxu0 %v715
    %1012 = vmatpush1.bf16.msra.mxu0 %v714
    %1013 = vmatprep.subr.bf16.mxu0 %v717
    %1014 = vmatpush1.bf16.msra.mxu0 %v716
    %1015 = vmatprep.subr.bf16.mxu0 %v719
    %1016 = vmatpush1.bf16.msra.mxu0 %v718
    %1017 = vmatprep.subr.bf16.mxu0 %v721
    %1018 = vmatpush1.bf16.msra.mxu0 %v720
    %1019 = vmatprep.subr.bf16.mxu0 %v723
    %1020 = vmatpush1.bf16.msra.mxu0 %v722
    %1021 = vmatprep.subr.bf16.mxu0 %v725
    %1022 = vmatpush1.bf16.msra.mxu0 %v724
    %1023 = vmatprep.subr.bf16.mxu0 %v727
    %1024 = vmatpush1.bf16.msra.mxu0 %v726
    %1025 = vmatprep.subr.bf16.mxu0 %v729
    %1026 = vmatpush1.bf16.msra.mxu0 %v728
    %1027 = vmatprep.mubr.bf16.mxu0 %v200
    %1028 = vmatmul.mubr.bf16.gmra.mrb[0].mxu0 %v198
    %v1029 = vpop.f32.mrb[0].mxu0
    %v1030 = vadd.f32 %v989, %v1029
    %v1031 = vpop.f32.mrb[0].mxu0
    %v1032 = vadd.f32 %v991, %v1031
    %v1033 = vpop.f32.mrb[0].mxu0
    %v1034 = vpop.f32.mrb[0].mxu0
    %1035 = vdwg.mxu0
    %1036 = vmatprep.subr.bf16.mxu0 %v731
    %1037 = vmatpush1.bf16.msra.mxu0 %v730
    %1038 = vmatprep.subr.bf16.mxu0 %v733
    %1039 = vmatpush1.bf16.msra.mxu0 %v732
    %1040 = vmatprep.subr.bf16.mxu0 %v735
    %1041 = vmatpush1.bf16.msra.mxu0 %v734
    %1042 = vmatprep.subr.bf16.mxu0 %v737
    %1043 = vmatpush1.bf16.msra.mxu0 %v736
    %1044 = vmatprep.subr.bf16.mxu0 %v739
    %1045 = vmatpush1.bf16.msra.mxu0 %v738
    %1046 = vmatprep.subr.bf16.mxu0 %v741
    %1047 = vmatpush1.bf16.msra.mxu0 %v740
    %1048 = vmatprep.subr.bf16.mxu0 %v743
    %1049 = vmatpush1.bf16.msra.mxu0 %v742
    %1050 = vmatprep.subr.bf16.mxu0 %v745
    %1051 = vmatpush1.bf16.msra.mxu0 %v744
    %1052 = vmatprep.subr.bf16.mxu0 %v747
    %1053 = vmatpush1.bf16.msra.mxu0 %v746
    %1054 = vmatprep.subr.bf16.mxu0 %v749
    %1055 = vmatpush1.bf16.msra.mxu0 %v748
    %1056 = vmatprep.subr.bf16.mxu0 %v751
    %1057 = vmatpush1.bf16.msra.mxu0 %v750
    %1058 = vmatprep.subr.bf16.mxu0 %v753
    %1059 = vmatpush1.bf16.msra.mxu0 %v752
    %1060 = vmatprep.subr.bf16.mxu0 %v755
    %1061 = vmatpush1.bf16.msra.mxu0 %v754
    %1062 = vmatprep.subr.bf16.mxu0 %v757
    %1063 = vmatpush1.bf16.msra.mxu0 %v756
    %1064 = vmatprep.subr.bf16.mxu0 %v759
    %1065 = vmatpush1.bf16.msra.mxu0 %v758
    %1066 = vmatprep.subr.bf16.mxu0 %v761
    %1067 = vmatpush1.bf16.msra.mxu0 %v760
    %1068 = vmatprep.mubr.bf16.mxu0 %v216
    %1069 = vmatmul.mubr.bf16.gmra.mrb[0].mxu0 %v208
    %v1070 = vpop.f32.mrb[0].mxu0
    %v1071 = vadd.f32 %v1030, %v1070
    %v1072 = vpop.f32.mrb[0].mxu0
    %v1073 = vadd.f32 %v1032, %v1072
    %v1074 = vpop.f32.mrb[0].mxu0
    %v1075 = vpop.f32.mrb[0].mxu0
    %1076 = vdwg.mxu0
    %1077 = vmatprep.subr.bf16.mxu0 %v763
    %1078 = vmatpush1.bf16.msra.mxu0 %v762
    %1079 = vmatprep.subr.bf16.mxu0 %v765
    %1080 = vmatpush1.bf16.msra.mxu0 %v764
    %1081 = vmatprep.subr.bf16.mxu0 %v767
    %1082 = vmatpush1.bf16.msra.mxu0 %v766
    %1083 = vmatprep.subr.bf16.mxu0 %v769
    %1084 = vmatpush1.bf16.msra.mxu0 %v768
    %1085 = vmatprep.subr.bf16.mxu0 %v771
    %1086 = vmatpush1.bf16.msra.mxu0 %v770
    %1087 = vmatprep.subr.bf16.mxu0 %v773
    %1088 = vmatpush1.bf16.msra.mxu0 %v772
    %1089 = vmatprep.subr.bf16.mxu0 %v775
    %1090 = vmatpush1.bf16.msra.mxu0 %v774
    %1091 = vmatprep.subr.bf16.mxu0 %v777
    %1092 = vmatpush1.bf16.msra.mxu0 %v776
    %1093 = vmatprep.subr.bf16.mxu0 %v779
    %1094 = vmatpush1.bf16.msra.mxu0 %v778
    %1095 = vmatprep.subr.bf16.mxu0 %v781
    %1096 = vmatpush1.bf16.msra.mxu0 %v780
    %1097 = vmatprep.subr.bf16.mxu0 %v783
    %1098 = vmatpush1.bf16.msra.mxu0 %v782
    %1099 = vmatprep.subr.bf16.mxu0 %v785
    %1100 = vmatpush1.bf16.msra.mxu0 %v784
    %1101 = vmatprep.subr.bf16.mxu0 %v787
    %1102 = vmatpush1.bf16.msra.mxu0 %v786
    %1103 = vmatprep.subr.bf16.mxu0 %v789
    %1104 = vmatpush1.bf16.msra.mxu0 %v788
    %1105 = vmatprep.subr.bf16.mxu0 %v791
    %1106 = vmatpush1.bf16.msra.mxu0 %v790
    %1107 = vmatprep.subr.bf16.mxu0 %v793
    %1108 = vmatpush1.bf16.msra.mxu0 %v792
    %1109 = vmatprep.mubr.bf16.mxu0 %v217
    %1110 = vmatmul.mubr.bf16.gmra.mrb[0].mxu0 %v215
    %v1111 = vpop.f32.mrb[0].mxu0
    %v1112 = vadd.f32 %v1071, %v1111
    %v1113 = vpop.f32.mrb[0].mxu0
    %v1114 = vadd.f32 %v1073, %v1113
    %v1115 = vpop.f32.mrb[0].mxu0
    %v1116 = vpop.f32.mrb[0].mxu0
    %1117 = vdwg.mxu0
    %1118 = vmatprep.subr.bf16.mxu0 %v795
    %1119 = vmatpush1.bf16.msra.mxu0 %v794
    %1120 = vmatprep.subr.bf16.mxu0 %v797
    %1121 = vmatpush1.bf16.msra.mxu0 %v796
    %1122 = vmatprep.subr.bf16.mxu0 %v799
    %1123 = vmatpush1.bf16.msra.mxu0 %v798
    %1124 = vmatprep.subr.bf16.mxu0 %v801
    %1125 = vmatpush1.bf16.msra.mxu0 %v800
    %1126 = vmatprep.subr.bf16.mxu0 %v803
    %1127 = vmatpush1.bf16.msra.mxu0 %v802
    %1128 = vmatprep.subr.bf16.mxu0 %v805
    %1129 = vmatpush1.bf16.msra.mxu0 %v804
    %1130 = vmatprep.subr.bf16.mxu0 %v807
    %1131 = vmatpush1.bf16.msra.mxu0 %v806
    %1132 = vmatprep.subr.bf16.mxu0 %v809
    %1133 = vmatpush1.bf16.msra.mxu0 %v808
    %1134 = vmatprep.subr.bf16.mxu0 0
    %1135 = vmatpush1.bf16.msra.mxu0 0
    %1136 = vmatprep.subr.bf16.mxu0 0
    %1137 = vmatpush1.bf16.msra.mxu0 0
    %1138 = vmatprep.subr.bf16.mxu0 0
    %1139 = vmatpush1.bf16.msra.mxu0 0
    %1140 = vmatprep.subr.bf16.mxu0 0
    %1141 = vmatpush1.bf16.msra.mxu0 0
    %1142 = vmatprep.subr.bf16.mxu0 0
    %1143 = vmatpush1.bf16.msra.mxu0 0
    %1144 = vmatprep.subr.bf16.mxu0 0
    %1145 = vmatpush1.bf16.msra.mxu0 0
    %1146 = vmatprep.subr.bf16.mxu0 0
    %1147 = vmatpush1.bf16.msra.mxu0 0
    %1148 = vmatprep.subr.bf16.mxu0 0
    %1149 = vmatpush1.bf16.msra.mxu0 0
    %1150 = vmatprep.mubr.bf16.mxu0 0
    %1151 = vmatmul.mubr.bf16.gmra.mrb[0].mxu0 %v224
    %v1152 = vpop.f32.mrb[0].mxu0
    %v1153 = vadd.f32 %v1112, %v1152
    %v1154 = vpop.f32.mrb[0].mxu0
    %v1155 = vadd.f32 %v1114, %v1154
    %v1156 = vpop.f32.mrb[0].mxu0
    %v1157 = vpop.f32.mrb[0].mxu0
    %1158 = vdwg.mxu0
    %v1159 = vmax.f32 %v1153, 0.0
    %v1160 = vmax.f32 %v1155, 0.0
    %v1161 = vpack.c.bf16 %v1159, %v1159
    %v1162 = vpack.c.bf16 %v1160, %v1160
    %v1163 = vld [vmem:[%s3] sm:$0xf]
    %v1164 = vld [vmem:[%s3 + $0x4] sm:$0xf]
    %v1165 = vld [vmem:[%s3 + $0x8] sm:$0xf]
    %v1166 = vld [vmem:[%s3 + $0xc] sm:$0xf]
    %v1167 = vld [vmem:[%s3 + $0x10] sm:$0xf]
    %v1168 = vld [vmem:[%s3 + $0x14] sm:$0xf]
    %v1169 = vld [vmem:[%s3 + $0x18] sm:$0xf]
    %v1170 = vld [vmem:[%s3 + $0x1c] sm:$0xf]
    %v1171 = vld [vmem:[%s3 + $0x20] sm:$0xf]
    %v1172 = vld [vmem:[%s3 + $0x24] sm:$0xf]
    %v1173 = vld [vmem:[%s3 + $0x28] sm:$0xf]
    %v1174 = vld [vmem:[%s3 + $0x2c] sm:$0xf]
    %v1175 = vld [vmem:[%s3 + $0x30] sm:$0xf]
    %v1176 = vld [vmem:[%s3 + $0x34] sm:$0xf]
    %v1177 = vld [vmem:[%s3 + $0x38] sm:$0xf]
    %v1178 = vld [vmem:[%s3 + $0x3c] sm:$0xf]
    %v1179 = vld [vmem:[%s3 + $0x40] sm:$0xf]
    %v1180 = vld [vmem:[%s3 + $0x44] sm:$0xf]
    %v1181 = vld [vmem:[%s3 + $0x48] sm:$0xf]
    %v1182 = vld [vmem:[%s3 + $0x4c] sm:$0xf]
    %v1183 = vld [vmem:[%s3 + $0x50] sm:$0xf]
    %v1184 = vld [vmem:[%s3 + $0x54] sm:$0xf]
    %v1185 = vld [vmem:[%s3 + $0x58] sm:$0xf]
    %v1186 = vld [vmem:[%s3 + $0x5c] sm:$0xf]
    %v1187 = vld [vmem:[%s3 + $0x60] sm:$0xf]
    %v1188 = vld [vmem:[%s3 + $0x64] sm:$0xf]
    %v1189 = vld [vmem:[%s3 + $0x68] sm:$0xf]
    %v1190 = vld [vmem:[%s3 + $0x6c] sm:$0xf]
    %v1191 = vld [vmem:[%s3 + $0x70] sm:$0xf]
    %v1192 = vld [vmem:[%s3 + $0x74] sm:$0xf]
    %v1193 = vld [vmem:[%s3 + $0x78] sm:$0xf]
    %v1194 = vld [vmem:[%s3 + $0x7c] sm:$0xf]
    %v1195 = vld [vmem:[%s4] sm:$0x1]
    %v1197 = vlaneseq
    %v1198 = vshrl.u32 %v1197, 7
    %v1199 = vsub.s32 0, %v1198
    %v1200 = vrot.slane %v1195, %v1199
    %v1234 = vunpack.c.l.b16 %v1163
    %v1235 = vunpack.c.l.b16 %v1164
    %v1236 = vunpack.c.l.b16 %v1165
    %v1237 = vunpack.c.l.b16 %v1166
    %v1238 = vunpack.c.l.b16 %v1167
    %v1239 = vunpack.c.l.b16 %v1168
    %v1240 = vunpack.c.l.b16 %v1169
    %v1241 = vunpack.c.l.b16 %v1170
    %v1242 = vunpack.c.l.b16 %v1171
    %v1243 = vunpack.c.l.b16 %v1172
    %v1244 = vunpack.c.l.b16 %v1173
    %v1245 = vunpack.c.l.b16 %v1174
    %v1246 = vunpack.c.l.b16 %v1175
    %v1247 = vunpack.c.l.b16 %v1176
    %v1248 = vunpack.c.l.b16 %v1177
    %v1249 = vunpack.c.l.b16 %v1178
    %v1250 = vunpack.c.l.b16 %v1179
    %v1251 = vunpack.c.l.b16 %v1180
    %v1252 = vunpack.c.l.b16 %v1181
    %v1253 = vunpack.c.l.b16 %v1182
    %v1254 = vunpack.c.l.b16 %v1183
    %v1255 = vunpack.c.l.b16 %v1184
    %v1256 = vunpack.c.l.b16 %v1185
    %v1257 = vunpack.c.l.b16 %v1186
    %v1258 = vunpack.c.l.b16 %v1187
    %v1259 = vunpack.c.l.b16 %v1188
    %v1260 = vunpack.c.l.b16 %v1189
    %v1261 = vunpack.c.l.b16 %v1190
    %v1262 = vunpack.c.l.b16 %v1191
    %v1263 = vunpack.c.l.b16 %v1192
    %v1264 = vunpack.c.l.b16 %v1193
    %v1265 = vunpack.c.l.b16 %v1194
    %v1266 = vpack.c.b16 %v1235, %v1234
    %v1267 = vpack.c.b16 %v1237, %v1236
    %v1268 = vpack.c.b16 %v1239, %v1238
    %v1269 = vpack.c.b16 %v1241, %v1240
    %v1270 = vpack.c.b16 %v1243, %v1242
    %v1271 = vpack.c.b16 %v1245, %v1244
    %v1272 = vpack.c.b16 %v1247, %v1246
    %v1273 = vpack.c.b16 %v1249, %v1248
    %v1274 = vpack.c.b16 %v1251, %v1250
    %v1275 = vpack.c.b16 %v1253, %v1252
    %v1276 = vpack.c.b16 %v1255, %v1254
    %v1277 = vpack.c.b16 %v1257, %v1256
    %v1278 = vpack.c.b16 %v1259, %v1258
    %v1279 = vpack.c.b16 %v1261, %v1260
    %v1280 = vpack.c.b16 %v1263, %v1262
    %v1281 = vpack.c.b16 %v1265, %v1264
    %1298 = vmatprep.subr.bf16.mxu0 0
    %1299 = vmatpush1.bf16.msra.mxu0 %v1266
    %1300 = vmatprep.subr.bf16.mxu0 0
    %1301 = vmatpush1.bf16.msra.mxu0 %v1267
    %1302 = vmatprep.subr.bf16.mxu0 0
    %1303 = vmatpush1.bf16.msra.mxu0 %v1268
    %1304 = vmatprep.subr.bf16.mxu0 0
    %1305 = vmatpush1.bf16.msra.mxu0 %v1269
    %1306 = vmatprep.subr.bf16.mxu0 0
    %1307 = vmatpush1.bf16.msra.mxu0 %v1270
    %1308 = vmatprep.subr.bf16.mxu0 0
    %1309 = vmatpush1.bf16.msra.mxu0 %v1271
    %1310 = vmatprep.subr.bf16.mxu0 0
    %1311 = vmatpush1.bf16.msra.mxu0 %v1272
    %1312 = vmatprep.subr.bf16.mxu0 0
    %1313 = vmatpush1.bf16.msra.mxu0 %v1273
    %1314 = vmatprep.subr.bf16.mxu0 0
    %1315 = vmatpush1.bf16.msra.mxu0 %v1274
    %1316 = vmatprep.subr.bf16.mxu0 0
    %1317 = vmatpush1.bf16.msra.mxu0 %v1275
    %1318 = vmatprep.subr.bf16.mxu0 0
    %1319 = vmatpush1.bf16.msra.mxu0 %v1276
    %1320 = vmatprep.subr.bf16.mxu0 0
    %1321 = vmatpush1.bf16.msra.mxu0 %v1277
    %1322 = vmatprep.subr.bf16.mxu0 0
    %1323 = vmatpush1.bf16.msra.mxu0 %v1278
    %1324 = vmatprep.subr.bf16.mxu0 0
    %1325 = vmatpush1.bf16.msra.mxu0 %v1279
    %1326 = vmatprep.subr.bf16.mxu0 0
    %1327 = vmatpush1.bf16.msra.mxu0 %v1280
    %1328 = vmatprep.subr.bf16.mxu0 0
    %1329 = vmatpush1.bf16.msra.mxu0 %v1281
    %1330 = vmatprep.mubr.bf16.mxu0 %v1162
    %1331 = vmatmul.mubr.bf16.gmra.mrb[0].mxu0 %v1161
    %v1332 = vpop.f32.mrb[0].mxu0
    %v1333 = vadd.f32 %v1200, %v1332
    %v1334 = vpop.f32.mrb[0].mxu0
    %v1335 = vpop.f32.mrb[0].mxu0
    %v1336 = vpop.f32.mrb[0].mxu0
    %1337 = vdwg.mxu0
    %vm1338 = vcmask 76800
    %1339 = vst.msk [vmem:[#allocation2] sm:$0xf] %vm1338, %v1333
    // Predicated region
    $region22: #{_lambda_.7} parent=1 // pred_check
      _
    $region23: #{_lambda_.7} parent=1 // pred_check_branch
      %1341 = sbr.rel (0) target = $region25
    $region24: #{_lambda_.7} parent=1 // pred_region
      %s1343 = ssub.s32 64, 64
      %1344 = vsyncadd [#allocation3], %s1343
      %s1346 = sshll.u32 [#allocation2], 4
      %s1347 = int_to_ptr.vmem [resolvable:$true] %s1346
      %1349 = dma.vmem_to_hbm [thread:$0]  %s1347, 64, %s5, [#allocation3]
    $region25: #{_lambda_.7} parent=1 // pred_fallthru
      _
    // Predicated region
    $region26: #{_lambda_.7} parent=1 // pred_check
      _
    $region27: #{_lambda_.7} parent=1 // pred_check_branch
      %1351 = sbr.rel (0) target = $region29
    $region28: #{_lambda_.7} parent=1 // pred_region
      %1352 = dma.done [#allocation3], 64
    $region29: #{_lambda_.7} parent=1 // pred_fallthru
      _
    %1353 = vsyncpa [#allocation3], 1

</llo_original>
